<compile_context>
chip_gen: v6e
topology: v6e:2x2x1
jax: 0.10.0
libtpu: 0.0.40
codegen_flags: <defaults>
</compile_context>

<pallas_src>
import functools

import jax
import jax.numpy as jnp
from jax.experimental import pallas as pl
from jax.experimental.pallas import tpu as pltpu


def _round_up(n, m):
    return ((n + m - 1) // m) * m


# ----------------------------------------------------------------------------
# Pallas kernels
# ----------------------------------------------------------------------------
def _conv_stats_kernel(p_ref, w_ref, y_ref, stats_ref):
    """Pass 1: conv tile as MXU matmul + BN statistics accumulated in-kernel.

    p_ref     : (tile_m, Kd_p)  bf16 im2col patches (zero-padded rows/cols)
    w_ref     : (Kd_p, C_p)     bf16 reshaped conv weight
    y_ref     : (tile_m, C_p)   bf16 conv output tile
    stats_ref : (2, C_p)        f32 [sum, sum-of-squares]; grid-resident
                                accumulator (same block every step).
    Padded rows/columns are exactly zero, so they add nothing to the stats.
    """
    @pl.when(pl.program_id(0) == 0)
    def _():
        stats_ref[...] = jnp.zeros_like(stats_ref)

    y = jnp.dot(p_ref[...], w_ref[...], preferred_element_type=jnp.float32)
    stats_ref[...] += jnp.concatenate(
        [jnp.sum(y, axis=0, keepdims=True),
         jnp.sum(y * y, axis=0, keepdims=True)], axis=0)
    y_ref[...] = y.astype(y_ref.dtype)


def _fold_bn(stats_ref, gamma_ref, beta_ref, cnt, eps):
    """Fold train-mode BN (biased variance) into per-channel scale/shift."""
    mean = stats_ref[0:1, :] / cnt                       # (1, C_p)
    var = jnp.maximum(stats_ref[1:2, :] / cnt - mean * mean, 0.0)
    scale = gamma_ref[...] * jax.lax.rsqrt(var + eps)    # (1, C_p)
    shift = beta_ref[...] - mean * scale
    return scale, shift


def _bn_lrelu_kernel(stats_ref, gamma_ref, beta_ref, y_ref, o_ref, *,
                     cnt, eps, slope):
    """Pass 2: folded BatchNorm (y * scale + shift) + LeakyReLU."""
    scale, shift = _fold_bn(stats_ref, gamma_ref, beta_ref, cnt, eps)
    a = y_ref[...].astype(jnp.float32) * scale + shift
    o_ref[...] = jnp.where(a >= 0.0, a, slope * a).astype(o_ref.dtype)


def _bn_lrelu_gap_kernel(stats_ref, gamma_ref, beta_ref, y_ref, o_ref, *,
                         cnt, eps, slope, l_valid, tile_l):
    """Pass 2 (last layer): folded BN + LeakyReLU + fused global-average-pool
    accumulation.  Grid = (B, nl); per-batch (1, C_p) accumulator block."""
    l = pl.program_id(1)

    @pl.when(l == 0)
    def _():
        o_ref[...] = jnp.zeros_like(o_ref)

    scale, shift = _fold_bn(stats_ref, gamma_ref, beta_ref, cnt, eps)
    a = y_ref[...].astype(jnp.float32) * scale + shift   # (tile_l, C_p)
    a = jnp.where(a >= 0.0, a, slope * a)
    # Mask padded L rows (their normalized value is LeakyReLU(shift), not 0).
    row = jax.lax.broadcasted_iota(jnp.int32, (tile_l, 1), 0) + l * tile_l
    a = jnp.where(row < l_valid, a, 0.0)
    o_ref[...] += jnp.sum(a, axis=0, keepdims=True)      # (1, C_p)


# ----------------------------------------------------------------------------
# One layer: Conv1d -> BatchNorm1d (batch stats) -> LeakyReLU  (+ fused GAP)
# ----------------------------------------------------------------------------
def conv_bn_lrelu_layer(x, l_in, w, gamma, beta, *, stride,
                        eps=1e-5, slope=0.01, fuse_gap=False):
    """x: (B, L_store, C_in_p) bf16 channels-last (rows >= l_in may be pad).

    Returns (activation (B, L_pad, C_out_p) bf16, L_out) for normal layers, or
    (GAP (B, C_out_p) f32, L_out) when fuse_gap=True.
    """
    B, _, C_in_p = x.shape
    C_out, C_in, K = w.shape
    L_out = (l_in - K) // stride + 1
    L_pad = _round_up(L_out, 16)
    M = B * L_pad                      # batch flattened into matmul M dim
    tile_m = min(512, M)
    M_pad = _round_up(M, tile_m)
    nm = M_pad // tile_m
    Kd = K * C_in_p
    Kd_pad = _round_up(Kd, 128)
    C_out_p = _round_up(C_out, 128)

    # --- im2col, channels-last: columns ordered (k, c_in) -------------------
    # TODO(synk): replace with in-kernel tap-sum for the K=3/7 layers.
    idx = jnp.arange(L_out)[:, None] * stride + jnp.arange(K)[None, :]
    patches = x[:, idx, :].reshape(B, L_out, Kd)           # (B, L_out, Kd)
    patches = jnp.pad(patches, ((0, 0), (0, L_pad - L_out), (0, Kd_pad - Kd)))
    patches = patches.reshape(M, Kd_pad)
    if M_pad > M:
        patches = jnp.pad(patches, ((0, M_pad - M), (0, 0)))
    patches = patches.astype(jnp.bfloat16)

    # --- weight (C_out, C_in, K) -> (Kd_pad, C_out_p), rows ordered (k, c) ---
    w_p = jnp.pad(w, ((0, C_out_p - C_out), (0, C_in_p - C_in), (0, 0)))
    w_mat = jnp.transpose(w_p, (2, 1, 0)).reshape(Kd, C_out_p)
    w_mat = jnp.pad(w_mat, ((0, Kd_pad - Kd), (0, 0))).astype(jnp.bfloat16)

    gamma_p = jnp.pad(gamma, (0, C_out_p - C_out)).reshape(1, C_out_p)
    beta_p = jnp.pad(beta, (0, C_out_p - C_out)).reshape(1, C_out_p)
    gamma_p = gamma_p.astype(jnp.float32)
    beta_p = beta_p.astype(jnp.float32)

    # --- pass 1: conv matmul + resident BN stats accumulator ----------------
    y, stats = pl.pallas_call(
        _conv_stats_kernel,
        out_shape=(jax.ShapeDtypeStruct((M_pad, C_out_p), jnp.bfloat16),
                   jax.ShapeDtypeStruct((2, C_out_p), jnp.float32)),
        grid=(nm,),
        in_specs=[
            pl.BlockSpec((tile_m, Kd_pad), lambda m: (m, 0)),
            pl.BlockSpec((Kd_pad, C_out_p), lambda m: (0, 0)),
        ],
        out_specs=(
            pl.BlockSpec((tile_m, C_out_p), lambda m: (m, 0)),
            pl.BlockSpec((2, C_out_p), lambda m: (0, 0)),
        ),
        compiler_params=pltpu.CompilerParams(
            dimension_semantics=("arbitrary",)),
    )(patches, w_mat)

    cnt = float(B * L_out)             # train-mode biased variance over B*L_out

    # --- pass 2: folded BN + LeakyReLU (optionally fused with GAP) ----------
    if fuse_gap:
        y_b = y[:M].reshape(B, L_pad, C_out_p)
        tile_l = min(512, L_pad)
        L_pad_g = _round_up(L_pad, tile_l)
        if L_pad_g > L_pad:            # keep blocks exact for very long L
            y_b = jnp.pad(y_b, ((0, 0), (0, L_pad_g - L_pad), (0, 0)))
        nl = L_pad_g // tile_l
        sums = pl.pallas_call(
            functools.partial(_bn_lrelu_gap_kernel, cnt=cnt, eps=eps,
                              slope=slope, l_valid=L_out, tile_l=tile_l),
            out_shape=jax.ShapeDtypeStruct((B, 1, C_out_p), jnp.float32),
            grid=(B, nl),
            in_specs=[
                pl.BlockSpec((2, C_out_p), lambda b, l: (0, 0)),
                pl.BlockSpec((1, C_out_p), lambda b, l: (0, 0)),
                pl.BlockSpec((1, C_out_p), lambda b, l: (0, 0)),
                pl.BlockSpec((None, tile_l, C_out_p), lambda b, l: (b, l, 0)),
            ],
            out_specs=pl.BlockSpec((None, 1, C_out_p), lambda b, l: (b, 0, 0)),
            compiler_params=pltpu.CompilerParams(
                dimension_semantics=("parallel", "arbitrary")),
        )(stats, gamma_p, beta_p, y_b)
        return sums[:, 0, :] / jnp.float32(L_out), L_out

    act = pl.pallas_call(
        functools.partial(_bn_lrelu_kernel, cnt=cnt, eps=eps, slope=slope),
        out_shape=jax.ShapeDtypeStruct((M_pad, C_out_p), jnp.bfloat16),
        grid=(nm,),
        in_specs=[
            pl.BlockSpec((2, C_out_p), lambda m: (0, 0)),
            pl.BlockSpec((1, C_out_p), lambda m: (0, 0)),
            pl.BlockSpec((1, C_out_p), lambda m: (0, 0)),
            pl.BlockSpec((tile_m, C_out_p), lambda m: (m, 0)),
        ],
        out_specs=pl.BlockSpec((tile_m, C_out_p), lambda m: (m, 0)),
        compiler_params=pltpu.CompilerParams(
            dimension_semantics=("parallel",)),
    )(stats, gamma_p, beta_p, y)
    # Rows l in [L_out, L_pad) hold LeakyReLU(shift); the next layer's im2col
    # indices never read them, and the GAP layer masks them explicitly.
    act = act[:M].reshape(B, L_pad, C_out_p)
    return act, L_out


# ----------------------------------------------------------------------------
# WCNN model
# ----------------------------------------------------------------------------
def init_wcnn_params(key, in_channel=1):
    specs = [  # (C_out, C_in, K)
        (64, in_channel, 64),
        (128, 64, 7),
        (256, 128, 3),
        (256, 256, 3),
    ]
    params = []
    for i, (co, ci, k) in enumerate(specs):
        kw, kb = jax.random.split(jax.random.fold_in(key, i))
        fan_in = ci * k
        w = jax.random.normal(kw, (co, ci, k), jnp.float32) / jnp.sqrt(fan_in)
        # Conv bias kept for parity with nn.Conv1d; it is mathematically
        # cancelled by the train-mode BatchNorm mean subtraction and is not
        # used in the forward compute.
        b = 0.01 * jax.random.normal(kb, (co,), jnp.float32)
        gamma = jnp.ones((co,), jnp.float32)    # PyTorch BN default init
        beta = jnp.zeros((co,), jnp.float32)
        params.append(dict(w=w, b=b, gamma=gamma, beta=beta))
    return params


def wcnn_forward(params, x):
    """x: (B, in_channel, L) float32 -> (B, 256)."""
    strides = (2, 2, 1, 1)
    l_valid = x.shape[2]
    # Single tiny layout change at the boundary; channels-last from here on.
    h = jnp.transpose(x, (0, 2, 1)).astype(jnp.bfloat16)      # (B, L, C_in)
    n = len(params)
    for i, (p, s) in enumerate(zip(params, strides)):
        h, l_valid = conv_bn_lrelu_layer(
            h, l_valid, p["w"], p["gamma"], p["beta"],
            stride=s, fuse_gap=(i == n - 1))
    out_dim = params[-1]["w"].shape[0]
    return h[:, :out_dim]                                     # (B, 256) f32


# ----------------------------------------------------------------------------
if __name__ == "__main__":
    key = jax.random.PRNGKey(0)
    kx, kp = jax.random.split(key)

    B, C_in, L = 2, 1, 256      # L must survive all four convs (L >= 78)
    x = jax.random.normal(kx, (B, C_in, L), jnp.float32)
    params = init_wcnn_params(kp, in_channel=C_in)

    out = jax.jit(wcnn_forward)(params, x)
    out = jax.block_until_ready(out)

    assert out.shape == (B, 256), out.shape
    assert bool(jnp.all(jnp.isfinite(out)))
    print("KERNEL_OK")
</pallas_src>

<mosaic_0001>
module attributes {stable_mosaic.version = 11 : i64} {
  func.func @_conv_stats_kernel(%arg0: i32, %arg1: memref<224x128xbf16, #tpu.memory_space<vmem>>, %arg2: memref<128x128xbf16, #tpu.memory_space<vmem>>, %arg3: memref<224x128xbf16, #tpu.memory_space<vmem>>, %arg4: memref<2x128xf32, #tpu.memory_space<vmem>>) attributes {dimension_semantics = [#tpu.dimension_semantics<arbitrary>], iteration_bounds = array<i64: 1>, scalar_prefetch = 0 : i64, scratch_operands = 0 : i64, tpu.core_type = #tpu.core_type<tc>, window_params = [{transform_indices = @transform_0, window_bounds = array<i64: 224, 128>}, {pipeline_mode = #tpu.pipeline_mode<synchronous>, transform_indices = @transform_1, window_bounds = array<i64: 128, 128>}, {transform_indices = @transform_2, window_bounds = array<i64: 224, 128>}, {pipeline_mode = #tpu.pipeline_mode<synchronous>, transform_indices = @transform_3, window_bounds = array<i64: 2, 128>}]} {
    %c0_i32 = arith.constant 0 : i32
    %0 = arith.cmpi eq, %arg0, %c0_i32 : i32
    %1 = arith.extui %0 : i1 to i32
    %c0_i32_0 = arith.constant 0 : i32
    %2 = arith.cmpi ne, %1, %c0_i32_0 : i32
    scf.if %2 {
      %cst_12 = arith.constant 0.000000e+00 : f32
      %17 = vector.broadcast %cst_12 : f32 to vector<2x128xf32>
      %c0_13 = arith.constant 0 : index
      %c0_14 = arith.constant 0 : index
      %18 = vector.load %arg4[%c0_13, %c0_14] : memref<2x128xf32, #tpu.memory_space<vmem>>, vector<2x128xf32>
      tpu.vector_store %arg4[%c0_13, %c0_14], %17 {strides = array<i32>} : memref<2x128xf32, #tpu.memory_space<vmem>>, vector<2x128xf32>,
    } else {
    }
    %c0 = arith.constant 0 : index
    %c0_1 = arith.constant 0 : index
    %3 = vector.load %arg1[%c0, %c0_1] : memref<224x128xbf16, #tpu.memory_space<vmem>>, vector<224x128xbf16>
    %c0_2 = arith.constant 0 : index
    %c0_3 = arith.constant 0 : index
    %4 = vector.load %arg2[%c0_2, %c0_3] : memref<128x128xbf16, #tpu.memory_space<vmem>>, vector<128x128xbf16>
    %cst = arith.constant dense<0.000000e+00> : vector<224x128xf32>
    %5 = tpu.matmul %3, %4, %cst {dimension_numbers = #tpu.dot_dimension_numbers<[1], [0], [0], [1], [0, 0, 1, 1], [], []>} : vector<224x128xbf16>, vector<128x128xbf16>, vector<224x128xf32> -> vector<224x128xf32>
    %c0_4 = arith.constant 0 : index
    %c0_5 = arith.constant 0 : index
    %6 = vector.load %arg4[%c0_4, %c0_5] : memref<2x128xf32, #tpu.memory_space<vmem>>, vector<2x128xf32>
    %cst_6 = arith.constant dense<0.000000e+00> : vector<128xf32>
    %7 = vector.multi_reduction <add>, %5, %cst_6 [0] : vector<224x128xf32> to vector<128xf32>
    %8 = vector.shape_cast %7 : vector<128xf32> to vector<1x128xf32>
    %9 = arith.mulf %5, %5 : vector<224x128xf32>
    %cst_7 = arith.constant dense<0.000000e+00> : vector<128xf32>
    %10 = vector.multi_reduction <add>, %9, %cst_7 [0] : vector<224x128xf32> to vector<128xf32>
    %11 = vector.shape_cast %10 : vector<128xf32> to vector<1x128xf32>
    %12 = tpu.concatenate %8, %11 in 0 : vector<1x128xf32>, vector<1x128xf32> -> vector<2x128xf32>
    %13 = arith.addf %6, %12 : vector<2x128xf32>
    %c0_8 = arith.constant 0 : index
    %c0_9 = arith.constant 0 : index
    %14 = vector.load %arg4[%c0_8, %c0_9] : memref<2x128xf32, #tpu.memory_space<vmem>>, vector<2x128xf32>
    tpu.vector_store %arg4[%c0_8, %c0_9], %13 {strides = array<i32>} : memref<2x128xf32, #tpu.memory_space<vmem>>, vector<2x128xf32>,
    %15 = arith.truncf %5 : vector<224x128xf32> to vector<224x128xbf16>
    %c0_10 = arith.constant 0 : index
    %c0_11 = arith.constant 0 : index
    %16 = vector.load %arg3[%c0_10, %c0_11] : memref<224x128xbf16, #tpu.memory_space<vmem>>, vector<224x128xbf16>
    tpu.vector_store %arg3[%c0_10, %c0_11], %15 {strides = array<i32>} : memref<224x128xbf16, #tpu.memory_space<vmem>>, vector<224x128xbf16>,
    return
  }
  func.func @transform_0(%arg0: i32) -> (i32, i32) {
    %c0_i32 = arith.constant 0 : i32
    %c0_i32_0 = arith.constant 0 : i32
    return %arg0, %c0_i32 : i32, i32
  }
  func.func @transform_1(%arg0: i32) -> (i32, i32) {
    %c0_i32 = arith.constant 0 : i32
    %c0_i32_0 = arith.constant 0 : i32
    %c0_i32_1 = arith.constant 0 : i32
    return %c0_i32, %c0_i32_0 : i32, i32
  }
  func.func @transform_2(%arg0: i32) -> (i32, i32) {
    %c0_i32 = arith.constant 0 : i32
    %c0_i32_0 = arith.constant 0 : i32
    return %arg0, %c0_i32 : i32, i32
  }
  func.func @transform_3(%arg0: i32) -> (i32, i32) {
    %c0_i32 = arith.constant 0 : i32
    %c0_i32_0 = arith.constant 0 : i32
    %c0_i32_1 = arith.constant 0 : i32
    return %c0_i32, %c0_i32_0 : i32, i32
  }
}

module attributes {stable_mosaic.version = 11 : i64} {
  func.func @_bn_lrelu_kernel(%arg0: i32, %arg1: memref<2x128xf32, #tpu.memory_space<vmem>>, %arg2: memref<1x128xf32, #tpu.memory_space<vmem>>, %arg3: memref<1x128xf32, #tpu.memory_space<vmem>>, %arg4: memref<224x128xbf16, #tpu.memory_space<vmem>>, %arg5: memref<224x128xbf16, #tpu.memory_space<vmem>>) attributes {dimension_semantics = [#tpu.dimension_semantics<parallel>], iteration_bounds = array<i64: 1>, scalar_prefetch = 0 : i64, scratch_operands = 0 : i64, tpu.core_type = #tpu.core_type<tc>, window_params = [{pipeline_mode = #tpu.pipeline_mode<synchronous>, transform_indices = @transform_0, window_bounds = array<i64: 2, 128>}, {pipeline_mode = #tpu.pipeline_mode<synchronous>, transform_indices = @transform_1, window_bounds = array<i64: 1, 128>}, {pipeline_mode = #tpu.pipeline_mode<synchronous>, transform_indices = @transform_2, window_bounds = array<i64: 1, 128>}, {transform_indices = @transform_3, window_bounds = array<i64: 224, 128>}, {transform_indices = @transform_4, window_bounds = array<i64: 224, 128>}]} {
    %c0 = arith.constant 0 : index
    %c0_0 = arith.constant 0 : index
    %0 = vector.load %arg1[%c0, %c0_0] : memref<2x128xf32, #tpu.memory_space<vmem>>, vector<1x128xf32>
    %cst = arith.constant 1.940000e+02 : f32
    %1 = vector.broadcast %cst : f32 to vector<1x128xf32>
    %2 = arith.divf %0, %1 : vector<1x128xf32>
    %c1 = arith.constant 1 : index
    %c0_1 = arith.constant 0 : index
    %3 = vector.load %arg1[%c1, %c0_1] : memref<2x128xf32, #tpu.memory_space<vmem>>, vector<1x128xf32>
    %cst_2 = arith.constant 1.940000e+02 : f32
    %4 = vector.broadcast %cst_2 : f32 to vector<1x128xf32>
    %5 = arith.divf %3, %4 : vector<1x128xf32>
    %6 = arith.mulf %2, %2 : vector<1x128xf32>
    %7 = arith.subf %5, %6 : vector<1x128xf32>
    %cst_3 = arith.constant 0.000000e+00 : f32
    %8 = vector.broadcast %cst_3 : f32 to vector<1x128xf32>
    %9 = arith.maximumf %7, %8 : vector<1x128xf32>
    %c0_4 = arith.constant 0 : index
    %c0_5 = arith.constant 0 : index
    %10 = vector.load %arg2[%c0_4, %c0_5] : memref<1x128xf32, #tpu.memory_space<vmem>>, vector<1x128xf32>
    %cst_6 = arith.constant 9.99999974E-6 : f32
    %11 = vector.broadcast %cst_6 : f32 to vector<1x128xf32>
    %12 = arith.addf %9, %11 : vector<1x128xf32>
    %13 = math.rsqrt %12 : vector<1x128xf32>
    %14 = arith.mulf %10, %13 : vector<1x128xf32>
    %c0_7 = arith.constant 0 : index
    %c0_8 = arith.constant 0 : index
    %15 = vector.load %arg3[%c0_7, %c0_8] : memref<1x128xf32, #tpu.memory_space<vmem>>, vector<1x128xf32>
    %16 = arith.mulf %2, %14 : vector<1x128xf32>
    %17 = arith.subf %15, %16 : vector<1x128xf32>
    %c0_9 = arith.constant 0 : index
    %c0_10 = arith.constant 0 : index
    %18 = vector.load %arg4[%c0_9, %c0_10] : memref<224x128xbf16, #tpu.memory_space<vmem>>, vector<224x128xbf16>
    %19 = arith.extf %18 : vector<224x128xbf16> to vector<224x128xf32>
    %20 = vector.broadcast %14 : vector<1x128xf32> to vector<224x128xf32>
    %21 = arith.mulf %19, %20 : vector<224x128xf32>
    %22 = vector.broadcast %17 : vector<1x128xf32> to vector<224x128xf32>
    %23 = arith.addf %21, %22 : vector<224x128xf32>
    %cst_11 = arith.constant 0.000000e+00 : f32
    %24 = vector.broadcast %cst_11 : f32 to vector<224x128xf32>
    %25 = arith.cmpf oge, %23, %24 : vector<224x128xf32>
    %cst_12 = arith.constant 0.00999999977 : f32
    %26 = vector.broadcast %cst_12 : f32 to vector<224x128xf32>
    %27 = arith.mulf %26, %23 : vector<224x128xf32>
    %28 = arith.select %25, %23, %27 : vector<224x128xi1>, vector<224x128xf32>
    %29 = arith.truncf %28 : vector<224x128xf32> to vector<224x128xbf16>
    %c0_13 = arith.constant 0 : index
    %c0_14 = arith.constant 0 : index
    %30 = vector.load %arg5[%c0_13, %c0_14] : memref<224x128xbf16, #tpu.memory_space<vmem>>, vector<224x128xbf16>
    tpu.vector_store %arg5[%c0_13, %c0_14], %29 {strides = array<i32>} : memref<224x128xbf16, #tpu.memory_space<vmem>>, vector<224x128xbf16>,
    return
  }
  func.func @transform_0(%arg0: i32) -> (i32, i32) {
    %c0_i32 = arith.constant 0 : i32
    %c0_i32_0 = arith.constant 0 : i32
    %c0_i32_1 = arith.constant 0 : i32
    return %c0_i32, %c0_i32_0 : i32, i32
  }
  func.func @transform_1(%arg0: i32) -> (i32, i32) {
    %c0_i32 = arith.constant 0 : i32
    %c0_i32_0 = arith.constant 0 : i32
    %c0_i32_1 = arith.constant 0 : i32
    return %c0_i32, %c0_i32_0 : i32, i32
  }
  func.func @transform_2(%arg0: i32) -> (i32, i32) {
    %c0_i32 = arith.constant 0 : i32
    %c0_i32_0 = arith.constant 0 : i32
    %c0_i32_1 = arith.constant 0 : i32
    return %c0_i32, %c0_i32_0 : i32, i32
  }
  func.func @transform_3(%arg0: i32) -> (i32, i32) {
    %c0_i32 = arith.constant 0 : i32
    %c0_i32_0 = arith.constant 0 : i32
    return %arg0, %c0_i32 : i32, i32
  }
  func.func @transform_4(%arg0: i32) -> (i32, i32) {
    %c0_i32 = arith.constant 0 : i32
    %c0_i32_0 = arith.constant 0 : i32
    return %arg0, %c0_i32 : i32, i32
  }
}

module attributes {stable_mosaic.version = 11 : i64} {
  func.func @_conv_stats_kernel(%arg0: i32, %arg1: memref<96x896xbf16, #tpu.memory_space<vmem>>, %arg2: memref<896x128xbf16, #tpu.memory_space<vmem>>, %arg3: memref<96x128xbf16, #tpu.memory_space<vmem>>, %arg4: memref<2x128xf32, #tpu.memory_space<vmem>>) attributes {dimension_semantics = [#tpu.dimension_semantics<arbitrary>], iteration_bounds = array<i64: 1>, scalar_prefetch = 0 : i64, scratch_operands = 0 : i64, tpu.core_type = #tpu.core_type<tc>, window_params = [{transform_indices = @transform_0, window_bounds = array<i64: 96, 896>}, {pipeline_mode = #tpu.pipeline_mode<synchronous>, transform_indices = @transform_1, window_bounds = array<i64: 896, 128>}, {transform_indices = @transform_2, window_bounds = array<i64: 96, 128>}, {pipeline_mode = #tpu.pipeline_mode<synchronous>, transform_indices = @transform_3, window_bounds = array<i64: 2, 128>}]} {
    %c0_i32 = arith.constant 0 : i32
    %0 = arith.cmpi eq, %arg0, %c0_i32 : i32
    %1 = arith.extui %0 : i1 to i32
    %c0_i32_0 = arith.constant 0 : i32
    %2 = arith.cmpi ne, %1, %c0_i32_0 : i32
    scf.if %2 {
      %cst_12 = arith.constant 0.000000e+00 : f32
      %17 = vector.broadcast %cst_12 : f32 to vector<2x128xf32>
      %c0_13 = arith.constant 0 : index
      %c0_14 = arith.constant 0 : index
      %18 = vector.load %arg4[%c0_13, %c0_14] : memref<2x128xf32, #tpu.memory_space<vmem>>, vector<2x128xf32>
      tpu.vector_store %arg4[%c0_13, %c0_14], %17 {strides = array<i32>} : memref<2x128xf32, #tpu.memory_space<vmem>>, vector<2x128xf32>,
    } else {
    }
    %c0 = arith.constant 0 : index
    %c0_1 = arith.constant 0 : index
    %3 = vector.load %arg1[%c0, %c0_1] : memref<96x896xbf16, #tpu.memory_space<vmem>>, vector<96x896xbf16>
    %c0_2 = arith.constant 0 : index
    %c0_3 = arith.constant 0 : index
    %4 = vector.load %arg2[%c0_2, %c0_3] : memref<896x128xbf16, #tpu.memory_space<vmem>>, vector<896x128xbf16>
    %cst = arith.constant dense<0.000000e+00> : vector<96x128xf32>
    %5 = tpu.matmul %3, %4, %cst {dimension_numbers = #tpu.dot_dimension_numbers<[1], [0], [0], [1], [0, 0, 1, 1], [], []>} : vector<96x896xbf16>, vector<896x128xbf16>, vector<96x128xf32> -> vector<96x128xf32>
    %c0_4 = arith.constant 0 : index
    %c0_5 = arith.constant 0 : index
    %6 = vector.load %arg4[%c0_4, %c0_5] : memref<2x128xf32, #tpu.memory_space<vmem>>, vector<2x128xf32>
    %cst_6 = arith.constant dense<0.000000e+00> : vector<128xf32>
    %7 = vector.multi_reduction <add>, %5, %cst_6 [0] : vector<96x128xf32> to vector<128xf32>
    %8 = vector.shape_cast %7 : vector<128xf32> to vector<1x128xf32>
    %9 = arith.mulf %5, %5 : vector<96x128xf32>
    %cst_7 = arith.constant dense<0.000000e+00> : vector<128xf32>
    %10 = vector.multi_reduction <add>, %9, %cst_7 [0] : vector<96x128xf32> to vector<128xf32>
    %11 = vector.shape_cast %10 : vector<128xf32> to vector<1x128xf32>
    %12 = tpu.concatenate %8, %11 in 0 : vector<1x128xf32>, vector<1x128xf32> -> vector<2x128xf32>
    %13 = arith.addf %6, %12 : vector<2x128xf32>
    %c0_8 = arith.constant 0 : index
    %c0_9 = arith.constant 0 : index
    %14 = vector.load %arg4[%c0_8, %c0_9] : memref<2x128xf32, #tpu.memory_space<vmem>>, vector<2x128xf32>
    tpu.vector_store %arg4[%c0_8, %c0_9], %13 {strides = array<i32>} : memref<2x128xf32, #tpu.memory_space<vmem>>, vector<2x128xf32>,
    %15 = arith.truncf %5 : vector<96x128xf32> to vector<96x128xbf16>
    %c0_10 = arith.constant 0 : index
    %c0_11 = arith.constant 0 : index
    %16 = vector.load %arg3[%c0_10, %c0_11] : memref<96x128xbf16, #tpu.memory_space<vmem>>, vector<96x128xbf16>
    tpu.vector_store %arg3[%c0_10, %c0_11], %15 {strides = array<i32>} : memref<96x128xbf16, #tpu.memory_space<vmem>>, vector<96x128xbf16>,
    return
  }
  func.func @transform_0(%arg0: i32) -> (i32, i32) {
    %c0_i32 = arith.constant 0 : i32
    %c0_i32_0 = arith.constant 0 : i32
    return %arg0, %c0_i32 : i32, i32
  }
  func.func @transform_1(%arg0: i32) -> (i32, i32) {
    %c0_i32 = arith.constant 0 : i32
    %c0_i32_0 = arith.constant 0 : i32
    %c0_i32_1 = arith.constant 0 : i32
    return %c0_i32, %c0_i32_0 : i32, i32
  }
  func.func @transform_2(%arg0: i32) -> (i32, i32) {
    %c0_i32 = arith.constant 0 : i32
    %c0_i32_0 = arith.constant 0 : i32
    return %arg0, %c0_i32 : i32, i32
  }
  func.func @transform_3(%arg0: i32) -> (i32, i32) {
    %c0_i32 = arith.constant 0 : i32
    %c0_i32_0 = arith.constant 0 : i32
    %c0_i32_1 = arith.constant 0 : i32
    return %c0_i32, %c0_i32_0 : i32, i32
  }
}

module attributes {stable_mosaic.version = 11 : i64} {
  func.func @_bn_lrelu_kernel(%arg0: i32, %arg1: memref<2x128xf32, #tpu.memory_space<vmem>>, %arg2: memref<1x128xf32, #tpu.memory_space<vmem>>, %arg3: memref<1x128xf32, #tpu.memory_space<vmem>>, %arg4: memref<96x128xbf16, #tpu.memory_space<vmem>>, %arg5: memref<96x128xbf16, #tpu.memory_space<vmem>>) attributes {dimension_semantics = [#tpu.dimension_semantics<parallel>], iteration_bounds = array<i64: 1>, scalar_prefetch = 0 : i64, scratch_operands = 0 : i64, tpu.core_type = #tpu.core_type<tc>, window_params = [{pipeline_mode = #tpu.pipeline_mode<synchronous>, transform_indices = @transform_0, window_bounds = array<i64: 2, 128>}, {pipeline_mode = #tpu.pipeline_mode<synchronous>, transform_indices = @transform_1, window_bounds = array<i64: 1, 128>}, {pipeline_mode = #tpu.pipeline_mode<synchronous>, transform_indices = @transform_2, window_bounds = array<i64: 1, 128>}, {transform_indices = @transform_3, window_bounds = array<i64: 96, 128>}, {transform_indices = @transform_4, window_bounds = array<i64: 96, 128>}]} {
    %c0 = arith.constant 0 : index
    %c0_0 = arith.constant 0 : index
    %0 = vector.load %arg1[%c0, %c0_0] : memref<2x128xf32, #tpu.memory_space<vmem>>, vector<1x128xf32>
    %cst = arith.constant 9.200000e+01 : f32
    %1 = vector.broadcast %cst : f32 to vector<1x128xf32>
    %2 = arith.divf %0, %1 : vector<1x128xf32>
    %c1 = arith.constant 1 : index
    %c0_1 = arith.constant 0 : index
    %3 = vector.load %arg1[%c1, %c0_1] : memref<2x128xf32, #tpu.memory_space<vmem>>, vector<1x128xf32>
    %cst_2 = arith.constant 9.200000e+01 : f32
    %4 = vector.broadcast %cst_2 : f32 to vector<1x128xf32>
    %5 = arith.divf %3, %4 : vector<1x128xf32>
    %6 = arith.mulf %2, %2 : vector<1x128xf32>
    %7 = arith.subf %5, %6 : vector<1x128xf32>
    %cst_3 = arith.constant 0.000000e+00 : f32
    %8 = vector.broadcast %cst_3 : f32 to vector<1x128xf32>
    %9 = arith.maximumf %7, %8 : vector<1x128xf32>
    %c0_4 = arith.constant 0 : index
    %c0_5 = arith.constant 0 : index
    %10 = vector.load %arg2[%c0_4, %c0_5] : memref<1x128xf32, #tpu.memory_space<vmem>>, vector<1x128xf32>
    %cst_6 = arith.constant 9.99999974E-6 : f32
    %11 = vector.broadcast %cst_6 : f32 to vector<1x128xf32>
    %12 = arith.addf %9, %11 : vector<1x128xf32>
    %13 = math.rsqrt %12 : vector<1x128xf32>
    %14 = arith.mulf %10, %13 : vector<1x128xf32>
    %c0_7 = arith.constant 0 : index
    %c0_8 = arith.constant 0 : index
    %15 = vector.load %arg3[%c0_7, %c0_8] : memref<1x128xf32, #tpu.memory_space<vmem>>, vector<1x128xf32>
    %16 = arith.mulf %2, %14 : vector<1x128xf32>
    %17 = arith.subf %15, %16 : vector<1x128xf32>
    %c0_9 = arith.constant 0 : index
    %c0_10 = arith.constant 0 : index
    %18 = vector.load %arg4[%c0_9, %c0_10] : memref<96x128xbf16, #tpu.memory_space<vmem>>, vector<96x128xbf16>
    %19 = arith.extf %18 : vector<96x128xbf16> to vector<96x128xf32>
    %20 = vector.broadcast %14 : vector<1x128xf32> to vector<96x128xf32>
    %21 = arith.mulf %19, %20 : vector<96x128xf32>
    %22 = vector.broadcast %17 : vector<1x128xf32> to vector<96x128xf32>
    %23 = arith.addf %21, %22 : vector<96x128xf32>
    %cst_11 = arith.constant 0.000000e+00 : f32
    %24 = vector.broadcast %cst_11 : f32 to vector<96x128xf32>
    %25 = arith.cmpf oge, %23, %24 : vector<96x128xf32>
    %cst_12 = arith.constant 0.00999999977 : f32
    %26 = vector.broadcast %cst_12 : f32 to vector<96x128xf32>
    %27 = arith.mulf %26, %23 : vector<96x128xf32>
    %28 = arith.select %25, %23, %27 : vector<96x128xi1>, vector<96x128xf32>
    %29 = arith.truncf %28 : vector<96x128xf32> to vector<96x128xbf16>
    %c0_13 = arith.constant 0 : index
    %c0_14 = arith.constant 0 : index
    %30 = vector.load %arg5[%c0_13, %c0_14] : memref<96x128xbf16, #tpu.memory_space<vmem>>, vector<96x128xbf16>
    tpu.vector_store %arg5[%c0_13, %c0_14], %29 {strides = array<i32>} : memref<96x128xbf16, #tpu.memory_space<vmem>>, vector<96x128xbf16>,
    return
  }
  func.func @transform_0(%arg0: i32) -> (i32, i32) {
    %c0_i32 = arith.constant 0 : i32
    %c0_i32_0 = arith.constant 0 : i32
    %c0_i32_1 = arith.constant 0 : i32
    return %c0_i32, %c0_i32_0 : i32, i32
  }
  func.func @transform_1(%arg0: i32) -> (i32, i32) {
    %c0_i32 = arith.constant 0 : i32
    %c0_i32_0 = arith.constant 0 : i32
    %c0_i32_1 = arith.constant 0 : i32
    return %c0_i32, %c0_i32_0 : i32, i32
  }
  func.func @transform_2(%arg0: i32) -> (i32, i32) {
    %c0_i32 = arith.constant 0 : i32
    %c0_i32_0 = arith.constant 0 : i32
    %c0_i32_1 = arith.constant 0 : i32
    return %c0_i32, %c0_i32_0 : i32, i32
  }
  func.func @transform_3(%arg0: i32) -> (i32, i32) {
    %c0_i32 = arith.constant 0 : i32
    %c0_i32_0 = arith.constant 0 : i32
    return %arg0, %c0_i32 : i32, i32
  }
  func.func @transform_4(%arg0: i32) -> (i32, i32) {
    %c0_i32 = arith.constant 0 : i32
    %c0_i32_0 = arith.constant 0 : i32
    return %arg0, %c0_i32 : i32, i32
  }
}

module attributes {stable_mosaic.version = 11 : i64} {
  func.func @_conv_stats_kernel(%arg0: i32, %arg1: memref<96x384xbf16, #tpu.memory_space<vmem>>, %arg2: memref<384x256xbf16, #tpu.memory_space<vmem>>, %arg3: memref<96x256xbf16, #tpu.memory_space<vmem>>, %arg4: memref<2x256xf32, #tpu.memory_space<vmem>>) attributes {dimension_semantics = [#tpu.dimension_semantics<arbitrary>], iteration_bounds = array<i64: 1>, scalar_prefetch = 0 : i64, scratch_operands = 0 : i64, tpu.core_type = #tpu.core_type<tc>, window_params = [{transform_indices = @transform_0, window_bounds = array<i64: 96, 384>}, {pipeline_mode = #tpu.pipeline_mode<synchronous>, transform_indices = @transform_1, window_bounds = array<i64: 384, 256>}, {transform_indices = @transform_2, window_bounds = array<i64: 96, 256>}, {pipeline_mode = #tpu.pipeline_mode<synchronous>, transform_indices = @transform_3, window_bounds = array<i64: 2, 256>}]} {
    %c0_i32 = arith.constant 0 : i32
    %0 = arith.cmpi eq, %arg0, %c0_i32 : i32
    %1 = arith.extui %0 : i1 to i32
    %c0_i32_0 = arith.constant 0 : i32
    %2 = arith.cmpi ne, %1, %c0_i32_0 : i32
    scf.if %2 {
      %cst_12 = arith.constant 0.000000e+00 : f32
      %17 = vector.broadcast %cst_12 : f32 to vector<2x256xf32>
      %c0_13 = arith.constant 0 : index
      %c0_14 = arith.constant 0 : index
      %18 = vector.load %arg4[%c0_13, %c0_14] : memref<2x256xf32, #tpu.memory_space<vmem>>, vector<2x256xf32>
      tpu.vector_store %arg4[%c0_13, %c0_14], %17 {strides = array<i32>} : memref<2x256xf32, #tpu.memory_space<vmem>>, vector<2x256xf32>,
    } else {
    }
    %c0 = arith.constant 0 : index
    %c0_1 = arith.constant 0 : index
    %3 = vector.load %arg1[%c0, %c0_1] : memref<96x384xbf16, #tpu.memory_space<vmem>>, vector<96x384xbf16>
    %c0_2 = arith.constant 0 : index
    %c0_3 = arith.constant 0 : index
    %4 = vector.load %arg2[%c0_2, %c0_3] : memref<384x256xbf16, #tpu.memory_space<vmem>>, vector<384x256xbf16>
    %cst = arith.constant dense<0.000000e+00> : vector<96x256xf32>
    %5 = tpu.matmul %3, %4, %cst {dimension_numbers = #tpu.dot_dimension_numbers<[1], [0], [0], [1], [0, 0, 1, 1], [], []>} : vector<96x384xbf16>, vector<384x256xbf16>, vector<96x256xf32> -> vector<96x256xf32>
    %c0_4 = arith.constant 0 : index
    %c0_5 = arith.constant 0 : index
    %6 = vector.load %arg4[%c0_4, %c0_5] : memref<2x256xf32, #tpu.memory_space<vmem>>, vector<2x256xf32>
    %cst_6 = arith.constant dense<0.000000e+00> : vector<256xf32>
    %7 = vector.multi_reduction <add>, %5, %cst_6 [0] : vector<96x256xf32> to vector<256xf32>
    %8 = vector.shape_cast %7 : vector<256xf32> to vector<1x256xf32>
    %9 = arith.mulf %5, %5 : vector<96x256xf32>
    %cst_7 = arith.constant dense<0.000000e+00> : vector<256xf32>
    %10 = vector.multi_reduction <add>, %9, %cst_7 [0] : vector<96x256xf32> to vector<256xf32>
    %11 = vector.shape_cast %10 : vector<256xf32> to vector<1x256xf32>
    %12 = tpu.concatenate %8, %11 in 0 : vector<1x256xf32>, vector<1x256xf32> -> vector<2x256xf32>
    %13 = arith.addf %6, %12 : vector<2x256xf32>
    %c0_8 = arith.constant 0 : index
    %c0_9 = arith.constant 0 : index
    %14 = vector.load %arg4[%c0_8, %c0_9] : memref<2x256xf32, #tpu.memory_space<vmem>>, vector<2x256xf32>
    tpu.vector_store %arg4[%c0_8, %c0_9], %13 {strides = array<i32>} : memref<2x256xf32, #tpu.memory_space<vmem>>, vector<2x256xf32>,
    %15 = arith.truncf %5 : vector<96x256xf32> to vector<96x256xbf16>
    %c0_10 = arith.constant 0 : index
    %c0_11 = arith.constant 0 : index
    %16 = vector.load %arg3[%c0_10, %c0_11] : memref<96x256xbf16, #tpu.memory_space<vmem>>, vector<96x256xbf16>
    tpu.vector_store %arg3[%c0_10, %c0_11], %15 {strides = array<i32>} : memref<96x256xbf16, #tpu.memory_space<vmem>>, vector<96x256xbf16>,
    return
  }
  func.func @transform_0(%arg0: i32) -> (i32, i32) {
    %c0_i32 = arith.constant 0 : i32
    %c0_i32_0 = arith.constant 0 : i32
    return %arg0, %c0_i32 : i32, i32
  }
  func.func @transform_1(%arg0: i32) -> (i32, i32) {
    %c0_i32 = arith.constant 0 : i32
    %c0_i32_0 = arith.constant 0 : i32
    %c0_i32_1 = arith.constant 0 : i32
    return %c0_i32, %c0_i32_0 : i32, i32
  }
  func.func @transform_2(%arg0: i32) -> (i32, i32) {
    %c0_i32 = arith.constant 0 : i32
    %c0_i32_0 = arith.constant 0 : i32
    return %arg0, %c0_i32 : i32, i32
  }
  func.func @transform_3(%arg0: i32) -> (i32, i32) {
    %c0_i32 = arith.constant 0 : i32
    %c0_i32_0 = arith.constant 0 : i32
    %c0_i32_1 = arith.constant 0 : i32
    return %c0_i32, %c0_i32_0 : i32, i32
  }
}

module attributes {stable_mosaic.version = 11 : i64} {
  func.func @_bn_lrelu_kernel(%arg0: i32, %arg1: memref<2x256xf32, #tpu.memory_space<vmem>>, %arg2: memref<1x256xf32, #tpu.memory_space<vmem>>, %arg3: memref<1x256xf32, #tpu.memory_space<vmem>>, %arg4: memref<96x256xbf16, #tpu.memory_space<vmem>>, %arg5: memref<96x256xbf16, #tpu.memory_space<vmem>>) attributes {dimension_semantics = [#tpu.dimension_semantics<parallel>], iteration_bounds = array<i64: 1>, scalar_prefetch = 0 : i64, scratch_operands = 0 : i64, tpu.core_type = #tpu.core_type<tc>, window_params = [{pipeline_mode = #tpu.pipeline_mode<synchronous>, transform_indices = @transform_0, window_bounds = array<i64: 2, 256>}, {pipeline_mode = #tpu.pipeline_mode<synchronous>, transform_indices = @transform_1, window_bounds = array<i64: 1, 256>}, {pipeline_mode = #tpu.pipeline_mode<synchronous>, transform_indices = @transform_2, window_bounds = array<i64: 1, 256>}, {transform_indices = @transform_3, window_bounds = array<i64: 96, 256>}, {transform_indices = @transform_4, window_bounds = array<i64: 96, 256>}]} {
    %c0 = arith.constant 0 : index
    %c0_0 = arith.constant 0 : index
    %0 = vector.load %arg1[%c0, %c0_0] : memref<2x256xf32, #tpu.memory_space<vmem>>, vector<1x256xf32>
    %cst = arith.constant 8.800000e+01 : f32
    %1 = vector.broadcast %cst : f32 to vector<1x256xf32>
    %2 = arith.divf %0, %1 : vector<1x256xf32>
    %c1 = arith.constant 1 : index
    %c0_1 = arith.constant 0 : index
    %3 = vector.load %arg1[%c1, %c0_1] : memref<2x256xf32, #tpu.memory_space<vmem>>, vector<1x256xf32>
    %cst_2 = arith.constant 8.800000e+01 : f32
    %4 = vector.broadcast %cst_2 : f32 to vector<1x256xf32>
    %5 = arith.divf %3, %4 : vector<1x256xf32>
    %6 = arith.mulf %2, %2 : vector<1x256xf32>
    %7 = arith.subf %5, %6 : vector<1x256xf32>
    %cst_3 = arith.constant 0.000000e+00 : f32
    %8 = vector.broadcast %cst_3 : f32 to vector<1x256xf32>
    %9 = arith.maximumf %7, %8 : vector<1x256xf32>
    %c0_4 = arith.constant 0 : index
    %c0_5 = arith.constant 0 : index
    %10 = vector.load %arg2[%c0_4, %c0_5] : memref<1x256xf32, #tpu.memory_space<vmem>>, vector<1x256xf32>
    %cst_6 = arith.constant 9.99999974E-6 : f32
    %11 = vector.broadcast %cst_6 : f32 to vector<1x256xf32>
    %12 = arith.addf %9, %11 : vector<1x256xf32>
    %13 = math.rsqrt %12 : vector<1x256xf32>
    %14 = arith.mulf %10, %13 : vector<1x256xf32>
    %c0_7 = arith.constant 0 : index
    %c0_8 = arith.constant 0 : index
    %15 = vector.load %arg3[%c0_7, %c0_8] : memref<1x256xf32, #tpu.memory_space<vmem>>, vector<1x256xf32>
    %16 = arith.mulf %2, %14 : vector<1x256xf32>
    %17 = arith.subf %15, %16 : vector<1x256xf32>
    %c0_9 = arith.constant 0 : index
    %c0_10 = arith.constant 0 : index
    %18 = vector.load %arg4[%c0_9, %c0_10] : memref<96x256xbf16, #tpu.memory_space<vmem>>, vector<96x256xbf16>
    %19 = arith.extf %18 : vector<96x256xbf16> to vector<96x256xf32>
    %20 = vector.broadcast %14 : vector<1x256xf32> to vector<96x256xf32>
    %21 = arith.mulf %19, %20 : vector<96x256xf32>
    %22 = vector.broadcast %17 : vector<1x256xf32> to vector<96x256xf32>
    %23 = arith.addf %21, %22 : vector<96x256xf32>
    %cst_11 = arith.constant 0.000000e+00 : f32
    %24 = vector.broadcast %cst_11 : f32 to vector<96x256xf32>
    %25 = arith.cmpf oge, %23, %24 : vector<96x256xf32>
    %cst_12 = arith.constant 0.00999999977 : f32
    %26 = vector.broadcast %cst_12 : f32 to vector<96x256xf32>
    %27 = arith.mulf %26, %23 : vector<96x256xf32>
    %28 = arith.select %25, %23, %27 : vector<96x256xi1>, vector<96x256xf32>
    %29 = arith.truncf %28 : vector<96x256xf32> to vector<96x256xbf16>
    %c0_13 = arith.constant 0 : index
    %c0_14 = arith.constant 0 : index
    %30 = vector.load %arg5[%c0_13, %c0_14] : memref<96x256xbf16, #tpu.memory_space<vmem>>, vector<96x256xbf16>
    tpu.vector_store %arg5[%c0_13, %c0_14], %29 {strides = array<i32>} : memref<96x256xbf16, #tpu.memory_space<vmem>>, vector<96x256xbf16>,
    return
  }
  func.func @transform_0(%arg0: i32) -> (i32, i32) {
    %c0_i32 = arith.constant 0 : i32
    %c0_i32_0 = arith.constant 0 : i32
    %c0_i32_1 = arith.constant 0 : i32
    return %c0_i32, %c0_i32_0 : i32, i32
  }
  func.func @transform_1(%arg0: i32) -> (i32, i32) {
    %c0_i32 = arith.constant 0 : i32
    %c0_i32_0 = arith.constant 0 : i32
    %c0_i32_1 = arith.constant 0 : i32
    return %c0_i32, %c0_i32_0 : i32, i32
  }
  func.func @transform_2(%arg0: i32) -> (i32, i32) {
    %c0_i32 = arith.constant 0 : i32
    %c0_i32_0 = arith.constant 0 : i32
    %c0_i32_1 = arith.constant 0 : i32
    return %c0_i32, %c0_i32_0 : i32, i32
  }
  func.func @transform_3(%arg0: i32) -> (i32, i32) {
    %c0_i32 = arith.constant 0 : i32
    %c0_i32_0 = arith.constant 0 : i32
    return %arg0, %c0_i32 : i32, i32
  }
  func.func @transform_4(%arg0: i32) -> (i32, i32) {
    %c0_i32 = arith.constant 0 : i32
    %c0_i32_0 = arith.constant 0 : i32
    return %arg0, %c0_i32 : i32, i32
  }
}

module attributes {stable_mosaic.version = 11 : i64} {
  func.func @_conv_stats_kernel(%arg0: i32, %arg1: memref<96x768xbf16, #tpu.memory_space<vmem>>, %arg2: memref<768x256xbf16, #tpu.memory_space<vmem>>, %arg3: memref<96x256xbf16, #tpu.memory_space<vmem>>, %arg4: memref<2x256xf32, #tpu.memory_space<vmem>>) attributes {dimension_semantics = [#tpu.dimension_semantics<arbitrary>], iteration_bounds = array<i64: 1>, scalar_prefetch = 0 : i64, scratch_operands = 0 : i64, tpu.core_type = #tpu.core_type<tc>, window_params = [{transform_indices = @transform_0, window_bounds = array<i64: 96, 768>}, {pipeline_mode = #tpu.pipeline_mode<synchronous>, transform_indices = @transform_1, window_bounds = array<i64: 768, 256>}, {transform_indices = @transform_2, window_bounds = array<i64: 96, 256>}, {pipeline_mode = #tpu.pipeline_mode<synchronous>, transform_indices = @transform_3, window_bounds = array<i64: 2, 256>}]} {
    %c0_i32 = arith.constant 0 : i32
    %0 = arith.cmpi eq, %arg0, %c0_i32 : i32
    %1 = arith.extui %0 : i1 to i32
    %c0_i32_0 = arith.constant 0 : i32
    %2 = arith.cmpi ne, %1, %c0_i32_0 : i32
    scf.if %2 {
      %cst_12 = arith.constant 0.000000e+00 : f32
      %17 = vector.broadcast %cst_12 : f32 to vector<2x256xf32>
      %c0_13 = arith.constant 0 : index
      %c0_14 = arith.constant 0 : index
      %18 = vector.load %arg4[%c0_13, %c0_14] : memref<2x256xf32, #tpu.memory_space<vmem>>, vector<2x256xf32>
      tpu.vector_store %arg4[%c0_13, %c0_14], %17 {strides = array<i32>} : memref<2x256xf32, #tpu.memory_space<vmem>>, vector<2x256xf32>,
    } else {
    }
    %c0 = arith.constant 0 : index
    %c0_1 = arith.constant 0 : index
    %3 = vector.load %arg1[%c0, %c0_1] : memref<96x768xbf16, #tpu.memory_space<vmem>>, vector<96x768xbf16>
    %c0_2 = arith.constant 0 : index
    %c0_3 = arith.constant 0 : index
    %4 = vector.load %arg2[%c0_2, %c0_3] : memref<768x256xbf16, #tpu.memory_space<vmem>>, vector<768x256xbf16>
    %cst = arith.constant dense<0.000000e+00> : vector<96x256xf32>
    %5 = tpu.matmul %3, %4, %cst {dimension_numbers = #tpu.dot_dimension_numbers<[1], [0], [0], [1], [0, 0, 1, 1], [], []>} : vector<96x768xbf16>, vector<768x256xbf16>, vector<96x256xf32> -> vector<96x256xf32>
    %c0_4 = arith.constant 0 : index
    %c0_5 = arith.constant 0 : index
    %6 = vector.load %arg4[%c0_4, %c0_5] : memref<2x256xf32, #tpu.memory_space<vmem>>, vector<2x256xf32>
    %cst_6 = arith.constant dense<0.000000e+00> : vector<256xf32>
    %7 = vector.multi_reduction <add>, %5, %cst_6 [0] : vector<96x256xf32> to vector<256xf32>
    %8 = vector.shape_cast %7 : vector<256xf32> to vector<1x256xf32>
    %9 = arith.mulf %5, %5 : vector<96x256xf32>
    %cst_7 = arith.constant dense<0.000000e+00> : vector<256xf32>
    %10 = vector.multi_reduction <add>, %9, %cst_7 [0] : vector<96x256xf32> to vector<256xf32>
    %11 = vector.shape_cast %10 : vector<256xf32> to vector<1x256xf32>
    %12 = tpu.concatenate %8, %11 in 0 : vector<1x256xf32>, vector<1x256xf32> -> vector<2x256xf32>
    %13 = arith.addf %6, %12 : vector<2x256xf32>
    %c0_8 = arith.constant 0 : index
    %c0_9 = arith.constant 0 : index
    %14 = vector.load %arg4[%c0_8, %c0_9] : memref<2x256xf32, #tpu.memory_space<vmem>>, vector<2x256xf32>
    tpu.vector_store %arg4[%c0_8, %c0_9], %13 {strides = array<i32>} : memref<2x256xf32, #tpu.memory_space<vmem>>, vector<2x256xf32>,
    %15 = arith.truncf %5 : vector<96x256xf32> to vector<96x256xbf16>
    %c0_10 = arith.constant 0 : index
    %c0_11 = arith.constant 0 : index
    %16 = vector.load %arg3[%c0_10, %c0_11] : memref<96x256xbf16, #tpu.memory_space<vmem>>, vector<96x256xbf16>
    tpu.vector_store %arg3[%c0_10, %c0_11], %15 {strides = array<i32>} : memref<96x256xbf16, #tpu.memory_space<vmem>>, vector<96x256xbf16>,
    return
  }
  func.func @transform_0(%arg0: i32) -> (i32, i32) {
    %c0_i32 = arith.constant 0 : i32
    %c0_i32_0 = arith.constant 0 : i32
    return %arg0, %c0_i32 : i32, i32
  }
  func.func @transform_1(%arg0: i32) -> (i32, i32) {
    %c0_i32 = arith.constant 0 : i32
    %c0_i32_0 = arith.constant 0 : i32
    %c0_i32_1 = arith.constant 0 : i32
    return %c0_i32, %c0_i32_0 : i32, i32
  }
  func.func @transform_2(%arg0: i32) -> (i32, i32) {
    %c0_i32 = arith.constant 0 : i32
    %c0_i32_0 = arith.constant 0 : i32
    return %arg0, %c0_i32 : i32, i32
  }
  func.func @transform_3(%arg0: i32) -> (i32, i32) {
    %c0_i32 = arith.constant 0 : i32
    %c0_i32_0 = arith.constant 0 : i32
    %c0_i32_1 = arith.constant 0 : i32
    return %c0_i32, %c0_i32_0 : i32, i32
  }
}

module attributes {stable_mosaic.version = 11 : i64} {
  func.func @_bn_lrelu_gap_kernel(%arg0: i32, %arg1: i32, %arg2: memref<2x256xf32, #tpu.memory_space<vmem>>, %arg3: memref<1x256xf32, #tpu.memory_space<vmem>>, %arg4: memref<1x256xf32, #tpu.memory_space<vmem>>, %arg5: memref<1x48x256xbf16, #tpu.memory_space<vmem>>, %arg6: memref<1x1x256xf32, #tpu.memory_space<vmem>>) attributes {dimension_semantics = [#tpu.dimension_semantics<parallel>, #tpu.dimension_semantics<arbitrary>], iteration_bounds = array<i64: 2, 1>, scalar_prefetch = 0 : i64, scratch_operands = 0 : i64, tpu.core_type = #tpu.core_type<tc>, window_params = [{pipeline_mode = #tpu.pipeline_mode<synchronous>, transform_indices = @transform_0, window_bounds = array<i64: 2, 256>}, {pipeline_mode = #tpu.pipeline_mode<synchronous>, transform_indices = @transform_1, window_bounds = array<i64: 1, 256>}, {pipeline_mode = #tpu.pipeline_mode<synchronous>, transform_indices = @transform_2, window_bounds = array<i64: 1, 256>}, {transform_indices = @transform_3, window_bounds = array<i64: 1, 48, 256>}, {transform_indices = @transform_4, window_bounds = array<i64: 1, 1, 256>}]} {
    %c0_i32 = arith.constant 0 : i32
    %0 = arith.cmpi eq, %arg1, %c0_i32 : i32
    %1 = arith.extui %0 : i1 to i32
    %c0_i32_0 = arith.constant 0 : i32
    %2 = arith.cmpi ne, %1, %c0_i32_0 : i32
    scf.if %2 {
      %cst_23 = arith.constant 0.000000e+00 : f32
      %51 = vector.broadcast %cst_23 : f32 to vector<1x256xf32>
      %c0_24 = arith.constant 0 : index
      %c0_25 = arith.constant 0 : index
      %c0_26 = arith.constant 0 : index
      %52 = vector.load %arg6[%c0_24, %c0_25, %c0_26] : memref<1x1x256xf32, #tpu.memory_space<vmem>>, vector<1x1x256xf32>
      %53 = vector.shape_cast %52 : vector<1x1x256xf32> to vector<1x256xf32>
      %54 = vector.shape_cast %51 : vector<1x256xf32> to vector<1x1x256xf32>
      tpu.vector_store %arg6[%c0_24, %c0_25, %c0_26], %54 {strides = array<i32>} : memref<1x1x256xf32, #tpu.memory_space<vmem>>, vector<1x1x256xf32>,
    } else {
    }
    %c0 = arith.constant 0 : index
    %c0_1 = arith.constant 0 : index
    %3 = vector.load %arg2[%c0, %c0_1] : memref<2x256xf32, #tpu.memory_space<vmem>>, vector<1x256xf32>
    %cst = arith.constant 8.400000e+01 : f32
    %4 = vector.broadcast %cst : f32 to vector<1x256xf32>
    %5 = arith.divf %3, %4 : vector<1x256xf32>
    %c1 = arith.constant 1 : index
    %c0_2 = arith.constant 0 : index
    %6 = vector.load %arg2[%c1, %c0_2] : memref<2x256xf32, #tpu.memory_space<vmem>>, vector<1x256xf32>
    %cst_3 = arith.constant 8.400000e+01 : f32
    %7 = vector.broadcast %cst_3 : f32 to vector<1x256xf32>
    %8 = arith.divf %6, %7 : vector<1x256xf32>
    %9 = arith.mulf %5, %5 : vector<1x256xf32>
    %10 = arith.subf %8, %9 : vector<1x256xf32>
    %cst_4 = arith.constant 0.000000e+00 : f32
    %11 = vector.broadcast %cst_4 : f32 to vector<1x256xf32>
    %12 = arith.maximumf %10, %11 : vector<1x256xf32>
    %c0_5 = arith.constant 0 : index
    %c0_6 = arith.constant 0 : index
    %13 = vector.load %arg3[%c0_5, %c0_6] : memref<1x256xf32, #tpu.memory_space<vmem>>, vector<1x256xf32>
    %cst_7 = arith.constant 9.99999974E-6 : f32
    %14 = vector.broadcast %cst_7 : f32 to vector<1x256xf32>
    %15 = arith.addf %12, %14 : vector<1x256xf32>
    %16 = math.rsqrt %15 : vector<1x256xf32>
    %17 = arith.mulf %13, %16 : vector<1x256xf32>
    %c0_8 = arith.constant 0 : index
    %c0_9 = arith.constant 0 : index
    %18 = vector.load %arg4[%c0_8, %c0_9] : memref<1x256xf32, #tpu.memory_space<vmem>>, vector<1x256xf32>
    %19 = arith.mulf %5, %17 : vector<1x256xf32>
    %20 = arith.subf %18, %19 : vector<1x256xf32>
    %c0_10 = arith.constant 0 : index
    %c0_11 = arith.constant 0 : index
    %c0_12 = arith.constant 0 : index
    %21 = vector.load %arg5[%c0_10, %c0_11, %c0_12] : memref<1x48x256xbf16, #tpu.memory_space<vmem>>, vector<1x48x256xbf16>
    %22 = vector.shape_cast %21 : vector<1x48x256xbf16> to vector<48x256xbf16>
    %23 = arith.extf %22 : vector<48x256xbf16> to vector<48x256xf32>
    %24 = vector.broadcast %17 : vector<1x256xf32> to vector<48x256xf32>
    %25 = arith.mulf %23, %24 : vector<48x256xf32>
    %26 = vector.broadcast %20 : vector<1x256xf32> to vector<48x256xf32>
    %27 = arith.addf %25, %26 : vector<48x256xf32>
    %cst_13 = arith.constant 0.000000e+00 : f32
    %28 = vector.broadcast %cst_13 : f32 to vector<48x256xf32>
    %29 = arith.cmpf oge, %27, %28 : vector<48x256xf32>
    %cst_14 = arith.constant 0.00999999977 : f32
    %30 = vector.broadcast %cst_14 : f32 to vector<48x256xf32>
    %31 = arith.mulf %30, %27 : vector<48x256xf32>
    %32 = arith.select %29, %27, %31 : vector<48x256xi1>, vector<48x256xf32>
    %33 = tpu.iota {dimensions = array<i32: 0>} : vector<48x1xi32>
    %c48_i32 = arith.constant 48 : i32
    %34 = arith.muli %arg1, %c48_i32 : i32
    %35 = vector.broadcast %34 : i32 to vector<48x1xi32>
    %36 = arith.addi %33, %35 : vector<48x1xi32>
    %c42_i32 = arith.constant 42 : i32
    %37 = vector.broadcast %c42_i32 : i32 to vector<48x1xi32>
    %38 = arith.cmpi slt, %36, %37 : vector<48x1xi32>
    %cst_15 = arith.constant 0.000000e+00 : f32
    %39 = vector.shape_cast %38 : vector<48x1xi1> to vector<48x1xi1>
    %40 = vector.broadcast %39 : vector<48x1xi1> to vector<48x256xi1>
    %41 = vector.broadcast %cst_15 : f32 to vector<48x256xf32>
    %42 = arith.select %40, %32, %41 : vector<48x256xi1>, vector<48x256xf32>
    %c0_16 = arith.constant 0 : index
    %c0_17 = arith.constant 0 : index
    %c0_18 = arith.constant 0 : index
    %43 = vector.load %arg6[%c0_16, %c0_17, %c0_18] : memref<1x1x256xf32, #tpu.memory_space<vmem>>, vector<1x1x256xf32>
    %44 = vector.shape_cast %43 : vector<1x1x256xf32> to vector<1x256xf32>
    %cst_19 = arith.constant dense<0.000000e+00> : vector<256xf32>
    %45 = vector.multi_reduction <add>, %42, %cst_19 [0] : vector<48x256xf32> to vector<256xf32>
    %46 = vector.shape_cast %45 : vector<256xf32> to vector<1x256xf32>
    %47 = arith.addf %44, %46 : vector<1x256xf32>
    %c0_20 = arith.constant 0 : index
    %c0_21 = arith.constant 0 : index
    %c0_22 = arith.constant 0 : index
    %48 = vector.load %arg6[%c0_20, %c0_21, %c0_22] : memref<1x1x256xf32, #tpu.memory_space<vmem>>, vector<1x1x256xf32>
    %49 = vector.shape_cast %48 : vector<1x1x256xf32> to vector<1x256xf32>
    %50 = vector.shape_cast %47 : vector<1x256xf32> to vector<1x1x256xf32>
    tpu.vector_store %arg6[%c0_20, %c0_21, %c0_22], %50 {strides = array<i32>} : memref<1x1x256xf32, #tpu.memory_space<vmem>>, vector<1x1x256xf32>,
    return
  }
  func.func @transform_0(%arg0: i32, %arg1: i32) -> (i32, i32) {
    %c0_i32 = arith.constant 0 : i32
    %c0_i32_0 = arith.constant 0 : i32
    %c0_i32_1 = arith.constant 0 : i32
    return %c0_i32, %c0_i32_0 : i32, i32
  }
  func.func @transform_1(%arg0: i32, %arg1: i32) -> (i32, i32) {
    %c0_i32 = arith.constant 0 : i32
    %c0_i32_0 = arith.constant 0 : i32
    %c0_i32_1 = arith.constant 0 : i32
    return %c0_i32, %c0_i32_0 : i32, i32
  }
  func.func @transform_2(%arg0: i32, %arg1: i32) -> (i32, i32) {
    %c0_i32 = arith.constant 0 : i32
    %c0_i32_0 = arith.constant 0 : i32
    %c0_i32_1 = arith.constant 0 : i32
    return %c0_i32, %c0_i32_0 : i32, i32
  }
  func.func @transform_3(%arg0: i32, %arg1: i32) -> (i32, i32, i32) {
    %c0_i32 = arith.constant 0 : i32
    %c0_i32_0 = arith.constant 0 : i32
    return %arg0, %arg1, %c0_i32 : i32, i32, i32
  }
  func.func @transform_4(%arg0: i32, %arg1: i32) -> (i32, i32, i32) {
    %c0_i32 = arith.constant 0 : i32
    %c0_i32_0 = arith.constant 0 : i32
    %c0_i32_1 = arith.constant 0 : i32
    return %arg0, %c0_i32, %c0_i32_0 : i32, i32, i32
  }
}

</mosaic_0001>

<llo_original>
// kernel: wcnn_forward.9
$region0: #{wcnn_forward.9}
  #allocation0 [shape = 'u32[]', space=smem, size = 0x4, offset = 0x4, fixed_abs, tag = 'smem constant byte address 0x4 - core index']
  #allocation1 [shape = 'u32[144,128]{1,0:T(1,128)}', space=vmem, size = 0x12000, scoped, tag = 'internal scratch']
  %s0 = inlined_call_operand.vmem [shape: f32[2,128], index: 0, kind: input, shape index: {}]
  %s1 = inlined_call_operand.vmem [shape: f32[1,128], index: 1, kind: input, shape index: {}]
  %s2 = inlined_call_operand.vmem [shape: f32[1,128], index: 2, kind: input, shape index: {}]
  %s3 = inlined_call_operand.vmem [shape: bf16[224,128], index: 3, kind: input, shape index: {}]
  %s4 = inlined_call_operand.vmem [shape: bf16[224,128], index: 4, kind: output, shape index: {}]
  %s5 = sld [smem:[#allocation0]]
  $region26: #{wcnn_forward.9} parent=0
    _
  %s7 = ssub.s32 1, %s5
  %s8 = scalar_select 0, %s7, %s5
  // Predicated region
  $region2: #{wcnn_forward.9} parent=0 // pred_check
    _
  $region3: #{wcnn_forward.9} parent=0 // pred_check_branch
    %10 = sbr.rel (0) target = $region5
  $region4: #{wcnn_forward.9} parent=0 // pred_region
    _
  $region5: #{wcnn_forward.9} parent=0 // pred_fallthru
    _
  // Predicated region
  $region6: #{wcnn_forward.9} parent=0 // pred_check
    _
  $region7: #{wcnn_forward.9} parent=0 // pred_check_branch
    %12 = sbr.rel (0) target = $region9
  $region8: #{wcnn_forward.9} parent=0 // pred_region
    _
  $region9: #{wcnn_forward.9} parent=0 // pred_fallthru
    _
  // Predicated region
  $region10: #{wcnn_forward.9} parent=0 // pred_check
    _
  $region11: #{wcnn_forward.9} parent=0 // pred_check_branch
    %14 = sbr.rel (0) target = $region13
  $region12: #{wcnn_forward.9} parent=0 // pred_region
    _
  $region13: #{wcnn_forward.9} parent=0 // pred_fallthru
    _
  // Predicated region
  $region14: #{wcnn_forward.9} parent=0 // pred_check
    _
  $region15: #{wcnn_forward.9} parent=0 // pred_check_branch
    %16 = sbr.rel (0) target = $region17
  $region16: #{wcnn_forward.9} parent=0 // pred_region
    _
  $region17: #{wcnn_forward.9} parent=0 // pred_fallthru
    _
  %v17 = vld [vmem:[%s0] sm:$0x1]
  %v18 = vrcp.pop 194.0
  %v19 = vmul.f32 %v17, %v18
  %v20 = vld [vmem:[%s0 + $0x1] sm:$0x1]
  %v21 = vmul.f32 %v20, %v18
  %v22 = vmul.f32 %v19, %v19
  %v23 = vsub.f32 %v21, %v22
  %v24 = vmax.f32 %v23, 0.0
  %v25 = vld [vmem:[%s1] sm:$0x1]
  %v26 = vadd.f32 %v24, 1e-05
  %v27 = vrsqrt.pop %v26
  %v28 = vmul.f32 %v25, %v27
  %v29 = vld [vmem:[%s2] sm:$0x1]
  %v30 = vmul.f32 %v19, %v28
  %v31 = vsub.f32 %v29, %v30
  %v32 = vld [vmem:[%s3] sm:$0xf]
  %v33 = vld [vmem:[%s3 + $0x4] sm:$0xf]
  %v34 = vld [vmem:[%s3 + $0x8] sm:$0xf]
  %v35 = vld [vmem:[%s3 + $0xc] sm:$0xf]
  %v36 = vld [vmem:[%s3 + $0x10] sm:$0xf]
  %v37 = vld [vmem:[%s3 + $0x14] sm:$0xf]
  %v38 = vld [vmem:[%s3 + $0x18] sm:$0xf]
  %v39 = vld [vmem:[%s3 + $0x1c] sm:$0xf]
  %v40 = vld [vmem:[%s3 + $0x20] sm:$0xf]
  %v41 = vld [vmem:[%s3 + $0x24] sm:$0xf]
  %v42 = vld [vmem:[%s3 + $0x28] sm:$0xf]
  %v43 = vld [vmem:[%s3 + $0x2c] sm:$0xf]
  %v44 = vld [vmem:[%s3 + $0x30] sm:$0xf]
  %v45 = vld [vmem:[%s3 + $0x34] sm:$0xf]
  %v46 = vld [vmem:[%s3 + $0x38] sm:$0xf]
  %v47 = vld [vmem:[%s3 + $0x3c] sm:$0xf]
  %v48 = vld [vmem:[%s3 + $0x40] sm:$0xf]
  %v49 = vld [vmem:[%s3 + $0x44] sm:$0xf]
  %v50 = vld [vmem:[%s3 + $0x48] sm:$0xf]
  %v51 = vld [vmem:[%s3 + $0x4c] sm:$0xf]
  %v52 = vld [vmem:[%s3 + $0x50] sm:$0xf]
  %v53 = vld [vmem:[%s3 + $0x54] sm:$0xf]
  %v54 = vld [vmem:[%s3 + $0x58] sm:$0xf]
  %v55 = vld [vmem:[%s3 + $0x5c] sm:$0xf]
  %v56 = vld [vmem:[%s3 + $0x60] sm:$0xf]
  %v57 = vld [vmem:[%s3 + $0x64] sm:$0xf]
  %v58 = vld [vmem:[%s3 + $0x68] sm:$0xf]
  %v59 = vld [vmem:[%s3 + $0x6c] sm:$0xf]
  %v60 = vunpack.c.l.bf16 %v32
  %v61 = vunpack.c.l.bf16 %v33
  %v62 = vunpack.c.l.bf16 %v34
  %v63 = vunpack.c.l.bf16 %v35
  %v64 = vunpack.c.l.bf16 %v36
  %v65 = vunpack.c.l.bf16 %v37
  %v66 = vunpack.c.l.bf16 %v38
  %v67 = vunpack.c.l.bf16 %v39
  %v68 = vunpack.c.l.bf16 %v40
  %v69 = vunpack.c.l.bf16 %v41
  %v70 = vunpack.c.l.bf16 %v42
  %v71 = vunpack.c.l.bf16 %v43
  %v72 = vunpack.c.l.bf16 %v44
  %v73 = vunpack.c.l.bf16 %v45
  %v74 = vunpack.c.l.bf16 %v46
  %v75 = vunpack.c.l.bf16 %v47
  %v76 = vunpack.c.l.bf16 %v48
  %v77 = vunpack.c.l.bf16 %v49
  %v78 = vunpack.c.l.bf16 %v50
  %v79 = vunpack.c.l.bf16 %v51
  %v80 = vunpack.c.l.bf16 %v52
  %v81 = vunpack.c.l.bf16 %v53
  %v82 = vunpack.c.l.bf16 %v54
  %v83 = vunpack.c.l.bf16 %v55
  %v84 = vunpack.c.l.bf16 %v56
  %v85 = vunpack.c.l.bf16 %v57
  %v86 = vunpack.c.l.bf16 %v58
  %v87 = vunpack.c.l.bf16 %v59
  %v89 = vlaneseq
  %v90 = vshrl.u32 %v89, 7
  %v91 = vsub.s32 0, %v90
  %v92 = vrot.slane %v28, %v91
  %v94 = vmul.f32 %v60, %v92
  %v95 = vmul.f32 %v61, %v92
  %v96 = vmul.f32 %v62, %v92
  %v97 = vmul.f32 %v63, %v92
  %v98 = vmul.f32 %v64, %v92
  %v99 = vmul.f32 %v65, %v92
  %v100 = vmul.f32 %v66, %v92
  %v101 = vmul.f32 %v67, %v92
  %v102 = vmul.f32 %v68, %v92
  %v103 = vmul.f32 %v69, %v92
  %v104 = vmul.f32 %v70, %v92
  %v105 = vmul.f32 %v71, %v92
  %v106 = vmul.f32 %v72, %v92
  %v107 = vmul.f32 %v73, %v92
  %v108 = vmul.f32 %v74, %v92
  %v109 = vmul.f32 %v75, %v92
  %v110 = vmul.f32 %v76, %v92
  %v111 = vmul.f32 %v77, %v92
  %v112 = vmul.f32 %v78, %v92
  %v113 = vmul.f32 %v79, %v92
  %v114 = vmul.f32 %v80, %v92
  %v115 = vmul.f32 %v81, %v92
  %v116 = vmul.f32 %v82, %v92
  %v117 = vmul.f32 %v83, %v92
  %v118 = vmul.f32 %v84, %v92
  %v119 = vmul.f32 %v85, %v92
  %v120 = vmul.f32 %v86, %v92
  %v121 = vmul.f32 %v87, %v92
  %v123 = vlaneseq
  %v124 = vshrl.u32 %v123, 7
  %v125 = vsub.s32 0, %v124
  %v126 = vrot.slane %v31, %v125
  %v128 = vadd.f32 %v94, %v126
  %v129 = vadd.f32 %v95, %v126
  %v130 = vadd.f32 %v96, %v126
  %v131 = vadd.f32 %v97, %v126
  %v132 = vadd.f32 %v98, %v126
  %v133 = vadd.f32 %v99, %v126
  %v134 = vadd.f32 %v100, %v126
  %v135 = vadd.f32 %v101, %v126
  %v136 = vadd.f32 %v102, %v126
  %v137 = vadd.f32 %v103, %v126
  %v138 = vadd.f32 %v104, %v126
  %v139 = vadd.f32 %v105, %v126
  %v140 = vadd.f32 %v106, %v126
  %v141 = vadd.f32 %v107, %v126
  %v142 = vadd.f32 %v108, %v126
  %v143 = vadd.f32 %v109, %v126
  %v144 = vadd.f32 %v110, %v126
  %v145 = vadd.f32 %v111, %v126
  %v146 = vadd.f32 %v112, %v126
  %v147 = vadd.f32 %v113, %v126
  %v148 = vadd.f32 %v114, %v126
  %v149 = vadd.f32 %v115, %v126
  %v150 = vadd.f32 %v116, %v126
  %v151 = vadd.f32 %v117, %v126
  %v152 = vadd.f32 %v118, %v126
  %v153 = vadd.f32 %v119, %v126
  %v154 = vadd.f32 %v120, %v126
  %v155 = vadd.f32 %v121, %v126
  %vm156 = vcmp.ge.f32.partialorder %v128, 0.0
  %vm157 = vcmp.ge.f32.partialorder %v129, 0.0
  %vm158 = vcmp.ge.f32.partialorder %v130, 0.0
  %vm159 = vcmp.ge.f32.partialorder %v131, 0.0
  %vm160 = vcmp.ge.f32.partialorder %v132, 0.0
  %vm161 = vcmp.ge.f32.partialorder %v133, 0.0
  %vm162 = vcmp.ge.f32.partialorder %v134, 0.0
  %vm163 = vcmp.ge.f32.partialorder %v135, 0.0
  %vm164 = vcmp.ge.f32.partialorder %v136, 0.0
  %vm165 = vcmp.ge.f32.partialorder %v137, 0.0
  %vm166 = vcmp.ge.f32.partialorder %v138, 0.0
  %vm167 = vcmp.ge.f32.partialorder %v139, 0.0
  %vm168 = vcmp.ge.f32.partialorder %v140, 0.0
  %vm169 = vcmp.ge.f32.partialorder %v141, 0.0
  %vm170 = vcmp.ge.f32.partialorder %v142, 0.0
  %vm171 = vcmp.ge.f32.partialorder %v143, 0.0
  %vm172 = vcmp.ge.f32.partialorder %v144, 0.0
  %vm173 = vcmp.ge.f32.partialorder %v145, 0.0
  %vm174 = vcmp.ge.f32.partialorder %v146, 0.0
  %vm175 = vcmp.ge.f32.partialorder %v147, 0.0
  %vm176 = vcmp.ge.f32.partialorder %v148, 0.0
  %vm177 = vcmp.ge.f32.partialorder %v149, 0.0
  %vm178 = vcmp.ge.f32.partialorder %v150, 0.0
  %vm179 = vcmp.ge.f32.partialorder %v151, 0.0
  %vm180 = vcmp.ge.f32.partialorder %v152, 0.0
  %vm181 = vcmp.ge.f32.partialorder %v153, 0.0
  %vm182 = vcmp.ge.f32.partialorder %v154, 0.0
  %vm183 = vcmp.ge.f32.partialorder %v155, 0.0
  %v184 = vmul.f32 %v128, 0.01
  %v185 = vmul.f32 %v129, 0.01
  %v186 = vmul.f32 %v130, 0.01
  %v187 = vmul.f32 %v131, 0.01
  %v188 = vmul.f32 %v132, 0.01
  %v189 = vmul.f32 %v133, 0.01
  %v190 = vmul.f32 %v134, 0.01
  %v191 = vmul.f32 %v135, 0.01
  %v192 = vmul.f32 %v136, 0.01
  %v193 = vmul.f32 %v137, 0.01
  %v194 = vmul.f32 %v138, 0.01
  %v195 = vmul.f32 %v139, 0.01
  %v196 = vmul.f32 %v140, 0.01
  %v197 = vmul.f32 %v141, 0.01
  %v198 = vmul.f32 %v142, 0.01
  %v199 = vmul.f32 %v143, 0.01
  %v200 = vmul.f32 %v144, 0.01
  %v201 = vmul.f32 %v145, 0.01
  %v202 = vmul.f32 %v146, 0.01
  %v203 = vmul.f32 %v147, 0.01
  %v204 = vmul.f32 %v148, 0.01
  %v205 = vmul.f32 %v149, 0.01
  %v206 = vmul.f32 %v150, 0.01
  %v207 = vmul.f32 %v151, 0.01
  %v208 = vmul.f32 %v152, 0.01
  %v209 = vmul.f32 %v153, 0.01
  %v210 = vmul.f32 %v154, 0.01
  %v211 = vmul.f32 %v155, 0.01
  %v212 = vsel %vm156, %v128, %v184
  %v213 = vsel %vm157, %v129, %v185
  %v214 = vsel %vm158, %v130, %v186
  %v215 = vsel %vm159, %v131, %v187
  %v216 = vsel %vm160, %v132, %v188
  %v217 = vsel %vm161, %v133, %v189
  %v218 = vsel %vm162, %v134, %v190
  %v219 = vsel %vm163, %v135, %v191
  %v220 = vsel %vm164, %v136, %v192
  %v221 = vsel %vm165, %v137, %v193
  %v222 = vsel %vm166, %v138, %v194
  %v223 = vsel %vm167, %v139, %v195
  %v224 = vsel %vm168, %v140, %v196
  %v225 = vsel %vm169, %v141, %v197
  %v226 = vsel %vm170, %v142, %v198
  %v227 = vsel %vm171, %v143, %v199
  %v228 = vsel %vm172, %v144, %v200
  %v229 = vsel %vm173, %v145, %v201
  %v230 = vsel %vm174, %v146, %v202
  %v231 = vsel %vm175, %v147, %v203
  %v232 = vsel %vm176, %v148, %v204
  %v233 = vsel %vm177, %v149, %v205
  %v234 = vsel %vm178, %v150, %v206
  %v235 = vsel %vm179, %v151, %v207
  %v236 = vsel %vm180, %v152, %v208
  %v237 = vsel %vm181, %v153, %v209
  %v238 = vsel %vm182, %v154, %v210
  %v239 = vsel %vm183, %v155, %v211
  %v240 = vpack.c.bf16 %v213, %v212
  %v241 = vpack.c.bf16 %v215, %v214
  %v242 = vpack.c.bf16 %v217, %v216
  %v243 = vpack.c.bf16 %v219, %v218
  %v244 = vpack.c.bf16 %v221, %v220
  %v245 = vpack.c.bf16 %v223, %v222
  %v246 = vpack.c.bf16 %v225, %v224
  %v247 = vpack.c.bf16 %v227, %v226
  %v248 = vpack.c.bf16 %v229, %v228
  %v249 = vpack.c.bf16 %v231, %v230
  %v250 = vpack.c.bf16 %v233, %v232
  %v251 = vpack.c.bf16 %v235, %v234
  %v252 = vpack.c.bf16 %v237, %v236
  %v253 = vpack.c.bf16 %v239, %v238
  %v268 = vunpack.c.l.b16 %v240
  %v269 = vunpack.c.h.b16 %v240
  %v270 = vunpack.c.l.b16 %v241
  %v271 = vunpack.c.h.b16 %v241
  %v272 = vunpack.c.l.b16 %v242
  %v273 = vunpack.c.h.b16 %v242
  %v274 = vunpack.c.l.b16 %v243
  %v275 = vunpack.c.h.b16 %v243
  %v276 = vunpack.c.l.b16 %v244
  %v277 = vunpack.c.h.b16 %v244
  %v278 = vunpack.c.l.b16 %v245
  %v279 = vunpack.c.h.b16 %v245
  %v280 = vunpack.c.l.b16 %v246
  %v281 = vunpack.c.h.b16 %v246
  %v282 = vunpack.c.l.b16 %v247
  %v283 = vunpack.c.h.b16 %v247
  %v284 = vunpack.c.l.b16 %v248
  %v285 = vunpack.c.h.b16 %v248
  %v286 = vunpack.c.l.b16 %v249
  %v287 = vunpack.c.h.b16 %v249
  %v288 = vunpack.c.l.b16 %v250
  %v289 = vunpack.c.h.b16 %v250
  %v290 = vunpack.c.l.b16 %v251
  %v291 = vunpack.c.h.b16 %v251
  %v292 = vunpack.c.l.b16 %v252
  %v293 = vunpack.c.h.b16 %v252
  %v294 = vunpack.c.l.b16 %v253
  %v295 = vunpack.c.h.b16 %v253
  %v296 = vpack.c.b16 %v268, %v268
  %v297 = vpack.c.b16 %v269, %v269
  %v298 = vpack.c.b16 %v270, %v270
  %v299 = vpack.c.b16 %v271, %v271
  %v300 = vpack.c.b16 %v272, %v272
  %v301 = vpack.c.b16 %v273, %v273
  %v302 = vpack.c.b16 %v274, %v274
  %v303 = vpack.c.b16 %v275, %v275
  %v304 = vpack.c.b16 %v276, %v276
  %v305 = vpack.c.b16 %v277, %v277
  %v306 = vpack.c.b16 %v278, %v278
  %v307 = vpack.c.b16 %v279, %v279
  %v308 = vpack.c.b16 %v280, %v280
  %v309 = vpack.c.b16 %v281, %v281
  %v310 = vpack.c.b16 %v282, %v282
  %v311 = vpack.c.b16 %v283, %v283
  %v312 = vpack.c.b16 %v284, %v284
  %v313 = vpack.c.b16 %v285, %v285
  %v314 = vpack.c.b16 %v286, %v286
  %v315 = vpack.c.b16 %v287, %v287
  %v316 = vpack.c.b16 %v288, %v288
  %v317 = vpack.c.b16 %v289, %v289
  %v318 = vpack.c.b16 %v290, %v290
  %v319 = vpack.c.b16 %v291, %v291
  %v320 = vpack.c.b16 %v292, %v292
  %v321 = vpack.c.b16 %v293, %v293
  %v322 = vpack.c.b16 %v294, %v294
  %v323 = vpack.c.b16 %v295, %v295
  %352 = vst [vmem:[%s4] sm:$0xf] %v296
  %353 = vst [vmem:[%s4 + $0x4] sm:$0xf] %v297
  %354 = vst [vmem:[%s4 + $0x8] sm:$0xf] %v298
  %355 = vst [vmem:[%s4 + $0xc] sm:$0xf] %v299
  %356 = vst [vmem:[%s4 + $0x10] sm:$0xf] %v300
  %357 = vst [vmem:[%s4 + $0x14] sm:$0xf] %v301
  %358 = vst [vmem:[%s4 + $0x18] sm:$0xf] %v302
  %359 = vst [vmem:[%s4 + $0x1c] sm:$0xf] %v303
  %360 = vst [vmem:[%s4 + $0x20] sm:$0xf] %v304
  %361 = vst [vmem:[%s4 + $0x24] sm:$0xf] %v305
  %362 = vst [vmem:[%s4 + $0x28] sm:$0xf] %v306
  %363 = vst [vmem:[%s4 + $0x2c] sm:$0xf] %v307
  %364 = vst [vmem:[%s4 + $0x30] sm:$0xf] %v308
  %365 = vst [vmem:[%s4 + $0x34] sm:$0xf] %v309
  %366 = vst [vmem:[%s4 + $0x38] sm:$0xf] %v310
  %367 = vst [vmem:[%s4 + $0x3c] sm:$0xf] %v311
  %368 = vst [vmem:[%s4 + $0x40] sm:$0xf] %v312
  %369 = vst [vmem:[%s4 + $0x44] sm:$0xf] %v313
  %370 = vst [vmem:[%s4 + $0x48] sm:$0xf] %v314
  %371 = vst [vmem:[%s4 + $0x4c] sm:$0xf] %v315
  %372 = vst [vmem:[%s4 + $0x50] sm:$0xf] %v316
  %373 = vst [vmem:[%s4 + $0x54] sm:$0xf] %v317
  %374 = vst [vmem:[%s4 + $0x58] sm:$0xf] %v318
  %375 = vst [vmem:[%s4 + $0x5c] sm:$0xf] %v319
  %376 = vst [vmem:[%s4 + $0x60] sm:$0xf] %v320
  %377 = vst [vmem:[%s4 + $0x64] sm:$0xf] %v321
  %378 = vst [vmem:[%s4 + $0x68] sm:$0xf] %v322
  %379 = vst [vmem:[%s4 + $0x6c] sm:$0xf] %v323
  // Predicated region
  $region18: #{wcnn_forward.9} parent=0 // pred_check
    _
  $region19: #{wcnn_forward.9} parent=0 // pred_check_branch
    %381 = sbr.rel (0) target = $region21
  $region20: #{wcnn_forward.9} parent=0 // pred_region
    _
  $region21: #{wcnn_forward.9} parent=0 // pred_fallthru
    _
  // Predicated region
  $region22: #{wcnn_forward.9} parent=0 // pred_check
    _
  $region23: #{wcnn_forward.9} parent=0 // pred_check_branch
    %383 = sbr.rel (0) target = $region25
  $region24: #{wcnn_forward.9} parent=0 // pred_region
    _
  $region25: #{wcnn_forward.9} parent=0 // pred_fallthru
    _

// kernel: wcnn_forward.8
$region0: #{wcnn_forward.8}
  #allocation0 [shape = 'u32[]', space=smem, size = 0x4, offset = 0x4, fixed_abs, tag = 'smem constant byte address 0x4 - core index']
  #allocation1 [shape = 'u32[144,128]{1,0:T(1,128)}', space=vmem, size = 0x12000, scoped, tag = 'internal scratch']
  %s0 = inlined_call_operand.vmem [shape: bf16[224,128], index: 0, kind: input, shape index: {}]
  %s1 = inlined_call_operand.vmem [shape: bf16[128,128], index: 1, kind: input, shape index: {}]
  %s2 = inlined_call_operand.vmem [shape: bf16[224,128], index: 2, kind: output, shape index: {0}]
  %s3 = inlined_call_operand.vmem [shape: f32[2,128], index: 3, kind: output, shape index: {1}]
  %4 = xla_tuple %s2, %s3
  %s5 = sld [smem:[#allocation0]]
  $region30: #{wcnn_forward.8} parent=0
    _
  %s7 = ssub.s32 1, %s5
  %s8 = scalar_select 0, %s7, %s5
  // Predicated region
  $region2: #{wcnn_forward.8} parent=0 // pred_check
    _
  $region3: #{wcnn_forward.8} parent=0 // pred_check_branch
    %10 = sbr.rel (0) target = $region5
  $region4: #{wcnn_forward.8} parent=0 // pred_region
    _
  $region5: #{wcnn_forward.8} parent=0 // pred_fallthru
    _
  // Predicated region
  $region6: #{wcnn_forward.8} parent=0 // pred_check
    _
  $region7: #{wcnn_forward.8} parent=0 // pred_check_branch
    %12 = sbr.rel (0) target = $region9
  $region8: #{wcnn_forward.8} parent=0 // pred_region
    _
  $region9: #{wcnn_forward.8} parent=0 // pred_fallthru
    _
  %p14 = scmp.eq.s32.totalorder 0, 0
  // Predicated region
  $region10: #{wcnn_forward.8} parent=0 // pred_check
    %p15 = pneg %p14
  $region11: #{wcnn_forward.8} parent=0 // pred_check_branch
    %17 = sbr.rel (%p15) target = $region13
  $region12: #{wcnn_forward.8} parent=0 // pred_region
    %18 = vst [vmem:[%s3] sm:$0x3] 0.0
  $region13: #{wcnn_forward.8} parent=0 // pred_fallthru
    _
  %v19 = vld [vmem:[%s0] sm:$0xf]
  %v20 = vld [vmem:[%s0 + $0x4] sm:$0xf]
  %v21 = vld [vmem:[%s0 + $0x8] sm:$0xf]
  %v22 = vld [vmem:[%s0 + $0xc] sm:$0xf]
  %v23 = vld [vmem:[%s0 + $0x10] sm:$0xf]
  %v24 = vld [vmem:[%s0 + $0x14] sm:$0xf]
  %v25 = vld [vmem:[%s0 + $0x18] sm:$0xf]
  %v26 = vld [vmem:[%s0 + $0x1c] sm:$0xf]
  %v27 = vld [vmem:[%s0 + $0x20] sm:$0xf]
  %v28 = vld [vmem:[%s0 + $0x24] sm:$0xf]
  %v29 = vld [vmem:[%s0 + $0x28] sm:$0xf]
  %v30 = vld [vmem:[%s0 + $0x2c] sm:$0xf]
  %v31 = vld [vmem:[%s0 + $0x30] sm:$0xf]
  %v32 = vld [vmem:[%s0 + $0x34] sm:$0xf]
  %v33 = vld [vmem:[%s0 + $0x38] sm:$0xf]
  %v34 = vld [vmem:[%s0 + $0x3c] sm:$0xf]
  %v35 = vld [vmem:[%s0 + $0x40] sm:$0xf]
  %v36 = vld [vmem:[%s0 + $0x44] sm:$0xf]
  %v37 = vld [vmem:[%s0 + $0x48] sm:$0xf]
  %v38 = vld [vmem:[%s0 + $0x4c] sm:$0xf]
  %v39 = vld [vmem:[%s0 + $0x50] sm:$0xf]
  %v40 = vld [vmem:[%s0 + $0x54] sm:$0xf]
  %v41 = vld [vmem:[%s0 + $0x58] sm:$0xf]
  %v42 = vld [vmem:[%s0 + $0x5c] sm:$0xf]
  %v43 = vld [vmem:[%s0 + $0x60] sm:$0xf]
  %v44 = vld [vmem:[%s0 + $0x64] sm:$0xf]
  %v45 = vld [vmem:[%s0 + $0x68] sm:$0xf]
  %v46 = vld [vmem:[%s0 + $0x6c] sm:$0xf]
  %v47 = vld [vmem:[%s1] sm:$0xf]
  %v48 = vld [vmem:[%s1 + $0x4] sm:$0xf]
  %v49 = vld [vmem:[%s1 + $0x8] sm:$0xf]
  %v50 = vld [vmem:[%s1 + $0xc] sm:$0xf]
  %v51 = vld [vmem:[%s1 + $0x10] sm:$0xf]
  %v52 = vld [vmem:[%s1 + $0x14] sm:$0xf]
  %v53 = vld [vmem:[%s1 + $0x18] sm:$0xf]
  %v54 = vld [vmem:[%s1 + $0x1c] sm:$0xf]
  %v55 = vld [vmem:[%s1 + $0x20] sm:$0xf]
  %v56 = vld [vmem:[%s1 + $0x24] sm:$0xf]
  %v57 = vld [vmem:[%s1 + $0x28] sm:$0xf]
  %v58 = vld [vmem:[%s1 + $0x2c] sm:$0xf]
  %v59 = vld [vmem:[%s1 + $0x30] sm:$0xf]
  %v60 = vld [vmem:[%s1 + $0x34] sm:$0xf]
  %v61 = vld [vmem:[%s1 + $0x38] sm:$0xf]
  %v62 = vld [vmem:[%s1 + $0x3c] sm:$0xf]
  %v91 = vunpack.c.l.b16 %v19
  %v92 = vunpack.c.l.b16 %v20
  %v93 = vunpack.c.l.b16 %v21
  %v94 = vunpack.c.l.b16 %v22
  %v95 = vunpack.c.l.b16 %v23
  %v96 = vunpack.c.l.b16 %v24
  %v97 = vunpack.c.l.b16 %v25
  %v98 = vunpack.c.l.b16 %v26
  %v99 = vunpack.c.l.b16 %v27
  %v100 = vunpack.c.l.b16 %v28
  %v101 = vunpack.c.l.b16 %v29
  %v102 = vunpack.c.l.b16 %v30
  %v103 = vunpack.c.l.b16 %v31
  %v104 = vunpack.c.l.b16 %v32
  %v105 = vunpack.c.l.b16 %v33
  %v106 = vunpack.c.l.b16 %v34
  %v107 = vunpack.c.l.b16 %v35
  %v108 = vunpack.c.l.b16 %v36
  %v109 = vunpack.c.l.b16 %v37
  %v110 = vunpack.c.l.b16 %v38
  %v111 = vunpack.c.l.b16 %v39
  %v112 = vunpack.c.l.b16 %v40
  %v113 = vunpack.c.l.b16 %v41
  %v114 = vunpack.c.l.b16 %v42
  %v115 = vunpack.c.l.b16 %v43
  %v116 = vunpack.c.l.b16 %v44
  %v117 = vunpack.c.l.b16 %v45
  %v118 = vunpack.c.l.b16 %v46
  %v119 = vpack.c.b16 %v92, %v91
  %v120 = vpack.c.b16 %v94, %v93
  %v121 = vpack.c.b16 %v96, %v95
  %v122 = vpack.c.b16 %v98, %v97
  %v123 = vpack.c.b16 %v100, %v99
  %v124 = vpack.c.b16 %v102, %v101
  %v125 = vpack.c.b16 %v104, %v103
  %v126 = vpack.c.b16 %v106, %v105
  %v127 = vpack.c.b16 %v108, %v107
  %v128 = vpack.c.b16 %v110, %v109
  %v129 = vpack.c.b16 %v112, %v111
  %v130 = vpack.c.b16 %v114, %v113
  %v131 = vpack.c.b16 %v116, %v115
  %v132 = vpack.c.b16 %v118, %v117
  %v163 = vunpack.c.l.b16 %v47
  %v164 = vunpack.c.l.b16 %v48
  %v165 = vunpack.c.l.b16 %v49
  %v166 = vunpack.c.l.b16 %v50
  %v167 = vunpack.c.l.b16 %v51
  %v168 = vunpack.c.l.b16 %v52
  %v169 = vunpack.c.l.b16 %v53
  %v170 = vunpack.c.l.b16 %v54
  %v171 = vunpack.c.l.b16 %v55
  %v172 = vunpack.c.l.b16 %v56
  %v173 = vunpack.c.l.b16 %v57
  %v174 = vunpack.c.l.b16 %v58
  %v175 = vunpack.c.l.b16 %v59
  %v176 = vunpack.c.l.b16 %v60
  %v177 = vunpack.c.l.b16 %v61
  %v178 = vunpack.c.l.b16 %v62
  %v179 = vpack.c.b16 %v164, %v163
  %v180 = vpack.c.b16 %v166, %v165
  %v181 = vpack.c.b16 %v168, %v167
  %v182 = vpack.c.b16 %v170, %v169
  %v183 = vpack.c.b16 %v172, %v171
  %v184 = vpack.c.b16 %v174, %v173
  %v185 = vpack.c.b16 %v176, %v175
  %v186 = vpack.c.b16 %v178, %v177
  %195 = vmatprep.subr.bf16.mxu0 0
  %196 = vmatpush1.bf16.msra.mxu0 %v186
  %197 = vmatprep.subr.bf16.mxu0 0
  %198 = vmatpush1.bf16.msra.mxu0 %v185
  %199 = vmatprep.subr.bf16.mxu0 0
  %200 = vmatpush1.bf16.msra.mxu0 %v184
  %201 = vmatprep.subr.bf16.mxu0 0
  %202 = vmatpush1.bf16.msra.mxu0 %v183
  %203 = vmatprep.subr.bf16.mxu0 0
  %204 = vmatpush1.bf16.msra.mxu0 %v182
  %205 = vmatprep.subr.bf16.mxu0 0
  %206 = vmatpush1.bf16.msra.mxu0 %v181
  %207 = vmatprep.subr.bf16.mxu0 0
  %208 = vmatpush1.bf16.msra.mxu0 %v180
  %209 = vmatprep.subr.bf16.mxu0 0
  %210 = vmatpush1.bf16.msra.mxu0 %v179
  %211 = vmatprep.subr.bf16.mxu0 0
  %212 = vmatpush2.bf16.msra.mxu0 0
  %213 = vmatprep.subr.bf16.mxu0 0
  %214 = vmatpush2.bf16.msra.mxu0 0
  %215 = vmatprep.subr.bf16.mxu0 0
  %216 = vmatpush2.bf16.msra.mxu0 0
  %217 = vmatprep.subr.bf16.mxu0 0
  %218 = vmatpush2.bf16.msra.mxu0 0
  %219 = vmatprep.subr.bf16.mxu0 0
  %220 = vmatpush2.bf16.msra.mxu0 0
  %221 = vmatprep.subr.bf16.mxu0 0
  %222 = vmatpush2.bf16.msra.mxu0 0
  %223 = vmatprep.subr.bf16.mxu0 0
  %224 = vmatpush2.bf16.msra.mxu0 0
  %225 = vmatprep.subr.bf16.mxu0 0
  %226 = vmatpush2.bf16.msra.mxu0 0
  %227 = vmatprep.mubr.bf16.mxu0 0
  %228 = vmatmul.mubr.bf16.gmra.mxu0 %v119
  %v229 = vpop.f32.mrf.mxu0
  %v230 = vadd.f32 0.0, %v229
  %v231 = vpop.f32.mrf.mxu0
  %v232 = vpop.f32.mrf.mxu0
  %v233 = vadd.f32 0.0, %v232
  %v234 = vpop.f32.mrf.mxu0
  %235 = vmatprep.mubr.bf16.mxu0 0
  %236 = vmatmul.mubr.bf16.gmra.mxu0 %v120
  %v237 = vpop.f32.mrf.mxu0
  %v238 = vadd.f32 0.0, %v237
  %v239 = vpop.f32.mrf.mxu0
  %v240 = vpop.f32.mrf.mxu0
  %v241 = vadd.f32 0.0, %v240
  %v242 = vpop.f32.mrf.mxu0
  %243 = vmatprep.mubr.bf16.mxu0 0
  %244 = vmatmul.mubr.bf16.gmra.mxu0 %v121
  %v245 = vpop.f32.mrf.mxu0
  %v246 = vadd.f32 0.0, %v245
  %v247 = vpop.f32.mrf.mxu0
  %v248 = vpop.f32.mrf.mxu0
  %v249 = vadd.f32 0.0, %v248
  %v250 = vpop.f32.mrf.mxu0
  %251 = vmatprep.mubr.bf16.mxu0 0
  %252 = vmatmul.mubr.bf16.gmra.mxu0 %v122
  %v253 = vpop.f32.mrf.mxu0
  %v254 = vadd.f32 0.0, %v253
  %v255 = vpop.f32.mrf.mxu0
  %v256 = vpop.f32.mrf.mxu0
  %v257 = vadd.f32 0.0, %v256
  %v258 = vpop.f32.mrf.mxu0
  %259 = vmatprep.mubr.bf16.mxu0 0
  %260 = vmatmul.mubr.bf16.gmra.mxu0 %v123
  %v261 = vpop.f32.mrf.mxu0
  %v262 = vadd.f32 0.0, %v261
  %v263 = vpop.f32.mrf.mxu0
  %v264 = vpop.f32.mrf.mxu0
  %v265 = vadd.f32 0.0, %v264
  %v266 = vpop.f32.mrf.mxu0
  %267 = vmatprep.mubr.bf16.mxu0 0
  %268 = vmatmul.mubr.bf16.gmra.mxu0 %v124
  %v269 = vpop.f32.mrf.mxu0
  %v270 = vadd.f32 0.0, %v269
  %v271 = vpop.f32.mrf.mxu0
  %v272 = vpop.f32.mrf.mxu0
  %v273 = vadd.f32 0.0, %v272
  %v274 = vpop.f32.mrf.mxu0
  %275 = vmatprep.mubr.bf16.mxu0 0
  %276 = vmatmul.mubr.bf16.gmra.mxu0 %v125
  %v277 = vpop.f32.mrf.mxu0
  %v278 = vadd.f32 0.0, %v277
  %v279 = vpop.f32.mrf.mxu0
  %v280 = vpop.f32.mrf.mxu0
  %v281 = vadd.f32 0.0, %v280
  %v282 = vpop.f32.mrf.mxu0
  %283 = vmatprep.mubr.bf16.mxu0 0
  %284 = vmatmul.mubr.bf16.gmra.mxu0 %v126
  %v285 = vpop.f32.mrf.mxu0
  %v286 = vadd.f32 0.0, %v285
  %v287 = vpop.f32.mrf.mxu0
  %v288 = vpop.f32.mrf.mxu0
  %v289 = vadd.f32 0.0, %v288
  %v290 = vpop.f32.mrf.mxu0
  %291 = vmatprep.mubr.bf16.mxu0 0
  %292 = vmatmul.mubr.bf16.gmra.mxu0 %v127
  %v293 = vpop.f32.mrf.mxu0
  %v294 = vadd.f32 0.0, %v293
  %v295 = vpop.f32.mrf.mxu0
  %v296 = vpop.f32.mrf.mxu0
  %v297 = vadd.f32 0.0, %v296
  %v298 = vpop.f32.mrf.mxu0
  %299 = vmatprep.mubr.bf16.mxu0 0
  %300 = vmatmul.mubr.bf16.gmra.mxu0 %v128
  %v301 = vpop.f32.mrf.mxu0
  %v302 = vadd.f32 0.0, %v301
  %v303 = vpop.f32.mrf.mxu0
  %v304 = vpop.f32.mrf.mxu0
  %v305 = vadd.f32 0.0, %v304
  %v306 = vpop.f32.mrf.mxu0
  %307 = vmatprep.mubr.bf16.mxu0 0
  %308 = vmatmul.mubr.bf16.gmra.mxu0 %v129
  %v309 = vpop.f32.mrf.mxu0
  %v310 = vadd.f32 0.0, %v309
  %v311 = vpop.f32.mrf.mxu0
  %v312 = vpop.f32.mrf.mxu0
  %v313 = vadd.f32 0.0, %v312
  %v314 = vpop.f32.mrf.mxu0
  %315 = vmatprep.mubr.bf16.mxu0 0
  %316 = vmatmul.mubr.bf16.gmra.mxu0 %v130
  %v317 = vpop.f32.mrf.mxu0
  %v318 = vadd.f32 0.0, %v317
  %v319 = vpop.f32.mrf.mxu0
  %v320 = vpop.f32.mrf.mxu0
  %v321 = vadd.f32 0.0, %v320
  %v322 = vpop.f32.mrf.mxu0
  %323 = vmatprep.mubr.bf16.mxu0 0
  %324 = vmatmul.mubr.bf16.gmra.mxu0 %v131
  %v325 = vpop.f32.mrf.mxu0
  %v326 = vadd.f32 0.0, %v325
  %v327 = vpop.f32.mrf.mxu0
  %v328 = vpop.f32.mrf.mxu0
  %v329 = vadd.f32 0.0, %v328
  %v330 = vpop.f32.mrf.mxu0
  %331 = vmatprep.mubr.bf16.mxu0 0
  %332 = vmatmul.mubr.bf16.gmra.mxu0 %v132
  %v333 = vpop.f32.mrf.mxu0
  %v334 = vadd.f32 0.0, %v333
  %v335 = vpop.f32.mrf.mxu0
  %v336 = vpop.f32.mrf.mxu0
  %v337 = vadd.f32 0.0, %v336
  %v338 = vpop.f32.mrf.mxu0
  %339 = vdwg.mxu0
  %v340 = vld [vmem:[%s3] sm:$0x3]
  %v341 = vadd.f32 %v230, %v233
  %v342 = vadd.f32 %v341, %v238
  %v343 = vadd.f32 %v342, %v241
  %v344 = vadd.f32 %v343, %v246
  %v345 = vadd.f32 %v344, %v249
  %v346 = vadd.f32 %v345, %v254
  %v347 = vadd.f32 %v346, %v257
  %v348 = vadd.f32 %v347, %v262
  %v349 = vadd.f32 %v348, %v265
  %v350 = vadd.f32 %v349, %v270
  %v351 = vadd.f32 %v350, %v273
  %v352 = vadd.f32 %v351, %v278
  %v353 = vadd.f32 %v352, %v281
  %v354 = vadd.f32 %v353, %v286
  %v355 = vadd.f32 %v354, %v289
  %v356 = vadd.f32 %v355, %v294
  %v357 = vadd.f32 %v356, %v297
  %v358 = vadd.f32 %v357, %v302
  %v359 = vadd.f32 %v358, %v305
  %v360 = vadd.f32 %v359, %v310
  %v361 = vadd.f32 %v360, %v313
  %v362 = vadd.f32 %v361, %v318
  %v363 = vadd.f32 %v362, %v321
  %v364 = vadd.f32 %v363, %v326
  %v365 = vadd.f32 %v364, %v329
  %v366 = vadd.f32 %v365, %v334
  %v367 = vadd.f32 %v366, %v337
  %v368 = vrot.slane %v367, 4
  %v369 = vadd.f32 %v367, %v368
  %v370 = vrot.slane %v369, 2
  %v371 = vadd.f32 %v369, %v370
  %v372 = vrot.slane %v371, 1
  %v373 = vadd.f32 %v371, %v372
  %v374 = vmul.f32 %v230, %v230
  %v375 = vmul.f32 %v233, %v233
  %v376 = vmul.f32 %v238, %v238
  %v377 = vmul.f32 %v241, %v241
  %v378 = vmul.f32 %v246, %v246
  %v379 = vmul.f32 %v249, %v249
  %v380 = vmul.f32 %v254, %v254
  %v381 = vmul.f32 %v257, %v257
  %v382 = vmul.f32 %v262, %v262
  %v383 = vmul.f32 %v265, %v265
  %v384 = vmul.f32 %v270, %v270
  %v385 = vmul.f32 %v273, %v273
  %v386 = vmul.f32 %v278, %v278
  %v387 = vmul.f32 %v281, %v281
  %v388 = vmul.f32 %v286, %v286
  %v389 = vmul.f32 %v289, %v289
  %v390 = vmul.f32 %v294, %v294
  %v391 = vmul.f32 %v297, %v297
  %v392 = vmul.f32 %v302, %v302
  %v393 = vmul.f32 %v305, %v305
  %v394 = vmul.f32 %v310, %v310
  %v395 = vmul.f32 %v313, %v313
  %v396 = vmul.f32 %v318, %v318
  %v397 = vmul.f32 %v321, %v321
  %v398 = vmul.f32 %v326, %v326
  %v399 = vmul.f32 %v329, %v329
  %v400 = vmul.f32 %v334, %v334
  %v401 = vmul.f32 %v337, %v337
  %v402 = vadd.f32 %v374, %v375
  %v403 = vadd.f32 %v402, %v376
  %v404 = vadd.f32 %v403, %v377
  %v405 = vadd.f32 %v404, %v378
  %v406 = vadd.f32 %v405, %v379
  %v407 = vadd.f32 %v406, %v380
  %v408 = vadd.f32 %v407, %v381
  %v409 = vadd.f32 %v408, %v382
  %v410 = vadd.f32 %v409, %v383
  %v411 = vadd.f32 %v410, %v384
  %v412 = vadd.f32 %v411, %v385
  %v413 = vadd.f32 %v412, %v386
  %v414 = vadd.f32 %v413, %v387
  %v415 = vadd.f32 %v414, %v388
  %v416 = vadd.f32 %v415, %v389
  %v417 = vadd.f32 %v416, %v390
  %v418 = vadd.f32 %v417, %v391
  %v419 = vadd.f32 %v418, %v392
  %v420 = vadd.f32 %v419, %v393
  %v421 = vadd.f32 %v420, %v394
  %v422 = vadd.f32 %v421, %v395
  %v423 = vadd.f32 %v422, %v396
  %v424 = vadd.f32 %v423, %v397
  %v425 = vadd.f32 %v424, %v398
  %v426 = vadd.f32 %v425, %v399
  %v427 = vadd.f32 %v426, %v400
  %v428 = vadd.f32 %v427, %v401
  %v429 = vrot.slane %v428, 4
  %v430 = vadd.f32 %v428, %v429
  %v431 = vrot.slane %v430, 2
  %v432 = vadd.f32 %v430, %v431
  %v433 = vrot.slane %v432, 1
  %v434 = vadd.f32 %v432, %v433
  %vm435 = vcmask 1040384
  %v436 = vsel %vm435, %v373, %v434
  %v437 = vadd.f32 %v340, %v436
  %438 = vst [vmem:[%s3] sm:$0x3] %v437
  %v439 = vpack.c.bf16 %v233, %v230
  %v440 = vpack.c.bf16 %v241, %v238
  %v441 = vpack.c.bf16 %v249, %v246
  %v442 = vpack.c.bf16 %v257, %v254
  %v443 = vpack.c.bf16 %v265, %v262
  %v444 = vpack.c.bf16 %v273, %v270
  %v445 = vpack.c.bf16 %v281, %v278
  %v446 = vpack.c.bf16 %v289, %v286
  %v447 = vpack.c.bf16 %v297, %v294
  %v448 = vpack.c.bf16 %v305, %v302
  %v449 = vpack.c.bf16 %v313, %v310
  %v450 = vpack.c.bf16 %v321, %v318
  %v451 = vpack.c.bf16 %v329, %v326
  %v452 = vpack.c.bf16 %v337, %v334
  %v467 = vunpack.c.l.b16 %v439
  %v468 = vunpack.c.h.b16 %v439
  %v469 = vunpack.c.l.b16 %v440
  %v470 = vunpack.c.h.b16 %v440
  %v471 = vunpack.c.l.b16 %v441
  %v472 = vunpack.c.h.b16 %v441
  %v473 = vunpack.c.l.b16 %v442
  %v474 = vunpack.c.h.b16 %v442
  %v475 = vunpack.c.l.b16 %v443
  %v476 = vunpack.c.h.b16 %v443
  %v477 = vunpack.c.l.b16 %v444
  %v478 = vunpack.c.h.b16 %v444
  %v479 = vunpack.c.l.b16 %v445
  %v480 = vunpack.c.h.b16 %v445
  %v481 = vunpack.c.l.b16 %v446
  %v482 = vunpack.c.h.b16 %v446
  %v483 = vunpack.c.l.b16 %v447
  %v484 = vunpack.c.h.b16 %v447
  %v485 = vunpack.c.l.b16 %v448
  %v486 = vunpack.c.h.b16 %v448
  %v487 = vunpack.c.l.b16 %v449
  %v488 = vunpack.c.h.b16 %v449
  %v489 = vunpack.c.l.b16 %v450
  %v490 = vunpack.c.h.b16 %v450
  %v491 = vunpack.c.l.b16 %v451
  %v492 = vunpack.c.h.b16 %v451
  %v493 = vunpack.c.l.b16 %v452
  %v494 = vunpack.c.h.b16 %v452
  %v495 = vpack.c.b16 %v467, %v467
  %v496 = vpack.c.b16 %v468, %v468
  %v497 = vpack.c.b16 %v469, %v469
  %v498 = vpack.c.b16 %v470, %v470
  %v499 = vpack.c.b16 %v471, %v471
  %v500 = vpack.c.b16 %v472, %v472
  %v501 = vpack.c.b16 %v473, %v473
  %v502 = vpack.c.b16 %v474, %v474
  %v503 = vpack.c.b16 %v475, %v475
  %v504 = vpack.c.b16 %v476, %v476
  %v505 = vpack.c.b16 %v477, %v477
  %v506 = vpack.c.b16 %v478, %v478
  %v507 = vpack.c.b16 %v479, %v479
  %v508 = vpack.c.b16 %v480, %v480
  %v509 = vpack.c.b16 %v481, %v481
  %v510 = vpack.c.b16 %v482, %v482
  %v511 = vpack.c.b16 %v483, %v483
  %v512 = vpack.c.b16 %v484, %v484
  %v513 = vpack.c.b16 %v485, %v485
  %v514 = vpack.c.b16 %v486, %v486
  %v515 = vpack.c.b16 %v487, %v487
  %v516 = vpack.c.b16 %v488, %v488
  %v517 = vpack.c.b16 %v489, %v489
  %v518 = vpack.c.b16 %v490, %v490
  %v519 = vpack.c.b16 %v491, %v491
  %v520 = vpack.c.b16 %v492, %v492
  %v521 = vpack.c.b16 %v493, %v493
  %v522 = vpack.c.b16 %v494, %v494
  %551 = vst [vmem:[%s2] sm:$0xf] %v495
  %552 = vst [vmem:[%s2 + $0x4] sm:$0xf] %v496
  %553 = vst [vmem:[%s2 + $0x8] sm:$0xf] %v497
  %554 = vst [vmem:[%s2 + $0xc] sm:$0xf] %v498
  %555 = vst [vmem:[%s2 + $0x10] sm:$0xf] %v499
  %556 = vst [vmem:[%s2 + $0x14] sm:$0xf] %v500
  %557 = vst [vmem:[%s2 + $0x18] sm:$0xf] %v501
  %558 = vst [vmem:[%s2 + $0x1c] sm:$0xf] %v502
  %559 = vst [vmem:[%s2 + $0x20] sm:$0xf] %v503
  %560 = vst [vmem:[%s2 + $0x24] sm:$0xf] %v504
  %561 = vst [vmem:[%s2 + $0x28] sm:$0xf] %v505
  %562 = vst [vmem:[%s2 + $0x2c] sm:$0xf] %v506
  %563 = vst [vmem:[%s2 + $0x30] sm:$0xf] %v507
  %564 = vst [vmem:[%s2 + $0x34] sm:$0xf] %v508
  %565 = vst [vmem:[%s2 + $0x38] sm:$0xf] %v509
  %566 = vst [vmem:[%s2 + $0x3c] sm:$0xf] %v510
  %567 = vst [vmem:[%s2 + $0x40] sm:$0xf] %v511
  %568 = vst [vmem:[%s2 + $0x44] sm:$0xf] %v512
  %569 = vst [vmem:[%s2 + $0x48] sm:$0xf] %v513
  %570 = vst [vmem:[%s2 + $0x4c] sm:$0xf] %v514
  %571 = vst [vmem:[%s2 + $0x50] sm:$0xf] %v515
  %572 = vst [vmem:[%s2 + $0x54] sm:$0xf] %v516
  %573 = vst [vmem:[%s2 + $0x58] sm:$0xf] %v517
  %574 = vst [vmem:[%s2 + $0x5c] sm:$0xf] %v518
  %575 = vst [vmem:[%s2 + $0x60] sm:$0xf] %v519
  %576 = vst [vmem:[%s2 + $0x64] sm:$0xf] %v520
  %577 = vst [vmem:[%s2 + $0x68] sm:$0xf] %v521
  %578 = vst [vmem:[%s2 + $0x6c] sm:$0xf] %v522
  // Predicated region
  $region14: #{wcnn_forward.8} parent=0 // pred_check
    _
  $region15: #{wcnn_forward.8} parent=0 // pred_check_branch
    %580 = sbr.rel (0) target = $region17
  $region16: #{wcnn_forward.8} parent=0 // pred_region
    _
  $region17: #{wcnn_forward.8} parent=0 // pred_fallthru
    _
  // Predicated region
  $region18: #{wcnn_forward.8} parent=0 // pred_check
    _
  $region19: #{wcnn_forward.8} parent=0 // pred_check_branch
    %582 = sbr.rel (0) target = $region21
  $region20: #{wcnn_forward.8} parent=0 // pred_region
    _
  $region21: #{wcnn_forward.8} parent=0 // pred_fallthru
    _
  // Predicated region
  $region22: #{wcnn_forward.8} parent=0 // pred_check
    _
  $region23: #{wcnn_forward.8} parent=0 // pred_check_branch
    %584 = sbr.rel (0) target = $region25
  $region24: #{wcnn_forward.8} parent=0 // pred_region
    _
  $region25: #{wcnn_forward.8} parent=0 // pred_fallthru
    _
  // Predicated region
  $region26: #{wcnn_forward.8} parent=0 // pred_check
    _
  $region27: #{wcnn_forward.8} parent=0 // pred_check_branch
    %586 = sbr.rel (0) target = $region29
  $region28: #{wcnn_forward.8} parent=0 // pred_region
    _
  $region29: #{wcnn_forward.8} parent=0 // pred_fallthru
    _

// kernel: wcnn_forward.11
$region0: #{wcnn_forward.11}
  #allocation0 [shape = 'u32[]', space=smem, size = 0x4, offset = 0x4, fixed_abs, tag = 'smem constant byte address 0x4 - core index']
  #allocation1 [shape = 'u32[144,128]{1,0:T(1,128)}', space=vmem, size = 0x12000, scoped, tag = 'internal scratch']
  %s0 = inlined_call_operand.vmem [shape: f32[2,128], index: 0, kind: input, shape index: {}]
  %s1 = inlined_call_operand.vmem [shape: f32[1,128], index: 1, kind: input, shape index: {}]
  %s2 = inlined_call_operand.vmem [shape: f32[1,128], index: 2, kind: input, shape index: {}]
  %s3 = inlined_call_operand.vmem [shape: bf16[96,128], index: 3, kind: input, shape index: {}]
  %s4 = inlined_call_operand.vmem [shape: bf16[96,128], index: 4, kind: output, shape index: {}]
  %s5 = sld [smem:[#allocation0]]
  $region26: #{wcnn_forward.11} parent=0
    _
  %s7 = ssub.s32 1, %s5
  %s8 = scalar_select 0, %s7, %s5
  // Predicated region
  $region2: #{wcnn_forward.11} parent=0 // pred_check
    _
  $region3: #{wcnn_forward.11} parent=0 // pred_check_branch
    %10 = sbr.rel (0) target = $region5
  $region4: #{wcnn_forward.11} parent=0 // pred_region
    _
  $region5: #{wcnn_forward.11} parent=0 // pred_fallthru
    _
  // Predicated region
  $region6: #{wcnn_forward.11} parent=0 // pred_check
    _
  $region7: #{wcnn_forward.11} parent=0 // pred_check_branch
    %12 = sbr.rel (0) target = $region9
  $region8: #{wcnn_forward.11} parent=0 // pred_region
    _
  $region9: #{wcnn_forward.11} parent=0 // pred_fallthru
    _
  // Predicated region
  $region10: #{wcnn_forward.11} parent=0 // pred_check
    _
  $region11: #{wcnn_forward.11} parent=0 // pred_check_branch
    %14 = sbr.rel (0) target = $region13
  $region12: #{wcnn_forward.11} parent=0 // pred_region
    _
  $region13: #{wcnn_forward.11} parent=0 // pred_fallthru
    _
  // Predicated region
  $region14: #{wcnn_forward.11} parent=0 // pred_check
    _
  $region15: #{wcnn_forward.11} parent=0 // pred_check_branch
    %16 = sbr.rel (0) target = $region17
  $region16: #{wcnn_forward.11} parent=0 // pred_region
    _
  $region17: #{wcnn_forward.11} parent=0 // pred_fallthru
    _
  %v17 = vld [vmem:[%s0] sm:$0x1]
  %v18 = vrcp.pop 92.0
  %v19 = vmul.f32 %v17, %v18
  %v20 = vld [vmem:[%s0 + $0x1] sm:$0x1]
  %v21 = vmul.f32 %v20, %v18
  %v22 = vmul.f32 %v19, %v19
  %v23 = vsub.f32 %v21, %v22
  %v24 = vmax.f32 %v23, 0.0
  %v25 = vld [vmem:[%s1] sm:$0x1]
  %v26 = vadd.f32 %v24, 1e-05
  %v27 = vrsqrt.pop %v26
  %v28 = vmul.f32 %v25, %v27
  %v29 = vld [vmem:[%s2] sm:$0x1]
  %v30 = vmul.f32 %v19, %v28
  %v31 = vsub.f32 %v29, %v30
  %v32 = vld [vmem:[%s3] sm:$0xf]
  %v33 = vld [vmem:[%s3 + $0x4] sm:$0xf]
  %v34 = vld [vmem:[%s3 + $0x8] sm:$0xf]
  %v35 = vld [vmem:[%s3 + $0xc] sm:$0xf]
  %v36 = vld [vmem:[%s3 + $0x10] sm:$0xf]
  %v37 = vld [vmem:[%s3 + $0x14] sm:$0xf]
  %v38 = vld [vmem:[%s3 + $0x18] sm:$0xf]
  %v39 = vld [vmem:[%s3 + $0x1c] sm:$0xf]
  %v40 = vld [vmem:[%s3 + $0x20] sm:$0xf]
  %v41 = vld [vmem:[%s3 + $0x24] sm:$0xf]
  %v42 = vld [vmem:[%s3 + $0x28] sm:$0xf]
  %v43 = vld [vmem:[%s3 + $0x2c] sm:$0xf]
  %v44 = vunpack.c.l.bf16 %v32
  %v45 = vunpack.c.l.bf16 %v33
  %v46 = vunpack.c.l.bf16 %v34
  %v47 = vunpack.c.l.bf16 %v35
  %v48 = vunpack.c.l.bf16 %v36
  %v49 = vunpack.c.l.bf16 %v37
  %v50 = vunpack.c.l.bf16 %v38
  %v51 = vunpack.c.l.bf16 %v39
  %v52 = vunpack.c.l.bf16 %v40
  %v53 = vunpack.c.l.bf16 %v41
  %v54 = vunpack.c.l.bf16 %v42
  %v55 = vunpack.c.l.bf16 %v43
  %v57 = vlaneseq
  %v58 = vshrl.u32 %v57, 7
  %v59 = vsub.s32 0, %v58
  %v60 = vrot.slane %v28, %v59
  %v62 = vmul.f32 %v44, %v60
  %v63 = vmul.f32 %v45, %v60
  %v64 = vmul.f32 %v46, %v60
  %v65 = vmul.f32 %v47, %v60
  %v66 = vmul.f32 %v48, %v60
  %v67 = vmul.f32 %v49, %v60
  %v68 = vmul.f32 %v50, %v60
  %v69 = vmul.f32 %v51, %v60
  %v70 = vmul.f32 %v52, %v60
  %v71 = vmul.f32 %v53, %v60
  %v72 = vmul.f32 %v54, %v60
  %v73 = vmul.f32 %v55, %v60
  %v75 = vlaneseq
  %v76 = vshrl.u32 %v75, 7
  %v77 = vsub.s32 0, %v76
  %v78 = vrot.slane %v31, %v77
  %v80 = vadd.f32 %v62, %v78
  %v81 = vadd.f32 %v63, %v78
  %v82 = vadd.f32 %v64, %v78
  %v83 = vadd.f32 %v65, %v78
  %v84 = vadd.f32 %v66, %v78
  %v85 = vadd.f32 %v67, %v78
  %v86 = vadd.f32 %v68, %v78
  %v87 = vadd.f32 %v69, %v78
  %v88 = vadd.f32 %v70, %v78
  %v89 = vadd.f32 %v71, %v78
  %v90 = vadd.f32 %v72, %v78
  %v91 = vadd.f32 %v73, %v78
  %vm92 = vcmp.ge.f32.partialorder %v80, 0.0
  %vm93 = vcmp.ge.f32.partialorder %v81, 0.0
  %vm94 = vcmp.ge.f32.partialorder %v82, 0.0
  %vm95 = vcmp.ge.f32.partialorder %v83, 0.0
  %vm96 = vcmp.ge.f32.partialorder %v84, 0.0
  %vm97 = vcmp.ge.f32.partialorder %v85, 0.0
  %vm98 = vcmp.ge.f32.partialorder %v86, 0.0
  %vm99 = vcmp.ge.f32.partialorder %v87, 0.0
  %vm100 = vcmp.ge.f32.partialorder %v88, 0.0
  %vm101 = vcmp.ge.f32.partialorder %v89, 0.0
  %vm102 = vcmp.ge.f32.partialorder %v90, 0.0
  %vm103 = vcmp.ge.f32.partialorder %v91, 0.0
  %v104 = vmul.f32 %v80, 0.01
  %v105 = vmul.f32 %v81, 0.01
  %v106 = vmul.f32 %v82, 0.01
  %v107 = vmul.f32 %v83, 0.01
  %v108 = vmul.f32 %v84, 0.01
  %v109 = vmul.f32 %v85, 0.01
  %v110 = vmul.f32 %v86, 0.01
  %v111 = vmul.f32 %v87, 0.01
  %v112 = vmul.f32 %v88, 0.01
  %v113 = vmul.f32 %v89, 0.01
  %v114 = vmul.f32 %v90, 0.01
  %v115 = vmul.f32 %v91, 0.01
  %v116 = vsel %vm92, %v80, %v104
  %v117 = vsel %vm93, %v81, %v105
  %v118 = vsel %vm94, %v82, %v106
  %v119 = vsel %vm95, %v83, %v107
  %v120 = vsel %vm96, %v84, %v108
  %v121 = vsel %vm97, %v85, %v109
  %v122 = vsel %vm98, %v86, %v110
  %v123 = vsel %vm99, %v87, %v111
  %v124 = vsel %vm100, %v88, %v112
  %v125 = vsel %vm101, %v89, %v113
  %v126 = vsel %vm102, %v90, %v114
  %v127 = vsel %vm103, %v91, %v115
  %v128 = vpack.c.bf16 %v117, %v116
  %v129 = vpack.c.bf16 %v119, %v118
  %v130 = vpack.c.bf16 %v121, %v120
  %v131 = vpack.c.bf16 %v123, %v122
  %v132 = vpack.c.bf16 %v125, %v124
  %v133 = vpack.c.bf16 %v127, %v126
  %v140 = vunpack.c.l.b16 %v128
  %v141 = vunpack.c.h.b16 %v128
  %v142 = vunpack.c.l.b16 %v129
  %v143 = vunpack.c.h.b16 %v129
  %v144 = vunpack.c.l.b16 %v130
  %v145 = vunpack.c.h.b16 %v130
  %v146 = vunpack.c.l.b16 %v131
  %v147 = vunpack.c.h.b16 %v131
  %v148 = vunpack.c.l.b16 %v132
  %v149 = vunpack.c.h.b16 %v132
  %v150 = vunpack.c.l.b16 %v133
  %v151 = vunpack.c.h.b16 %v133
  %v152 = vpack.c.b16 %v140, %v140
  %v153 = vpack.c.b16 %v141, %v141
  %v154 = vpack.c.b16 %v142, %v142
  %v155 = vpack.c.b16 %v143, %v143
  %v156 = vpack.c.b16 %v144, %v144
  %v157 = vpack.c.b16 %v145, %v145
  %v158 = vpack.c.b16 %v146, %v146
  %v159 = vpack.c.b16 %v147, %v147
  %v160 = vpack.c.b16 %v148, %v148
  %v161 = vpack.c.b16 %v149, %v149
  %v162 = vpack.c.b16 %v150, %v150
  %v163 = vpack.c.b16 %v151, %v151
  %176 = vst [vmem:[%s4] sm:$0xf] %v152
  %177 = vst [vmem:[%s4 + $0x4] sm:$0xf] %v153
  %178 = vst [vmem:[%s4 + $0x8] sm:$0xf] %v154
  %179 = vst [vmem:[%s4 + $0xc] sm:$0xf] %v155
  %180 = vst [vmem:[%s4 + $0x10] sm:$0xf] %v156
  %181 = vst [vmem:[%s4 + $0x14] sm:$0xf] %v157
  %182 = vst [vmem:[%s4 + $0x18] sm:$0xf] %v158
  %183 = vst [vmem:[%s4 + $0x1c] sm:$0xf] %v159
  %184 = vst [vmem:[%s4 + $0x20] sm:$0xf] %v160
  %185 = vst [vmem:[%s4 + $0x24] sm:$0xf] %v161
  %186 = vst [vmem:[%s4 + $0x28] sm:$0xf] %v162
  %187 = vst [vmem:[%s4 + $0x2c] sm:$0xf] %v163
  // Predicated region
  $region18: #{wcnn_forward.11} parent=0 // pred_check
    _
  $region19: #{wcnn_forward.11} parent=0 // pred_check_branch
    %189 = sbr.rel (0) target = $region21
  $region20: #{wcnn_forward.11} parent=0 // pred_region
    _
  $region21: #{wcnn_forward.11} parent=0 // pred_fallthru
    _
  // Predicated region
  $region22: #{wcnn_forward.11} parent=0 // pred_check
    _
  $region23: #{wcnn_forward.11} parent=0 // pred_check_branch
    %191 = sbr.rel (0) target = $region25
  $region24: #{wcnn_forward.11} parent=0 // pred_region
    _
  $region25: #{wcnn_forward.11} parent=0 // pred_fallthru
    _

// kernel: wcnn_forward.10
$region0: #{wcnn_forward.10}
  #allocation0 [shape = 'u32[]', space=smem, size = 0x4, offset = 0x4, fixed_abs, tag = 'smem constant byte address 0x4 - core index']
  #allocation1 [shape = 'u32[144,128]{1,0:T(1,128)}', space=vmem, size = 0x12000, scoped, tag = 'internal scratch']
  %s0 = inlined_call_operand.vmem [shape: bf16[96,896], index: 0, kind: input, shape index: {}]
  %s1 = inlined_call_operand.vmem [shape: bf16[896,128], index: 1, kind: input, shape index: {}]
  %s2 = inlined_call_operand.vmem [shape: bf16[96,128], index: 2, kind: output, shape index: {0}]
  %s3 = inlined_call_operand.vmem [shape: f32[2,128], index: 3, kind: output, shape index: {1}]
  %4 = xla_tuple %s2, %s3
  %s5 = sld [smem:[#allocation0]]
  $region30: #{wcnn_forward.10} parent=0
    _
  %s7 = ssub.s32 1, %s5
  %s8 = scalar_select 0, %s7, %s5
  // Predicated region
  $region2: #{wcnn_forward.10} parent=0 // pred_check
    _
  $region3: #{wcnn_forward.10} parent=0 // pred_check_branch
    %10 = sbr.rel (0) target = $region5
  $region4: #{wcnn_forward.10} parent=0 // pred_region
    _
  $region5: #{wcnn_forward.10} parent=0 // pred_fallthru
    _
  // Predicated region
  $region6: #{wcnn_forward.10} parent=0 // pred_check
    _
  $region7: #{wcnn_forward.10} parent=0 // pred_check_branch
    %12 = sbr.rel (0) target = $region9
  $region8: #{wcnn_forward.10} parent=0 // pred_region
    _
  $region9: #{wcnn_forward.10} parent=0 // pred_fallthru
    _
  %p14 = scmp.eq.s32.totalorder 0, 0
  // Predicated region
  $region10: #{wcnn_forward.10} parent=0 // pred_check
    %p15 = pneg %p14
  $region11: #{wcnn_forward.10} parent=0 // pred_check_branch
    %17 = sbr.rel (%p15) target = $region13
  $region12: #{wcnn_forward.10} parent=0 // pred_region
    %18 = vst [vmem:[%s3] sm:$0x3] 0.0
  $region13: #{wcnn_forward.10} parent=0 // pred_fallthru
    _
  %v19 = vld [vmem:[%s0] sm:$0xff]
  %v20 = vld [vmem:[%s0 + $0x8] sm:$0xff]
  %v21 = vld [vmem:[%s0 + $0x10] sm:$0xff]
  %v22 = vld [vmem:[%s0 + $0x18] sm:$0xf]
  %v23 = vld [vmem:[%s0 + $0x1c] sm:$0xff]
  %v24 = vld [vmem:[%s0 + $0x24] sm:$0xff]
  %v25 = vld [vmem:[%s0 + $0x2c] sm:$0xff]
  %v26 = vld [vmem:[%s0 + $0x34] sm:$0xf]
  %v27 = vld [vmem:[%s0 + $0x38] sm:$0xff]
  %v28 = vld [vmem:[%s0 + $0x40] sm:$0xff]
  %v29 = vld [vmem:[%s0 + $0x48] sm:$0xff]
  %v30 = vld [vmem:[%s0 + $0x50] sm:$0xf]
  %v31 = vld [vmem:[%s0 + $0x54] sm:$0xff]
  %v32 = vld [vmem:[%s0 + $0x5c] sm:$0xff]
  %v33 = vld [vmem:[%s0 + $0x64] sm:$0xff]
  %v34 = vld [vmem:[%s0 + $0x6c] sm:$0xf]
  %v35 = vld [vmem:[%s0 + $0x70] sm:$0xff]
  %v36 = vld [vmem:[%s0 + $0x78] sm:$0xff]
  %v37 = vld [vmem:[%s0 + $0x80] sm:$0xff]
  %v38 = vld [vmem:[%s0 + $0x88] sm:$0xf]
  %v39 = vld [vmem:[%s0 + $0x8c] sm:$0xff]
  %v40 = vld [vmem:[%s0 + $0x94] sm:$0xff]
  %v41 = vld [vmem:[%s0 + $0x9c] sm:$0xff]
  %v42 = vld [vmem:[%s0 + $0xa4] sm:$0xf]
  %v43 = vld [vmem:[%s0 + $0xa8] sm:$0xff]
  %v44 = vld [vmem:[%s0 + $0xb0] sm:$0xff]
  %v45 = vld [vmem:[%s0 + $0xb8] sm:$0xff]
  %v46 = vld [vmem:[%s0 + $0xc0] sm:$0xf]
  %v47 = vld [vmem:[%s0 + $0xc4] sm:$0xff]
  %v48 = vld [vmem:[%s0 + $0xcc] sm:$0xff]
  %v49 = vld [vmem:[%s0 + $0xd4] sm:$0xff]
  %v50 = vld [vmem:[%s0 + $0xdc] sm:$0xf]
  %v51 = vld [vmem:[%s0 + $0xe0] sm:$0xff]
  %v52 = vld [vmem:[%s0 + $0xe8] sm:$0xff]
  %v53 = vld [vmem:[%s0 + $0xf0] sm:$0xff]
  %v54 = vld [vmem:[%s0 + $0xf8] sm:$0xf]
  %v55 = vld [vmem:[%s0 + $0xfc] sm:$0xff]
  %v56 = vld [vmem:[%s0 + $0x104] sm:$0xff]
  %v57 = vld [vmem:[%s0 + $0x10c] sm:$0xff]
  %v58 = vld [vmem:[%s0 + $0x114] sm:$0xf]
  %v59 = vld [vmem:[%s0 + $0x118] sm:$0xff]
  %v60 = vld [vmem:[%s0 + $0x120] sm:$0xff]
  %v61 = vld [vmem:[%s0 + $0x128] sm:$0xff]
  %v62 = vld [vmem:[%s0 + $0x130] sm:$0xf]
  %v63 = vld [vmem:[%s0 + $0x134] sm:$0xff]
  %v64 = vld [vmem:[%s0 + $0x13c] sm:$0xff]
  %v65 = vld [vmem:[%s0 + $0x144] sm:$0xff]
  %v66 = vld [vmem:[%s0 + $0x14c] sm:$0xf]
  %v67 = vld [vmem:[%s1] sm:$0xf]
  %v68 = vld [vmem:[%s1 + $0x4] sm:$0xf]
  %v69 = vld [vmem:[%s1 + $0x8] sm:$0xf]
  %v70 = vld [vmem:[%s1 + $0xc] sm:$0xf]
  %v71 = vld [vmem:[%s1 + $0x10] sm:$0xf]
  %v72 = vld [vmem:[%s1 + $0x14] sm:$0xf]
  %v73 = vld [vmem:[%s1 + $0x18] sm:$0xf]
  %v74 = vld [vmem:[%s1 + $0x1c] sm:$0xf]
  %v75 = vld [vmem:[%s1 + $0x20] sm:$0xf]
  %v76 = vld [vmem:[%s1 + $0x24] sm:$0xf]
  %v77 = vld [vmem:[%s1 + $0x28] sm:$0xf]
  %v78 = vld [vmem:[%s1 + $0x2c] sm:$0xf]
  %v79 = vld [vmem:[%s1 + $0x30] sm:$0xf]
  %v80 = vld [vmem:[%s1 + $0x34] sm:$0xf]
  %v81 = vld [vmem:[%s1 + $0x38] sm:$0xf]
  %v82 = vld [vmem:[%s1 + $0x3c] sm:$0xf]
  %v83 = vld [vmem:[%s1 + $0x40] sm:$0xf]
  %v84 = vld [vmem:[%s1 + $0x44] sm:$0xf]
  %v85 = vld [vmem:[%s1 + $0x48] sm:$0xf]
  %v86 = vld [vmem:[%s1 + $0x4c] sm:$0xf]
  %v87 = vld [vmem:[%s1 + $0x50] sm:$0xf]
  %v88 = vld [vmem:[%s1 + $0x54] sm:$0xf]
  %v89 = vld [vmem:[%s1 + $0x58] sm:$0xf]
  %v90 = vld [vmem:[%s1 + $0x5c] sm:$0xf]
  %v91 = vld [vmem:[%s1 + $0x60] sm:$0xf]
  %v92 = vld [vmem:[%s1 + $0x64] sm:$0xf]
  %v93 = vld [vmem:[%s1 + $0x68] sm:$0xf]
  %v94 = vld [vmem:[%s1 + $0x6c] sm:$0xf]
  %v95 = vld [vmem:[%s1 + $0x70] sm:$0xf]
  %v96 = vld [vmem:[%s1 + $0x74] sm:$0xf]
  %v97 = vld [vmem:[%s1 + $0x78] sm:$0xf]
  %v98 = vld [vmem:[%s1 + $0x7c] sm:$0xf]
  %v99 = vld [vmem:[%s1 + $0x80] sm:$0xf]
  %v100 = vld [vmem:[%s1 + $0x84] sm:$0xf]
  %v101 = vld [vmem:[%s1 + $0x88] sm:$0xf]
  %v102 = vld [vmem:[%s1 + $0x8c] sm:$0xf]
  %v103 = vld [vmem:[%s1 + $0x90] sm:$0xf]
  %v104 = vld [vmem:[%s1 + $0x94] sm:$0xf]
  %v105 = vld [vmem:[%s1 + $0x98] sm:$0xf]
  %v106 = vld [vmem:[%s1 + $0x9c] sm:$0xf]
  %v107 = vld [vmem:[%s1 + $0xa0] sm:$0xf]
  %v108 = vld [vmem:[%s1 + $0xa4] sm:$0xf]
  %v109 = vld [vmem:[%s1 + $0xa8] sm:$0xf]
  %v110 = vld [vmem:[%s1 + $0xac] sm:$0xf]
  %v111 = vld [vmem:[%s1 + $0xb0] sm:$0xf]
  %v112 = vld [vmem:[%s1 + $0xb4] sm:$0xf]
  %v113 = vld [vmem:[%s1 + $0xb8] sm:$0xf]
  %v114 = vld [vmem:[%s1 + $0xbc] sm:$0xf]
  %v115 = vld [vmem:[%s1 + $0xc0] sm:$0xf]
  %v116 = vld [vmem:[%s1 + $0xc4] sm:$0xf]
  %v117 = vld [vmem:[%s1 + $0xc8] sm:$0xf]
  %v118 = vld [vmem:[%s1 + $0xcc] sm:$0xf]
  %v119 = vld [vmem:[%s1 + $0xd0] sm:$0xf]
  %v120 = vld [vmem:[%s1 + $0xd4] sm:$0xf]
  %v121 = vld [vmem:[%s1 + $0xd8] sm:$0xf]
  %v122 = vld [vmem:[%s1 + $0xdc] sm:$0xf]
  %v123 = vld [vmem:[%s1 + $0xe0] sm:$0xf]
  %v124 = vld [vmem:[%s1 + $0xe4] sm:$0xf]
  %v125 = vld [vmem:[%s1 + $0xe8] sm:$0xf]
  %v126 = vld [vmem:[%s1 + $0xec] sm:$0xf]
  %v127 = vld [vmem:[%s1 + $0xf0] sm:$0xf]
  %v128 = vld [vmem:[%s1 + $0xf4] sm:$0xf]
  %v129 = vld [vmem:[%s1 + $0xf8] sm:$0xf]
  %v130 = vld [vmem:[%s1 + $0xfc] sm:$0xf]
  %v131 = vld [vmem:[%s1 + $0x100] sm:$0xf]
  %v132 = vld [vmem:[%s1 + $0x104] sm:$0xf]
  %v133 = vld [vmem:[%s1 + $0x108] sm:$0xf]
  %v134 = vld [vmem:[%s1 + $0x10c] sm:$0xf]
  %v135 = vld [vmem:[%s1 + $0x110] sm:$0xf]
  %v136 = vld [vmem:[%s1 + $0x114] sm:$0xf]
  %v137 = vld [vmem:[%s1 + $0x118] sm:$0xf]
  %v138 = vld [vmem:[%s1 + $0x11c] sm:$0xf]
  %v139 = vld [vmem:[%s1 + $0x120] sm:$0xf]
  %v140 = vld [vmem:[%s1 + $0x124] sm:$0xf]
  %v141 = vld [vmem:[%s1 + $0x128] sm:$0xf]
  %v142 = vld [vmem:[%s1 + $0x12c] sm:$0xf]
  %v143 = vld [vmem:[%s1 + $0x130] sm:$0xf]
  %v144 = vld [vmem:[%s1 + $0x134] sm:$0xf]
  %v145 = vld [vmem:[%s1 + $0x138] sm:$0xf]
  %v146 = vld [vmem:[%s1 + $0x13c] sm:$0xf]
  %v147 = vld [vmem:[%s1 + $0x140] sm:$0xf]
  %v148 = vld [vmem:[%s1 + $0x144] sm:$0xf]
  %v149 = vld [vmem:[%s1 + $0x148] sm:$0xf]
  %v150 = vld [vmem:[%s1 + $0x14c] sm:$0xf]
  %v151 = vld [vmem:[%s1 + $0x150] sm:$0xf]
  %v152 = vld [vmem:[%s1 + $0x154] sm:$0xf]
  %v153 = vld [vmem:[%s1 + $0x158] sm:$0xf]
  %v154 = vld [vmem:[%s1 + $0x15c] sm:$0xf]
  %v155 = vld [vmem:[%s1 + $0x160] sm:$0xf]
  %v156 = vld [vmem:[%s1 + $0x164] sm:$0xf]
  %v157 = vld [vmem:[%s1 + $0x168] sm:$0xf]
  %v158 = vld [vmem:[%s1 + $0x16c] sm:$0xf]
  %v159 = vld [vmem:[%s1 + $0x170] sm:$0xf]
  %v160 = vld [vmem:[%s1 + $0x174] sm:$0xf]
  %v161 = vld [vmem:[%s1 + $0x178] sm:$0xf]
  %v162 = vld [vmem:[%s1 + $0x17c] sm:$0xf]
  %v163 = vld [vmem:[%s1 + $0x180] sm:$0xf]
  %v164 = vld [vmem:[%s1 + $0x184] sm:$0xf]
  %v165 = vld [vmem:[%s1 + $0x188] sm:$0xf]
  %v166 = vld [vmem:[%s1 + $0x18c] sm:$0xf]
  %v167 = vld [vmem:[%s1 + $0x190] sm:$0xf]
  %v168 = vld [vmem:[%s1 + $0x194] sm:$0xf]
  %v169 = vld [vmem:[%s1 + $0x198] sm:$0xf]
  %v170 = vld [vmem:[%s1 + $0x19c] sm:$0xf]
  %v171 = vld [vmem:[%s1 + $0x1a0] sm:$0xf]
  %v172 = vld [vmem:[%s1 + $0x1a4] sm:$0xf]
  %v173 = vld [vmem:[%s1 + $0x1a8] sm:$0xf]
  %v174 = vld [vmem:[%s1 + $0x1ac] sm:$0xf]
  %v175 = vld [vmem:[%s1 + $0x1b0] sm:$0xf]
  %v176 = vld [vmem:[%s1 + $0x1b4] sm:$0xf]
  %v177 = vld [vmem:[%s1 + $0x1b8] sm:$0xf]
  %v178 = vld [vmem:[%s1 + $0x1bc] sm:$0xf]
  %v227 = vunpack.c.l.b16 %v19
  %v228 = vunpack.c.h.b16 %v19
  %v229 = vunpack.c.l.b16 %v20
  %v230 = vunpack.c.h.b16 %v20
  %v231 = vunpack.c.l.b16 %v21
  %v232 = vunpack.c.h.b16 %v21
  %v233 = vunpack.c.l.b16 %v22
  %v234 = vunpack.c.l.b16 %v23
  %v235 = vunpack.c.h.b16 %v23
  %v236 = vunpack.c.l.b16 %v24
  %v237 = vunpack.c.h.b16 %v24
  %v238 = vunpack.c.l.b16 %v25
  %v239 = vunpack.c.h.b16 %v25
  %v240 = vunpack.c.l.b16 %v26
  %v241 = vunpack.c.l.b16 %v27
  %v242 = vunpack.c.h.b16 %v27
  %v243 = vunpack.c.l.b16 %v28
  %v244 = vunpack.c.h.b16 %v28
  %v245 = vunpack.c.l.b16 %v29
  %v246 = vunpack.c.h.b16 %v29
  %v247 = vunpack.c.l.b16 %v30
  %v248 = vunpack.c.l.b16 %v31
  %v249 = vunpack.c.h.b16 %v31
  %v250 = vunpack.c.l.b16 %v32
  %v251 = vunpack.c.h.b16 %v32
  %v252 = vunpack.c.l.b16 %v33
  %v253 = vunpack.c.h.b16 %v33
  %v254 = vunpack.c.l.b16 %v34
  %v255 = vunpack.c.l.b16 %v35
  %v256 = vunpack.c.h.b16 %v35
  %v257 = vunpack.c.l.b16 %v36
  %v258 = vunpack.c.h.b16 %v36
  %v259 = vunpack.c.l.b16 %v37
  %v260 = vunpack.c.h.b16 %v37
  %v261 = vunpack.c.l.b16 %v38
  %v262 = vunpack.c.l.b16 %v39
  %v263 = vunpack.c.h.b16 %v39
  %v264 = vunpack.c.l.b16 %v40
  %v265 = vunpack.c.h.b16 %v40
  %v266 = vunpack.c.l.b16 %v41
  %v267 = vunpack.c.h.b16 %v41
  %v268 = vunpack.c.l.b16 %v42
  %v269 = vunpack.c.l.b16 %v43
  %v270 = vunpack.c.h.b16 %v43
  %v271 = vunpack.c.l.b16 %v44
  %v272 = vunpack.c.h.b16 %v44
  %v273 = vunpack.c.l.b16 %v45
  %v274 = vunpack.c.h.b16 %v45
  %v275 = vunpack.c.l.b16 %v46
  %v276 = vunpack.c.l.b16 %v47
  %v277 = vunpack.c.h.b16 %v47
  %v278 = vunpack.c.l.b16 %v48
  %v279 = vunpack.c.h.b16 %v48
  %v280 = vunpack.c.l.b16 %v49
  %v281 = vunpack.c.h.b16 %v49
  %v282 = vunpack.c.l.b16 %v50
  %v283 = vunpack.c.l.b16 %v51
  %v284 = vunpack.c.h.b16 %v51
  %v285 = vunpack.c.l.b16 %v52
  %v286 = vunpack.c.h.b16 %v52
  %v287 = vunpack.c.l.b16 %v53
  %v288 = vunpack.c.h.b16 %v53
  %v289 = vunpack.c.l.b16 %v54
  %v290 = vunpack.c.l.b16 %v55
  %v291 = vunpack.c.h.b16 %v55
  %v292 = vunpack.c.l.b16 %v56
  %v293 = vunpack.c.h.b16 %v56
  %v294 = vunpack.c.l.b16 %v57
  %v295 = vunpack.c.h.b16 %v57
  %v296 = vunpack.c.l.b16 %v58
  %v297 = vunpack.c.l.b16 %v59
  %v298 = vunpack.c.h.b16 %v59
  %v299 = vunpack.c.l.b16 %v60
  %v300 = vunpack.c.h.b16 %v60
  %v301 = vunpack.c.l.b16 %v61
  %v302 = vunpack.c.h.b16 %v61
  %v303 = vunpack.c.l.b16 %v62
  %v304 = vunpack.c.l.b16 %v63
  %v305 = vunpack.c.h.b16 %v63
  %v306 = vunpack.c.l.b16 %v64
  %v307 = vunpack.c.h.b16 %v64
  %v308 = vunpack.c.l.b16 %v65
  %v309 = vunpack.c.h.b16 %v65
  %v310 = vunpack.c.l.b16 %v66
  %v311 = vpack.c.b16 %v234, %v227
  %v312 = vpack.c.b16 %v235, %v228
  %v313 = vpack.c.b16 %v236, %v229
  %v314 = vpack.c.b16 %v237, %v230
  %v315 = vpack.c.b16 %v238, %v231
  %v316 = vpack.c.b16 %v239, %v232
  %v317 = vpack.c.b16 %v240, %v233
  %v318 = vpack.c.b16 %v248, %v241
  %v319 = vpack.c.b16 %v249, %v242
  %v320 = vpack.c.b16 %v250, %v243
  %v321 = vpack.c.b16 %v251, %v244
  %v322 = vpack.c.b16 %v252, %v245
  %v323 = vpack.c.b16 %v253, %v246
  %v324 = vpack.c.b16 %v254, %v247
  %v325 = vpack.c.b16 %v262, %v255
  %v326 = vpack.c.b16 %v263, %v256
  %v327 = vpack.c.b16 %v264, %v257
  %v328 = vpack.c.b16 %v265, %v258
  %v329 = vpack.c.b16 %v266, %v259
  %v330 = vpack.c.b16 %v267, %v260
  %v331 = vpack.c.b16 %v268, %v261
  %v332 = vpack.c.b16 %v276, %v269
  %v333 = vpack.c.b16 %v277, %v270
  %v334 = vpack.c.b16 %v278, %v271
  %v335 = vpack.c.b16 %v279, %v272
  %v336 = vpack.c.b16 %v280, %v273
  %v337 = vpack.c.b16 %v281, %v274
  %v338 = vpack.c.b16 %v282, %v275
  %v339 = vpack.c.b16 %v290, %v283
  %v340 = vpack.c.b16 %v291, %v284
  %v341 = vpack.c.b16 %v292, %v285
  %v342 = vpack.c.b16 %v293, %v286
  %v343 = vpack.c.b16 %v294, %v287
  %v344 = vpack.c.b16 %v295, %v288
  %v345 = vpack.c.b16 %v296, %v289
  %v346 = vpack.c.b16 %v304, %v297
  %v347 = vpack.c.b16 %v305, %v298
  %v348 = vpack.c.b16 %v306, %v299
  %v349 = vpack.c.b16 %v307, %v300
  %v350 = vpack.c.b16 %v308, %v301
  %v351 = vpack.c.b16 %v309, %v302
  %v352 = vpack.c.b16 %v310, %v303
  %v507 = vunpack.c.l.b16 %v67
  %v508 = vunpack.c.l.b16 %v68
  %v509 = vunpack.c.l.b16 %v69
  %v510 = vunpack.c.l.b16 %v70
  %v511 = vunpack.c.l.b16 %v71
  %v512 = vunpack.c.l.b16 %v72
  %v513 = vunpack.c.l.b16 %v73
  %v514 = vunpack.c.l.b16 %v74
  %v515 = vunpack.c.l.b16 %v75
  %v516 = vunpack.c.l.b16 %v76
  %v517 = vunpack.c.l.b16 %v77
  %v518 = vunpack.c.l.b16 %v78
  %v519 = vunpack.c.l.b16 %v79
  %v520 = vunpack.c.l.b16 %v80
  %v521 = vunpack.c.l.b16 %v81
  %v522 = vunpack.c.l.b16 %v82
  %v523 = vunpack.c.l.b16 %v83
  %v524 = vunpack.c.l.b16 %v84
  %v525 = vunpack.c.l.b16 %v85
  %v526 = vunpack.c.l.b16 %v86
  %v527 = vunpack.c.l.b16 %v87
  %v528 = vunpack.c.l.b16 %v88
  %v529 = vunpack.c.l.b16 %v89
  %v530 = vunpack.c.l.b16 %v90
  %v531 = vunpack.c.l.b16 %v91
  %v532 = vunpack.c.l.b16 %v92
  %v533 = vunpack.c.l.b16 %v93
  %v534 = vunpack.c.l.b16 %v94
  %v535 = vunpack.c.l.b16 %v95
  %v536 = vunpack.c.l.b16 %v96
  %v537 = vunpack.c.l.b16 %v97
  %v538 = vunpack.c.l.b16 %v98
  %v539 = vunpack.c.l.b16 %v99
  %v540 = vunpack.c.l.b16 %v100
  %v541 = vunpack.c.l.b16 %v101
  %v542 = vunpack.c.l.b16 %v102
  %v543 = vunpack.c.l.b16 %v103
  %v544 = vunpack.c.l.b16 %v104
  %v545 = vunpack.c.l.b16 %v105
  %v546 = vunpack.c.l.b16 %v106
  %v547 = vunpack.c.l.b16 %v107
  %v548 = vunpack.c.l.b16 %v108
  %v549 = vunpack.c.l.b16 %v109
  %v550 = vunpack.c.l.b16 %v110
  %v551 = vunpack.c.l.b16 %v111
  %v552 = vunpack.c.l.b16 %v112
  %v553 = vunpack.c.l.b16 %v113
  %v554 = vunpack.c.l.b16 %v114
  %v555 = vunpack.c.l.b16 %v115
  %v556 = vunpack.c.l.b16 %v116
  %v557 = vunpack.c.l.b16 %v117
  %v558 = vunpack.c.l.b16 %v118
  %v559 = vunpack.c.l.b16 %v119
  %v560 = vunpack.c.l.b16 %v120
  %v561 = vunpack.c.l.b16 %v121
  %v562 = vunpack.c.l.b16 %v122
  %v563 = vunpack.c.l.b16 %v123
  %v564 = vunpack.c.l.b16 %v124
  %v565 = vunpack.c.l.b16 %v125
  %v566 = vunpack.c.l.b16 %v126
  %v567 = vunpack.c.l.b16 %v127
  %v568 = vunpack.c.l.b16 %v128
  %v569 = vunpack.c.l.b16 %v129
  %v570 = vunpack.c.l.b16 %v130
  %v571 = vunpack.c.l.b16 %v131
  %v572 = vunpack.c.l.b16 %v132
  %v573 = vunpack.c.l.b16 %v133
  %v574 = vunpack.c.l.b16 %v134
  %v575 = vunpack.c.l.b16 %v135
  %v576 = vunpack.c.l.b16 %v136
  %v577 = vunpack.c.l.b16 %v137
  %v578 = vunpack.c.l.b16 %v138
  %v579 = vunpack.c.l.b16 %v139
  %v580 = vunpack.c.l.b16 %v140
  %v581 = vunpack.c.l.b16 %v141
  %v582 = vunpack.c.l.b16 %v142
  %v583 = vunpack.c.l.b16 %v143
  %v584 = vunpack.c.l.b16 %v144
  %v585 = vunpack.c.l.b16 %v145
  %v586 = vunpack.c.l.b16 %v146
  %v587 = vunpack.c.l.b16 %v147
  %v588 = vunpack.c.l.b16 %v148
  %v589 = vunpack.c.l.b16 %v149
  %v590 = vunpack.c.l.b16 %v150
  %v591 = vunpack.c.l.b16 %v151
  %v592 = vunpack.c.l.b16 %v152
  %v593 = vunpack.c.l.b16 %v153
  %v594 = vunpack.c.l.b16 %v154
  %v595 = vunpack.c.l.b16 %v155
  %v596 = vunpack.c.l.b16 %v156
  %v597 = vunpack.c.l.b16 %v157
  %v598 = vunpack.c.l.b16 %v158
  %v599 = vunpack.c.l.b16 %v159
  %v600 = vunpack.c.l.b16 %v160
  %v601 = vunpack.c.l.b16 %v161
  %v602 = vunpack.c.l.b16 %v162
  %v603 = vunpack.c.l.b16 %v163
  %v604 = vunpack.c.l.b16 %v164
  %v605 = vunpack.c.l.b16 %v165
  %v606 = vunpack.c.l.b16 %v166
  %v607 = vunpack.c.l.b16 %v167
  %v608 = vunpack.c.l.b16 %v168
  %v609 = vunpack.c.l.b16 %v169
  %v610 = vunpack.c.l.b16 %v170
  %v611 = vunpack.c.l.b16 %v171
  %v612 = vunpack.c.l.b16 %v172
  %v613 = vunpack.c.l.b16 %v173
  %v614 = vunpack.c.l.b16 %v174
  %v615 = vunpack.c.l.b16 %v175
  %v616 = vunpack.c.l.b16 %v176
  %v617 = vunpack.c.l.b16 %v177
  %v618 = vunpack.c.l.b16 %v178
  %v619 = vpack.c.b16 %v508, %v507
  %v620 = vpack.c.b16 %v510, %v509
  %v621 = vpack.c.b16 %v512, %v511
  %v622 = vpack.c.b16 %v514, %v513
  %v623 = vpack.c.b16 %v516, %v515
  %v624 = vpack.c.b16 %v518, %v517
  %v625 = vpack.c.b16 %v520, %v519
  %v626 = vpack.c.b16 %v522, %v521
  %v627 = vpack.c.b16 %v524, %v523
  %v628 = vpack.c.b16 %v526, %v525
  %v629 = vpack.c.b16 %v528, %v527
  %v630 = vpack.c.b16 %v530, %v529
  %v631 = vpack.c.b16 %v532, %v531
  %v632 = vpack.c.b16 %v534, %v533
  %v633 = vpack.c.b16 %v536, %v535
  %v634 = vpack.c.b16 %v538, %v537
  %v635 = vpack.c.b16 %v540, %v539
  %v636 = vpack.c.b16 %v542, %v541
  %v637 = vpack.c.b16 %v544, %v543
  %v638 = vpack.c.b16 %v546, %v545
  %v639 = vpack.c.b16 %v548, %v547
  %v640 = vpack.c.b16 %v550, %v549
  %v641 = vpack.c.b16 %v552, %v551
  %v642 = vpack.c.b16 %v554, %v553
  %v643 = vpack.c.b16 %v556, %v555
  %v644 = vpack.c.b16 %v558, %v557
  %v645 = vpack.c.b16 %v560, %v559
  %v646 = vpack.c.b16 %v562, %v561
  %v647 = vpack.c.b16 %v564, %v563
  %v648 = vpack.c.b16 %v566, %v565
  %v649 = vpack.c.b16 %v568, %v567
  %v650 = vpack.c.b16 %v570, %v569
  %v651 = vpack.c.b16 %v572, %v571
  %v652 = vpack.c.b16 %v574, %v573
  %v653 = vpack.c.b16 %v576, %v575
  %v654 = vpack.c.b16 %v578, %v577
  %v655 = vpack.c.b16 %v580, %v579
  %v656 = vpack.c.b16 %v582, %v581
  %v657 = vpack.c.b16 %v584, %v583
  %v658 = vpack.c.b16 %v586, %v585
  %v659 = vpack.c.b16 %v588, %v587
  %v660 = vpack.c.b16 %v590, %v589
  %v661 = vpack.c.b16 %v592, %v591
  %v662 = vpack.c.b16 %v594, %v593
  %v663 = vpack.c.b16 %v596, %v595
  %v664 = vpack.c.b16 %v598, %v597
  %v665 = vpack.c.b16 %v600, %v599
  %v666 = vpack.c.b16 %v602, %v601
  %v667 = vpack.c.b16 %v604, %v603
  %v668 = vpack.c.b16 %v606, %v605
  %v669 = vpack.c.b16 %v608, %v607
  %v670 = vpack.c.b16 %v610, %v609
  %v671 = vpack.c.b16 %v612, %v611
  %v672 = vpack.c.b16 %v614, %v613
  %v673 = vpack.c.b16 %v616, %v615
  %v674 = vpack.c.b16 %v618, %v617
  %731 = vmatprep.subr.bf16.mxu0 0
  %732 = vmatpush1.bf16.msra.mxu0 %v626
  %733 = vmatprep.subr.bf16.mxu0 0
  %734 = vmatpush1.bf16.msra.mxu0 %v625
  %735 = vmatprep.subr.bf16.mxu0 0
  %736 = vmatpush1.bf16.msra.mxu0 %v624
  %737 = vmatprep.subr.bf16.mxu0 0
  %738 = vmatpush1.bf16.msra.mxu0 %v623
  %739 = vmatprep.subr.bf16.mxu0 0
  %740 = vmatpush1.bf16.msra.mxu0 %v622
  %741 = vmatprep.subr.bf16.mxu0 0
  %742 = vmatpush1.bf16.msra.mxu0 %v621
  %743 = vmatprep.subr.bf16.mxu0 0
  %744 = vmatpush1.bf16.msra.mxu0 %v620
  %745 = vmatprep.subr.bf16.mxu0 0
  %746 = vmatpush1.bf16.msra.mxu0 %v619
  %747 = vmatprep.subr.bf16.mxu0 0
  %748 = vmatpush2.bf16.msra.mxu0 %v634
  %749 = vmatprep.subr.bf16.mxu0 0
  %750 = vmatpush2.bf16.msra.mxu0 %v633
  %751 = vmatprep.subr.bf16.mxu0 0
  %752 = vmatpush2.bf16.msra.mxu0 %v632
  %753 = vmatprep.subr.bf16.mxu0 0
  %754 = vmatpush2.bf16.msra.mxu0 %v631
  %755 = vmatprep.subr.bf16.mxu0 0
  %756 = vmatpush2.bf16.msra.mxu0 %v630
  %757 = vmatprep.subr.bf16.mxu0 0
  %758 = vmatpush2.bf16.msra.mxu0 %v629
  %759 = vmatprep.subr.bf16.mxu0 0
  %760 = vmatpush2.bf16.msra.mxu0 %v628
  %761 = vmatprep.subr.bf16.mxu0 0
  %762 = vmatpush2.bf16.msra.mxu0 %v627
  %763 = vmatprep.mubr.bf16.mxu0 %v312
  %764 = vmatmul.mubr.bf16.gmra.mxu0 %v311
  %v765 = vpop.f32.mrf.mxu0
  %v766 = vadd.f32 0.0, %v765
  %v767 = vpop.f32.mrf.mxu0
  %v768 = vpop.f32.mrf.mxu0
  %v769 = vadd.f32 0.0, %v768
  %v770 = vpop.f32.mrf.mxu0
  %771 = vmatprep.mubr.bf16.mxu0 %v319
  %772 = vmatmul.mubr.bf16.gmra.mxu0 %v318
  %v773 = vpop.f32.mrf.mxu0
  %v774 = vadd.f32 0.0, %v773
  %v775 = vpop.f32.mrf.mxu0
  %v776 = vpop.f32.mrf.mxu0
  %v777 = vadd.f32 0.0, %v776
  %v778 = vpop.f32.mrf.mxu0
  %779 = vmatprep.mubr.bf16.mxu0 %v326
  %780 = vmatmul.mubr.bf16.gmra.mxu0 %v325
  %v781 = vpop.f32.mrf.mxu0
  %v782 = vadd.f32 0.0, %v781
  %v783 = vpop.f32.mrf.mxu0
  %v784 = vpop.f32.mrf.mxu0
  %v785 = vadd.f32 0.0, %v784
  %v786 = vpop.f32.mrf.mxu0
  %787 = vmatprep.mubr.bf16.mxu0 %v333
  %788 = vmatmul.mubr.bf16.gmra.mxu0 %v332
  %v789 = vpop.f32.mrf.mxu0
  %v790 = vadd.f32 0.0, %v789
  %v791 = vpop.f32.mrf.mxu0
  %v792 = vpop.f32.mrf.mxu0
  %v793 = vadd.f32 0.0, %v792
  %v794 = vpop.f32.mrf.mxu0
  %795 = vmatprep.mubr.bf16.mxu0 %v340
  %796 = vmatmul.mubr.bf16.gmra.mxu0 %v339
  %v797 = vpop.f32.mrf.mxu0
  %v798 = vadd.f32 0.0, %v797
  %v799 = vpop.f32.mrf.mxu0
  %v800 = vpop.f32.mrf.mxu0
  %v801 = vadd.f32 0.0, %v800
  %v802 = vpop.f32.mrf.mxu0
  %803 = vmatprep.mubr.bf16.mxu0 %v347
  %804 = vmatmul.mubr.bf16.gmra.mxu0 %v346
  %v805 = vpop.f32.mrf.mxu0
  %v806 = vadd.f32 0.0, %v805
  %v807 = vpop.f32.mrf.mxu0
  %v808 = vpop.f32.mrf.mxu0
  %v809 = vadd.f32 0.0, %v808
  %v810 = vpop.f32.mrf.mxu0
  %811 = vdwg.mxu0
  %812 = vmatprep.subr.bf16.mxu0 0
  %813 = vmatpush1.bf16.msra.mxu0 %v642
  %814 = vmatprep.subr.bf16.mxu0 0
  %815 = vmatpush1.bf16.msra.mxu0 %v641
  %816 = vmatprep.subr.bf16.mxu0 0
  %817 = vmatpush1.bf16.msra.mxu0 %v640
  %818 = vmatprep.subr.bf16.mxu0 0
  %819 = vmatpush1.bf16.msra.mxu0 %v639
  %820 = vmatprep.subr.bf16.mxu0 0
  %821 = vmatpush1.bf16.msra.mxu0 %v638
  %822 = vmatprep.subr.bf16.mxu0 0
  %823 = vmatpush1.bf16.msra.mxu0 %v637
  %824 = vmatprep.subr.bf16.mxu0 0
  %825 = vmatpush1.bf16.msra.mxu0 %v636
  %826 = vmatprep.subr.bf16.mxu0 0
  %827 = vmatpush1.bf16.msra.mxu0 %v635
  %828 = vmatprep.subr.bf16.mxu0 0
  %829 = vmatpush2.bf16.msra.mxu0 %v650
  %830 = vmatprep.subr.bf16.mxu0 0
  %831 = vmatpush2.bf16.msra.mxu0 %v649
  %832 = vmatprep.subr.bf16.mxu0 0
  %833 = vmatpush2.bf16.msra.mxu0 %v648
  %834 = vmatprep.subr.bf16.mxu0 0
  %835 = vmatpush2.bf16.msra.mxu0 %v647
  %836 = vmatprep.subr.bf16.mxu0 0
  %837 = vmatpush2.bf16.msra.mxu0 %v646
  %838 = vmatprep.subr.bf16.mxu0 0
  %839 = vmatpush2.bf16.msra.mxu0 %v645
  %840 = vmatprep.subr.bf16.mxu0 0
  %841 = vmatpush2.bf16.msra.mxu0 %v644
  %842 = vmatprep.subr.bf16.mxu0 0
  %843 = vmatpush2.bf16.msra.mxu0 %v643
  %844 = vmatprep.mubr.bf16.mxu0 %v314
  %845 = vmatmul.mubr.bf16.gmra.mxu0 %v313
  %v846 = vpop.f32.mrf.mxu0
  %v847 = vadd.f32 %v766, %v846
  %v848 = vpop.f32.mrf.mxu0
  %v849 = vpop.f32.mrf.mxu0
  %v850 = vadd.f32 %v769, %v849
  %v851 = vpop.f32.mrf.mxu0
  %852 = vmatprep.mubr.bf16.mxu0 %v321
  %853 = vmatmul.mubr.bf16.gmra.mxu0 %v320
  %v854 = vpop.f32.mrf.mxu0
  %v855 = vadd.f32 %v774, %v854
  %v856 = vpop.f32.mrf.mxu0
  %v857 = vpop.f32.mrf.mxu0
  %v858 = vadd.f32 %v777, %v857
  %v859 = vpop.f32.mrf.mxu0
  %860 = vmatprep.mubr.bf16.mxu0 %v328
  %861 = vmatmul.mubr.bf16.gmra.mxu0 %v327
  %v862 = vpop.f32.mrf.mxu0
  %v863 = vadd.f32 %v782, %v862
  %v864 = vpop.f32.mrf.mxu0
  %v865 = vpop.f32.mrf.mxu0
  %v866 = vadd.f32 %v785, %v865
  %v867 = vpop.f32.mrf.mxu0
  %868 = vmatprep.mubr.bf16.mxu0 %v335
  %869 = vmatmul.mubr.bf16.gmra.mxu0 %v334
  %v870 = vpop.f32.mrf.mxu0
  %v871 = vadd.f32 %v790, %v870
  %v872 = vpop.f32.mrf.mxu0
  %v873 = vpop.f32.mrf.mxu0
  %v874 = vadd.f32 %v793, %v873
  %v875 = vpop.f32.mrf.mxu0
  %876 = vmatprep.mubr.bf16.mxu0 %v342
  %877 = vmatmul.mubr.bf16.gmra.mxu0 %v341
  %v878 = vpop.f32.mrf.mxu0
  %v879 = vadd.f32 %v798, %v878
  %v880 = vpop.f32.mrf.mxu0
  %v881 = vpop.f32.mrf.mxu0
  %v882 = vadd.f32 %v801, %v881
  %v883 = vpop.f32.mrf.mxu0
  %884 = vmatprep.mubr.bf16.mxu0 %v349
  %885 = vmatmul.mubr.bf16.gmra.mxu0 %v348
  %v886 = vpop.f32.mrf.mxu0
  %v887 = vadd.f32 %v806, %v886
  %v888 = vpop.f32.mrf.mxu0
  %v889 = vpop.f32.mrf.mxu0
  %v890 = vadd.f32 %v809, %v889
  %v891 = vpop.f32.mrf.mxu0
  %892 = vdwg.mxu0
  %893 = vmatprep.subr.bf16.mxu0 0
  %894 = vmatpush1.bf16.msra.mxu0 %v658
  %895 = vmatprep.subr.bf16.mxu0 0
  %896 = vmatpush1.bf16.msra.mxu0 %v657
  %897 = vmatprep.subr.bf16.mxu0 0
  %898 = vmatpush1.bf16.msra.mxu0 %v656
  %899 = vmatprep.subr.bf16.mxu0 0
  %900 = vmatpush1.bf16.msra.mxu0 %v655
  %901 = vmatprep.subr.bf16.mxu0 0
  %902 = vmatpush1.bf16.msra.mxu0 %v654
  %903 = vmatprep.subr.bf16.mxu0 0
  %904 = vmatpush1.bf16.msra.mxu0 %v653
  %905 = vmatprep.subr.bf16.mxu0 0
  %906 = vmatpush1.bf16.msra.mxu0 %v652
  %907 = vmatprep.subr.bf16.mxu0 0
  %908 = vmatpush1.bf16.msra.mxu0 %v651
  %909 = vmatprep.subr.bf16.mxu0 0
  %910 = vmatpush2.bf16.msra.mxu0 %v666
  %911 = vmatprep.subr.bf16.mxu0 0
  %912 = vmatpush2.bf16.msra.mxu0 %v665
  %913 = vmatprep.subr.bf16.mxu0 0
  %914 = vmatpush2.bf16.msra.mxu0 %v664
  %915 = vmatprep.subr.bf16.mxu0 0
  %916 = vmatpush2.bf16.msra.mxu0 %v663
  %917 = vmatprep.subr.bf16.mxu0 0
  %918 = vmatpush2.bf16.msra.mxu0 %v662
  %919 = vmatprep.subr.bf16.mxu0 0
  %920 = vmatpush2.bf16.msra.mxu0 %v661
  %921 = vmatprep.subr.bf16.mxu0 0
  %922 = vmatpush2.bf16.msra.mxu0 %v660
  %923 = vmatprep.subr.bf16.mxu0 0
  %924 = vmatpush2.bf16.msra.mxu0 %v659
  %925 = vmatprep.mubr.bf16.mxu0 %v316
  %926 = vmatmul.mubr.bf16.gmra.mxu0 %v315
  %v927 = vpop.f32.mrf.mxu0
  %v928 = vadd.f32 %v847, %v927
  %v929 = vpop.f32.mrf.mxu0
  %v930 = vpop.f32.mrf.mxu0
  %v931 = vadd.f32 %v850, %v930
  %v932 = vpop.f32.mrf.mxu0
  %933 = vmatprep.mubr.bf16.mxu0 %v323
  %934 = vmatmul.mubr.bf16.gmra.mxu0 %v322
  %v935 = vpop.f32.mrf.mxu0
  %v936 = vadd.f32 %v855, %v935
  %v937 = vpop.f32.mrf.mxu0
  %v938 = vpop.f32.mrf.mxu0
  %v939 = vadd.f32 %v858, %v938
  %v940 = vpop.f32.mrf.mxu0
  %941 = vmatprep.mubr.bf16.mxu0 %v330
  %942 = vmatmul.mubr.bf16.gmra.mxu0 %v329
  %v943 = vpop.f32.mrf.mxu0
  %v944 = vadd.f32 %v863, %v943
  %v945 = vpop.f32.mrf.mxu0
  %v946 = vpop.f32.mrf.mxu0
  %v947 = vadd.f32 %v866, %v946
  %v948 = vpop.f32.mrf.mxu0
  %949 = vmatprep.mubr.bf16.mxu0 %v337
  %950 = vmatmul.mubr.bf16.gmra.mxu0 %v336
  %v951 = vpop.f32.mrf.mxu0
  %v952 = vadd.f32 %v871, %v951
  %v953 = vpop.f32.mrf.mxu0
  %v954 = vpop.f32.mrf.mxu0
  %v955 = vadd.f32 %v874, %v954
  %v956 = vpop.f32.mrf.mxu0
  %957 = vmatprep.mubr.bf16.mxu0 %v344
  %958 = vmatmul.mubr.bf16.gmra.mxu0 %v343
  %v959 = vpop.f32.mrf.mxu0
  %v960 = vadd.f32 %v879, %v959
  %v961 = vpop.f32.mrf.mxu0
  %v962 = vpop.f32.mrf.mxu0
  %v963 = vadd.f32 %v882, %v962
  %v964 = vpop.f32.mrf.mxu0
  %965 = vmatprep.mubr.bf16.mxu0 %v351
  %966 = vmatmul.mubr.bf16.gmra.mxu0 %v350
  %v967 = vpop.f32.mrf.mxu0
  %v968 = vadd.f32 %v887, %v967
  %v969 = vpop.f32.mrf.mxu0
  %v970 = vpop.f32.mrf.mxu0
  %v971 = vadd.f32 %v890, %v970
  %v972 = vpop.f32.mrf.mxu0
  %973 = vdwg.mxu0
  %974 = vmatprep.subr.bf16.mxu0 0
  %975 = vmatpush1.bf16.msra.mxu0 %v674
  %976 = vmatprep.subr.bf16.mxu0 0
  %977 = vmatpush1.bf16.msra.mxu0 %v673
  %978 = vmatprep.subr.bf16.mxu0 0
  %979 = vmatpush1.bf16.msra.mxu0 %v672
  %980 = vmatprep.subr.bf16.mxu0 0
  %981 = vmatpush1.bf16.msra.mxu0 %v671
  %982 = vmatprep.subr.bf16.mxu0 0
  %983 = vmatpush1.bf16.msra.mxu0 %v670
  %984 = vmatprep.subr.bf16.mxu0 0
  %985 = vmatpush1.bf16.msra.mxu0 %v669
  %986 = vmatprep.subr.bf16.mxu0 0
  %987 = vmatpush1.bf16.msra.mxu0 %v668
  %988 = vmatprep.subr.bf16.mxu0 0
  %989 = vmatpush1.bf16.msra.mxu0 %v667
  %990 = vmatprep.subr.bf16.mxu0 0
  %991 = vmatpush2.bf16.msra.mxu0 0
  %992 = vmatprep.subr.bf16.mxu0 0
  %993 = vmatpush2.bf16.msra.mxu0 0
  %994 = vmatprep.subr.bf16.mxu0 0
  %995 = vmatpush2.bf16.msra.mxu0 0
  %996 = vmatprep.subr.bf16.mxu0 0
  %997 = vmatpush2.bf16.msra.mxu0 0
  %998 = vmatprep.subr.bf16.mxu0 0
  %999 = vmatpush2.bf16.msra.mxu0 0
  %1000 = vmatprep.subr.bf16.mxu0 0
  %1001 = vmatpush2.bf16.msra.mxu0 0
  %1002 = vmatprep.subr.bf16.mxu0 0
  %1003 = vmatpush2.bf16.msra.mxu0 0
  %1004 = vmatprep.subr.bf16.mxu0 0
  %1005 = vmatpush2.bf16.msra.mxu0 0
  %1006 = vmatprep.mubr.bf16.mxu0 0
  %1007 = vmatmul.mubr.bf16.gmra.mxu0 %v317
  %v1008 = vpop.f32.mrf.mxu0
  %v1009 = vadd.f32 %v928, %v1008
  %v1010 = vpop.f32.mrf.mxu0
  %v1011 = vpop.f32.mrf.mxu0
  %v1012 = vadd.f32 %v931, %v1011
  %v1013 = vpop.f32.mrf.mxu0
  %1014 = vmatprep.mubr.bf16.mxu0 0
  %1015 = vmatmul.mubr.bf16.gmra.mxu0 %v324
  %v1016 = vpop.f32.mrf.mxu0
  %v1017 = vadd.f32 %v936, %v1016
  %v1018 = vpop.f32.mrf.mxu0
  %v1019 = vpop.f32.mrf.mxu0
  %v1020 = vadd.f32 %v939, %v1019
  %v1021 = vpop.f32.mrf.mxu0
  %1022 = vmatprep.mubr.bf16.mxu0 0
  %1023 = vmatmul.mubr.bf16.gmra.mxu0 %v331
  %v1024 = vpop.f32.mrf.mxu0
  %v1025 = vadd.f32 %v944, %v1024
  %v1026 = vpop.f32.mrf.mxu0
  %v1027 = vpop.f32.mrf.mxu0
  %v1028 = vadd.f32 %v947, %v1027
  %v1029 = vpop.f32.mrf.mxu0
  %1030 = vmatprep.mubr.bf16.mxu0 0
  %1031 = vmatmul.mubr.bf16.gmra.mxu0 %v338
  %v1032 = vpop.f32.mrf.mxu0
  %v1033 = vadd.f32 %v952, %v1032
  %v1034 = vpop.f32.mrf.mxu0
  %v1035 = vpop.f32.mrf.mxu0
  %v1036 = vadd.f32 %v955, %v1035
  %v1037 = vpop.f32.mrf.mxu0
  %1038 = vmatprep.mubr.bf16.mxu0 0
  %1039 = vmatmul.mubr.bf16.gmra.mxu0 %v345
  %v1040 = vpop.f32.mrf.mxu0
  %v1041 = vadd.f32 %v960, %v1040
  %v1042 = vpop.f32.mrf.mxu0
  %v1043 = vpop.f32.mrf.mxu0
  %v1044 = vadd.f32 %v963, %v1043
  %v1045 = vpop.f32.mrf.mxu0
  %1046 = vmatprep.mubr.bf16.mxu0 0
  %1047 = vmatmul.mubr.bf16.gmra.mxu0 %v352
  %v1048 = vpop.f32.mrf.mxu0
  %v1049 = vadd.f32 %v968, %v1048
  %v1050 = vpop.f32.mrf.mxu0
  %v1051 = vpop.f32.mrf.mxu0
  %v1052 = vadd.f32 %v971, %v1051
  %v1053 = vpop.f32.mrf.mxu0
  %1054 = vdwg.mxu0
  %v1055 = vld [vmem:[%s3] sm:$0x3]
  %v1056 = vadd.f32 %v1009, %v1012
  %v1057 = vadd.f32 %v1056, %v1017
  %v1058 = vadd.f32 %v1057, %v1020
  %v1059 = vadd.f32 %v1058, %v1025
  %v1060 = vadd.f32 %v1059, %v1028
  %v1061 = vadd.f32 %v1060, %v1033
  %v1062 = vadd.f32 %v1061, %v1036
  %v1063 = vadd.f32 %v1062, %v1041
  %v1064 = vadd.f32 %v1063, %v1044
  %v1065 = vadd.f32 %v1064, %v1049
  %v1066 = vadd.f32 %v1065, %v1052
  %v1067 = vrot.slane %v1066, 4
  %v1068 = vadd.f32 %v1066, %v1067
  %v1069 = vrot.slane %v1068, 2
  %v1070 = vadd.f32 %v1068, %v1069
  %v1071 = vrot.slane %v1070, 1
  %v1072 = vadd.f32 %v1070, %v1071
  %v1073 = vmul.f32 %v1009, %v1009
  %v1074 = vmul.f32 %v1012, %v1012
  %v1075 = vmul.f32 %v1017, %v1017
  %v1076 = vmul.f32 %v1020, %v1020
  %v1077 = vmul.f32 %v1025, %v1025
  %v1078 = vmul.f32 %v1028, %v1028
  %v1079 = vmul.f32 %v1033, %v1033
  %v1080 = vmul.f32 %v1036, %v1036
  %v1081 = vmul.f32 %v1041, %v1041
  %v1082 = vmul.f32 %v1044, %v1044
  %v1083 = vmul.f32 %v1049, %v1049
  %v1084 = vmul.f32 %v1052, %v1052
  %v1085 = vadd.f32 %v1073, %v1074
  %v1086 = vadd.f32 %v1085, %v1075
  %v1087 = vadd.f32 %v1086, %v1076
  %v1088 = vadd.f32 %v1087, %v1077
  %v1089 = vadd.f32 %v1088, %v1078
  %v1090 = vadd.f32 %v1089, %v1079
  %v1091 = vadd.f32 %v1090, %v1080
  %v1092 = vadd.f32 %v1091, %v1081
  %v1093 = vadd.f32 %v1092, %v1082
  %v1094 = vadd.f32 %v1093, %v1083
  %v1095 = vadd.f32 %v1094, %v1084
  %v1096 = vrot.slane %v1095, 4
  %v1097 = vadd.f32 %v1095, %v1096
  %v1098 = vrot.slane %v1097, 2
  %v1099 = vadd.f32 %v1097, %v1098
  %v1100 = vrot.slane %v1099, 1
  %v1101 = vadd.f32 %v1099, %v1100
  %vm1102 = vcmask 1040384
  %v1103 = vsel %vm1102, %v1072, %v1101
  %v1104 = vadd.f32 %v1055, %v1103
  %1105 = vst [vmem:[%s3] sm:$0x3] %v1104
  %v1106 = vpack.c.bf16 %v1012, %v1009
  %v1107 = vpack.c.bf16 %v1020, %v1017
  %v1108 = vpack.c.bf16 %v1028, %v1025
  %v1109 = vpack.c.bf16 %v1036, %v1033
  %v1110 = vpack.c.bf16 %v1044, %v1041
  %v1111 = vpack.c.bf16 %v1052, %v1049
  %v1118 = vunpack.c.l.b16 %v1106
  %v1119 = vunpack.c.h.b16 %v1106
  %v1120 = vunpack.c.l.b16 %v1107
  %v1121 = vunpack.c.h.b16 %v1107
  %v1122 = vunpack.c.l.b16 %v1108
  %v1123 = vunpack.c.h.b16 %v1108
  %v1124 = vunpack.c.l.b16 %v1109
  %v1125 = vunpack.c.h.b16 %v1109
  %v1126 = vunpack.c.l.b16 %v1110
  %v1127 = vunpack.c.h.b16 %v1110
  %v1128 = vunpack.c.l.b16 %v1111
  %v1129 = vunpack.c.h.b16 %v1111
  %v1130 = vpack.c.b16 %v1118, %v1118
  %v1131 = vpack.c.b16 %v1119, %v1119
  %v1132 = vpack.c.b16 %v1120, %v1120
  %v1133 = vpack.c.b16 %v1121, %v1121
  %v1134 = vpack.c.b16 %v1122, %v1122
  %v1135 = vpack.c.b16 %v1123, %v1123
  %v1136 = vpack.c.b16 %v1124, %v1124
  %v1137 = vpack.c.b16 %v1125, %v1125
  %v1138 = vpack.c.b16 %v1126, %v1126
  %v1139 = vpack.c.b16 %v1127, %v1127
  %v1140 = vpack.c.b16 %v1128, %v1128
  %v1141 = vpack.c.b16 %v1129, %v1129
  %1154 = vst [vmem:[%s2] sm:$0xf] %v1130
  %1155 = vst [vmem:[%s2 + $0x4] sm:$0xf] %v1131
  %1156 = vst [vmem:[%s2 + $0x8] sm:$0xf] %v1132
  %1157 = vst [vmem:[%s2 + $0xc] sm:$0xf] %v1133
  %1158 = vst [vmem:[%s2 + $0x10] sm:$0xf] %v1134
  %1159 = vst [vmem:[%s2 + $0x14] sm:$0xf] %v1135
  %1160 = vst [vmem:[%s2 + $0x18] sm:$0xf] %v1136
  %1161 = vst [vmem:[%s2 + $0x1c] sm:$0xf] %v1137
  %1162 = vst [vmem:[%s2 + $0x20] sm:$0xf] %v1138
  %1163 = vst [vmem:[%s2 + $0x24] sm:$0xf] %v1139
  %1164 = vst [vmem:[%s2 + $0x28] sm:$0xf] %v1140
  %1165 = vst [vmem:[%s2 + $0x2c] sm:$0xf] %v1141
  // Predicated region
  $region14: #{wcnn_forward.10} parent=0 // pred_check
    _
  $region15: #{wcnn_forward.10} parent=0 // pred_check_branch
    %1167 = sbr.rel (0) target = $region17
  $region16: #{wcnn_forward.10} parent=0 // pred_region
    _
  $region17: #{wcnn_forward.10} parent=0 // pred_fallthru
    _
  // Predicated region
  $region18: #{wcnn_forward.10} parent=0 // pred_check
    _
  $region19: #{wcnn_forward.10} parent=0 // pred_check_branch
    %1169 = sbr.rel (0) target = $region21
  $region20: #{wcnn_forward.10} parent=0 // pred_region
    _
  $region21: #{wcnn_forward.10} parent=0 // pred_fallthru
    _
  // Predicated region
  $region22: #{wcnn_forward.10} parent=0 // pred_check
    _
  $region23: #{wcnn_forward.10} parent=0 // pred_check_branch
    %1171 = sbr.rel (0) target = $region25
  $region24: #{wcnn_forward.10} parent=0 // pred_region
    _
  $region25: #{wcnn_forward.10} parent=0 // pred_fallthru
    _
  // Predicated region
  $region26: #{wcnn_forward.10} parent=0 // pred_check
    _
  $region27: #{wcnn_forward.10} parent=0 // pred_check_branch
    %1173 = sbr.rel (0) target = $region29
  $region28: #{wcnn_forward.10} parent=0 // pred_region
    _
  $region29: #{wcnn_forward.10} parent=0 // pred_fallthru
    _

// kernel: wcnn_forward.12
$region0: #{wcnn_forward.12}
  #allocation0 [shape = 'u32[]', space=smem, size = 0x4, offset = 0x4, fixed_abs, tag = 'smem constant byte address 0x4 - core index']
  #allocation1 [shape = 'u32[144,128]{1,0:T(1,128)}', space=vmem, size = 0x12000, scoped, tag = 'internal scratch']
  %s0 = inlined_call_operand.vmem [shape: bf16[96,384], index: 0, kind: input, shape index: {}]
  %s1 = inlined_call_operand.vmem [shape: bf16[384,256], index: 1, kind: input, shape index: {}]
  %s2 = inlined_call_operand.vmem [shape: bf16[96,256], index: 2, kind: output, shape index: {0}]
  %s3 = inlined_call_operand.vmem [shape: f32[2,256], index: 3, kind: output, shape index: {1}]
  %4 = xla_tuple %s2, %s3
  %s5 = sld [smem:[#allocation0]]
  $region30: #{wcnn_forward.12} parent=0
    _
  %s7 = ssub.s32 1, %s5
  %s8 = scalar_select 0, %s7, %s5
  // Predicated region
  $region2: #{wcnn_forward.12} parent=0 // pred_check
    _
  $region3: #{wcnn_forward.12} parent=0 // pred_check_branch
    %10 = sbr.rel (0) target = $region5
  $region4: #{wcnn_forward.12} parent=0 // pred_region
    _
  $region5: #{wcnn_forward.12} parent=0 // pred_fallthru
    _
  // Predicated region
  $region6: #{wcnn_forward.12} parent=0 // pred_check
    _
  $region7: #{wcnn_forward.12} parent=0 // pred_check_branch
    %12 = sbr.rel (0) target = $region9
  $region8: #{wcnn_forward.12} parent=0 // pred_region
    _
  $region9: #{wcnn_forward.12} parent=0 // pred_fallthru
    _
  %p14 = scmp.eq.s32.totalorder 0, 0
  // Predicated region
  $region10: #{wcnn_forward.12} parent=0 // pred_check
    %p15 = pneg %p14
  $region11: #{wcnn_forward.12} parent=0 // pred_check_branch
    %17 = sbr.rel (%p15) target = $region13
  $region12: #{wcnn_forward.12} parent=0 // pred_region
    %18 = vst [vmem:[%s3] sm:$0xf] 0.0
  $region13: #{wcnn_forward.12} parent=0 // pred_fallthru
    _
  %v19 = vld [vmem:[%s0] sm:$0xff]
  %v20 = vld [vmem:[%s0 + $0x8] sm:$0xf]
  %v21 = vld [vmem:[%s0 + $0xc] sm:$0xff]
  %v22 = vld [vmem:[%s0 + $0x14] sm:$0xf]
  %v23 = vld [vmem:[%s0 + $0x18] sm:$0xff]
  %v24 = vld [vmem:[%s0 + $0x20] sm:$0xf]
  %v25 = vld [vmem:[%s0 + $0x24] sm:$0xff]
  %v26 = vld [vmem:[%s0 + $0x2c] sm:$0xf]
  %v27 = vld [vmem:[%s0 + $0x30] sm:$0xff]
  %v28 = vld [vmem:[%s0 + $0x38] sm:$0xf]
  %v29 = vld [vmem:[%s0 + $0x3c] sm:$0xff]
  %v30 = vld [vmem:[%s0 + $0x44] sm:$0xf]
  %v31 = vld [vmem:[%s0 + $0x48] sm:$0xff]
  %v32 = vld [vmem:[%s0 + $0x50] sm:$0xf]
  %v33 = vld [vmem:[%s0 + $0x54] sm:$0xff]
  %v34 = vld [vmem:[%s0 + $0x5c] sm:$0xf]
  %v35 = vld [vmem:[%s0 + $0x60] sm:$0xff]
  %v36 = vld [vmem:[%s0 + $0x68] sm:$0xf]
  %v37 = vld [vmem:[%s0 + $0x6c] sm:$0xff]
  %v38 = vld [vmem:[%s0 + $0x74] sm:$0xf]
  %v39 = vld [vmem:[%s0 + $0x78] sm:$0xff]
  %v40 = vld [vmem:[%s0 + $0x80] sm:$0xf]
  %v41 = vld [vmem:[%s0 + $0x84] sm:$0xff]
  %v42 = vld [vmem:[%s0 + $0x8c] sm:$0xf]
  %v43 = vld [vmem:[%s1] sm:$0xff]
  %v44 = vld [vmem:[%s1 + $0x8] sm:$0xff]
  %v45 = vld [vmem:[%s1 + $0x10] sm:$0xff]
  %v46 = vld [vmem:[%s1 + $0x18] sm:$0xff]
  %v47 = vld [vmem:[%s1 + $0x20] sm:$0xff]
  %v48 = vld [vmem:[%s1 + $0x28] sm:$0xff]
  %v49 = vld [vmem:[%s1 + $0x30] sm:$0xff]
  %v50 = vld [vmem:[%s1 + $0x38] sm:$0xff]
  %v51 = vld [vmem:[%s1 + $0x40] sm:$0xff]
  %v52 = vld [vmem:[%s1 + $0x48] sm:$0xff]
  %v53 = vld [vmem:[%s1 + $0x50] sm:$0xff]
  %v54 = vld [vmem:[%s1 + $0x58] sm:$0xff]
  %v55 = vld [vmem:[%s1 + $0x60] sm:$0xff]
  %v56 = vld [vmem:[%s1 + $0x68] sm:$0xff]
  %v57 = vld [vmem:[%s1 + $0x70] sm:$0xff]
  %v58 = vld [vmem:[%s1 + $0x78] sm:$0xff]
  %v59 = vld [vmem:[%s1 + $0x80] sm:$0xff]
  %v60 = vld [vmem:[%s1 + $0x88] sm:$0xff]
  %v61 = vld [vmem:[%s1 + $0x90] sm:$0xff]
  %v62 = vld [vmem:[%s1 + $0x98] sm:$0xff]
  %v63 = vld [vmem:[%s1 + $0xa0] sm:$0xff]
  %v64 = vld [vmem:[%s1 + $0xa8] sm:$0xff]
  %v65 = vld [vmem:[%s1 + $0xb0] sm:$0xff]
  %v66 = vld [vmem:[%s1 + $0xb8] sm:$0xff]
  %v67 = vld [vmem:[%s1 + $0xc0] sm:$0xff]
  %v68 = vld [vmem:[%s1 + $0xc8] sm:$0xff]
  %v69 = vld [vmem:[%s1 + $0xd0] sm:$0xff]
  %v70 = vld [vmem:[%s1 + $0xd8] sm:$0xff]
  %v71 = vld [vmem:[%s1 + $0xe0] sm:$0xff]
  %v72 = vld [vmem:[%s1 + $0xe8] sm:$0xff]
  %v73 = vld [vmem:[%s1 + $0xf0] sm:$0xff]
  %v74 = vld [vmem:[%s1 + $0xf8] sm:$0xff]
  %v75 = vld [vmem:[%s1 + $0x100] sm:$0xff]
  %v76 = vld [vmem:[%s1 + $0x108] sm:$0xff]
  %v77 = vld [vmem:[%s1 + $0x110] sm:$0xff]
  %v78 = vld [vmem:[%s1 + $0x118] sm:$0xff]
  %v79 = vld [vmem:[%s1 + $0x120] sm:$0xff]
  %v80 = vld [vmem:[%s1 + $0x128] sm:$0xff]
  %v81 = vld [vmem:[%s1 + $0x130] sm:$0xff]
  %v82 = vld [vmem:[%s1 + $0x138] sm:$0xff]
  %v83 = vld [vmem:[%s1 + $0x140] sm:$0xff]
  %v84 = vld [vmem:[%s1 + $0x148] sm:$0xff]
  %v85 = vld [vmem:[%s1 + $0x150] sm:$0xff]
  %v86 = vld [vmem:[%s1 + $0x158] sm:$0xff]
  %v87 = vld [vmem:[%s1 + $0x160] sm:$0xff]
  %v88 = vld [vmem:[%s1 + $0x168] sm:$0xff]
  %v89 = vld [vmem:[%s1 + $0x170] sm:$0xff]
  %v90 = vld [vmem:[%s1 + $0x178] sm:$0xff]
  %v115 = vunpack.c.l.b16 %v19
  %v116 = vunpack.c.h.b16 %v19
  %v117 = vunpack.c.l.b16 %v20
  %v118 = vunpack.c.l.b16 %v21
  %v119 = vunpack.c.h.b16 %v21
  %v120 = vunpack.c.l.b16 %v22
  %v121 = vunpack.c.l.b16 %v23
  %v122 = vunpack.c.h.b16 %v23
  %v123 = vunpack.c.l.b16 %v24
  %v124 = vunpack.c.l.b16 %v25
  %v125 = vunpack.c.h.b16 %v25
  %v126 = vunpack.c.l.b16 %v26
  %v127 = vunpack.c.l.b16 %v27
  %v128 = vunpack.c.h.b16 %v27
  %v129 = vunpack.c.l.b16 %v28
  %v130 = vunpack.c.l.b16 %v29
  %v131 = vunpack.c.h.b16 %v29
  %v132 = vunpack.c.l.b16 %v30
  %v133 = vunpack.c.l.b16 %v31
  %v134 = vunpack.c.h.b16 %v31
  %v135 = vunpack.c.l.b16 %v32
  %v136 = vunpack.c.l.b16 %v33
  %v137 = vunpack.c.h.b16 %v33
  %v138 = vunpack.c.l.b16 %v34
  %v139 = vunpack.c.l.b16 %v35
  %v140 = vunpack.c.h.b16 %v35
  %v141 = vunpack.c.l.b16 %v36
  %v142 = vunpack.c.l.b16 %v37
  %v143 = vunpack.c.h.b16 %v37
  %v144 = vunpack.c.l.b16 %v38
  %v145 = vunpack.c.l.b16 %v39
  %v146 = vunpack.c.h.b16 %v39
  %v147 = vunpack.c.l.b16 %v40
  %v148 = vunpack.c.l.b16 %v41
  %v149 = vunpack.c.h.b16 %v41
  %v150 = vunpack.c.l.b16 %v42
  %v151 = vpack.c.b16 %v118, %v115
  %v152 = vpack.c.b16 %v119, %v116
  %v153 = vpack.c.b16 %v120, %v117
  %v154 = vpack.c.b16 %v124, %v121
  %v155 = vpack.c.b16 %v125, %v122
  %v156 = vpack.c.b16 %v126, %v123
  %v157 = vpack.c.b16 %v130, %v127
  %v158 = vpack.c.b16 %v131, %v128
  %v159 = vpack.c.b16 %v132, %v129
  %v160 = vpack.c.b16 %v136, %v133
  %v161 = vpack.c.b16 %v137, %v134
  %v162 = vpack.c.b16 %v138, %v135
  %v163 = vpack.c.b16 %v142, %v139
  %v164 = vpack.c.b16 %v143, %v140
  %v165 = vpack.c.b16 %v144, %v141
  %v166 = vpack.c.b16 %v148, %v145
  %v167 = vpack.c.b16 %v149, %v146
  %v168 = vpack.c.b16 %v150, %v147
  %v235 = vunpack.c.l.b16 %v43
  %v236 = vunpack.c.h.b16 %v43
  %v237 = vunpack.c.l.b16 %v44
  %v238 = vunpack.c.h.b16 %v44
  %v239 = vunpack.c.l.b16 %v45
  %v240 = vunpack.c.h.b16 %v45
  %v241 = vunpack.c.l.b16 %v46
  %v242 = vunpack.c.h.b16 %v46
  %v243 = vunpack.c.l.b16 %v47
  %v244 = vunpack.c.h.b16 %v47
  %v245 = vunpack.c.l.b16 %v48
  %v246 = vunpack.c.h.b16 %v48
  %v247 = vunpack.c.l.b16 %v49
  %v248 = vunpack.c.h.b16 %v49
  %v249 = vunpack.c.l.b16 %v50
  %v250 = vunpack.c.h.b16 %v50
  %v251 = vunpack.c.l.b16 %v51
  %v252 = vunpack.c.h.b16 %v51
  %v253 = vunpack.c.l.b16 %v52
  %v254 = vunpack.c.h.b16 %v52
  %v255 = vunpack.c.l.b16 %v53
  %v256 = vunpack.c.h.b16 %v53
  %v257 = vunpack.c.l.b16 %v54
  %v258 = vunpack.c.h.b16 %v54
  %v259 = vunpack.c.l.b16 %v55
  %v260 = vunpack.c.h.b16 %v55
  %v261 = vunpack.c.l.b16 %v56
  %v262 = vunpack.c.h.b16 %v56
  %v263 = vunpack.c.l.b16 %v57
  %v264 = vunpack.c.h.b16 %v57
  %v265 = vunpack.c.l.b16 %v58
  %v266 = vunpack.c.h.b16 %v58
  %v267 = vunpack.c.l.b16 %v59
  %v268 = vunpack.c.h.b16 %v59
  %v269 = vunpack.c.l.b16 %v60
  %v270 = vunpack.c.h.b16 %v60
  %v271 = vunpack.c.l.b16 %v61
  %v272 = vunpack.c.h.b16 %v61
  %v273 = vunpack.c.l.b16 %v62
  %v274 = vunpack.c.h.b16 %v62
  %v275 = vunpack.c.l.b16 %v63
  %v276 = vunpack.c.h.b16 %v63
  %v277 = vunpack.c.l.b16 %v64
  %v278 = vunpack.c.h.b16 %v64
  %v279 = vunpack.c.l.b16 %v65
  %v280 = vunpack.c.h.b16 %v65
  %v281 = vunpack.c.l.b16 %v66
  %v282 = vunpack.c.h.b16 %v66
  %v283 = vunpack.c.l.b16 %v67
  %v284 = vunpack.c.h.b16 %v67
  %v285 = vunpack.c.l.b16 %v68
  %v286 = vunpack.c.h.b16 %v68
  %v287 = vunpack.c.l.b16 %v69
  %v288 = vunpack.c.h.b16 %v69
  %v289 = vunpack.c.l.b16 %v70
  %v290 = vunpack.c.h.b16 %v70
  %v291 = vunpack.c.l.b16 %v71
  %v292 = vunpack.c.h.b16 %v71
  %v293 = vunpack.c.l.b16 %v72
  %v294 = vunpack.c.h.b16 %v72
  %v295 = vunpack.c.l.b16 %v73
  %v296 = vunpack.c.h.b16 %v73
  %v297 = vunpack.c.l.b16 %v74
  %v298 = vunpack.c.h.b16 %v74
  %v299 = vunpack.c.l.b16 %v75
  %v300 = vunpack.c.h.b16 %v75
  %v301 = vunpack.c.l.b16 %v76
  %v302 = vunpack.c.h.b16 %v76
  %v303 = vunpack.c.l.b16 %v77
  %v304 = vunpack.c.h.b16 %v77
  %v305 = vunpack.c.l.b16 %v78
  %v306 = vunpack.c.h.b16 %v78
  %v307 = vunpack.c.l.b16 %v79
  %v308 = vunpack.c.h.b16 %v79
  %v309 = vunpack.c.l.b16 %v80
  %v310 = vunpack.c.h.b16 %v80
  %v311 = vunpack.c.l.b16 %v81
  %v312 = vunpack.c.h.b16 %v81
  %v313 = vunpack.c.l.b16 %v82
  %v314 = vunpack.c.h.b16 %v82
  %v315 = vunpack.c.l.b16 %v83
  %v316 = vunpack.c.h.b16 %v83
  %v317 = vunpack.c.l.b16 %v84
  %v318 = vunpack.c.h.b16 %v84
  %v319 = vunpack.c.l.b16 %v85
  %v320 = vunpack.c.h.b16 %v85
  %v321 = vunpack.c.l.b16 %v86
  %v322 = vunpack.c.h.b16 %v86
  %v323 = vunpack.c.l.b16 %v87
  %v324 = vunpack.c.h.b16 %v87
  %v325 = vunpack.c.l.b16 %v88
  %v326 = vunpack.c.h.b16 %v88
  %v327 = vunpack.c.l.b16 %v89
  %v328 = vunpack.c.h.b16 %v89
  %v329 = vunpack.c.l.b16 %v90
  %v330 = vunpack.c.h.b16 %v90
  %v331 = vpack.c.b16 %v237, %v235
  %v332 = vpack.c.b16 %v238, %v236
  %v333 = vpack.c.b16 %v241, %v239
  %v334 = vpack.c.b16 %v242, %v240
  %v335 = vpack.c.b16 %v245, %v243
  %v336 = vpack.c.b16 %v246, %v244
  %v337 = vpack.c.b16 %v249, %v247
  %v338 = vpack.c.b16 %v250, %v248
  %v339 = vpack.c.b16 %v253, %v251
  %v340 = vpack.c.b16 %v254, %v252
  %v341 = vpack.c.b16 %v257, %v255
  %v342 = vpack.c.b16 %v258, %v256
  %v343 = vpack.c.b16 %v261, %v259
  %v344 = vpack.c.b16 %v262, %v260
  %v345 = vpack.c.b16 %v265, %v263
  %v346 = vpack.c.b16 %v266, %v264
  %v347 = vpack.c.b16 %v269, %v267
  %v348 = vpack.c.b16 %v270, %v268
  %v349 = vpack.c.b16 %v273, %v271
  %v350 = vpack.c.b16 %v274, %v272
  %v351 = vpack.c.b16 %v277, %v275
  %v352 = vpack.c.b16 %v278, %v276
  %v353 = vpack.c.b16 %v281, %v279
  %v354 = vpack.c.b16 %v282, %v280
  %v355 = vpack.c.b16 %v285, %v283
  %v356 = vpack.c.b16 %v286, %v284
  %v357 = vpack.c.b16 %v289, %v287
  %v358 = vpack.c.b16 %v290, %v288
  %v359 = vpack.c.b16 %v293, %v291
  %v360 = vpack.c.b16 %v294, %v292
  %v361 = vpack.c.b16 %v297, %v295
  %v362 = vpack.c.b16 %v298, %v296
  %v363 = vpack.c.b16 %v301, %v299
  %v364 = vpack.c.b16 %v302, %v300
  %v365 = vpack.c.b16 %v305, %v303
  %v366 = vpack.c.b16 %v306, %v304
  %v367 = vpack.c.b16 %v309, %v307
  %v368 = vpack.c.b16 %v310, %v308
  %v369 = vpack.c.b16 %v313, %v311
  %v370 = vpack.c.b16 %v314, %v312
  %v371 = vpack.c.b16 %v317, %v315
  %v372 = vpack.c.b16 %v318, %v316
  %v373 = vpack.c.b16 %v321, %v319
  %v374 = vpack.c.b16 %v322, %v320
  %v375 = vpack.c.b16 %v325, %v323
  %v376 = vpack.c.b16 %v326, %v324
  %v377 = vpack.c.b16 %v329, %v327
  %v378 = vpack.c.b16 %v330, %v328
  %427 = vmatprep.subr.bf16.mxu0 %v346
  %428 = vmatpush1.bf16.msra.mxu0 %v345
  %429 = vmatprep.subr.bf16.mxu0 %v344
  %430 = vmatpush1.bf16.msra.mxu0 %v343
  %431 = vmatprep.subr.bf16.mxu0 %v342
  %432 = vmatpush1.bf16.msra.mxu0 %v341
  %433 = vmatprep.subr.bf16.mxu0 %v340
  %434 = vmatpush1.bf16.msra.mxu0 %v339
  %435 = vmatprep.subr.bf16.mxu0 %v338
  %436 = vmatpush1.bf16.msra.mxu0 %v337
  %437 = vmatprep.subr.bf16.mxu0 %v336
  %438 = vmatpush1.bf16.msra.mxu0 %v335
  %439 = vmatprep.subr.bf16.mxu0 %v334
  %440 = vmatpush1.bf16.msra.mxu0 %v333
  %441 = vmatprep.subr.bf16.mxu0 %v332
  %442 = vmatpush1.bf16.msra.mxu0 %v331
  %443 = vmatprep.subr.bf16.mxu0 %v362
  %444 = vmatpush2.bf16.msra.mxu0 %v361
  %445 = vmatprep.subr.bf16.mxu0 %v360
  %446 = vmatpush2.bf16.msra.mxu0 %v359
  %447 = vmatprep.subr.bf16.mxu0 %v358
  %448 = vmatpush2.bf16.msra.mxu0 %v357
  %449 = vmatprep.subr.bf16.mxu0 %v356
  %450 = vmatpush2.bf16.msra.mxu0 %v355
  %451 = vmatprep.subr.bf16.mxu0 %v354
  %452 = vmatpush2.bf16.msra.mxu0 %v353
  %453 = vmatprep.subr.bf16.mxu0 %v352
  %454 = vmatpush2.bf16.msra.mxu0 %v351
  %455 = vmatprep.subr.bf16.mxu0 %v350
  %456 = vmatpush2.bf16.msra.mxu0 %v349
  %457 = vmatprep.subr.bf16.mxu0 %v348
  %458 = vmatpush2.bf16.msra.mxu0 %v347
  %459 = vmatprep.mubr.bf16.mxu0 %v152
  %460 = vmatmul.mubr.bf16.gmra.mxu0 %v151
  %v461 = vpop.f32.mrf.mxu0
  %v462 = vadd.f32 0.0, %v461
  %v463 = vpop.f32.mrf.mxu0
  %v464 = vadd.f32 0.0, %v463
  %v465 = vpop.f32.mrf.mxu0
  %v466 = vadd.f32 0.0, %v465
  %v467 = vpop.f32.mrf.mxu0
  %v468 = vadd.f32 0.0, %v467
  %469 = vmatprep.mubr.bf16.mxu0 %v155
  %470 = vmatmul.mubr.bf16.gmra.mxu0 %v154
  %v471 = vpop.f32.mrf.mxu0
  %v472 = vadd.f32 0.0, %v471
  %v473 = vpop.f32.mrf.mxu0
  %v474 = vadd.f32 0.0, %v473
  %v475 = vpop.f32.mrf.mxu0
  %v476 = vadd.f32 0.0, %v475
  %v477 = vpop.f32.mrf.mxu0
  %v478 = vadd.f32 0.0, %v477
  %479 = vmatprep.mubr.bf16.mxu0 %v158
  %480 = vmatmul.mubr.bf16.gmra.mxu0 %v157
  %v481 = vpop.f32.mrf.mxu0
  %v482 = vadd.f32 0.0, %v481
  %v483 = vpop.f32.mrf.mxu0
  %v484 = vadd.f32 0.0, %v483
  %v485 = vpop.f32.mrf.mxu0
  %v486 = vadd.f32 0.0, %v485
  %v487 = vpop.f32.mrf.mxu0
  %v488 = vadd.f32 0.0, %v487
  %489 = vmatprep.mubr.bf16.mxu0 %v161
  %490 = vmatmul.mubr.bf16.gmra.mxu0 %v160
  %v491 = vpop.f32.mrf.mxu0
  %v492 = vadd.f32 0.0, %v491
  %v493 = vpop.f32.mrf.mxu0
  %v494 = vadd.f32 0.0, %v493
  %v495 = vpop.f32.mrf.mxu0
  %v496 = vadd.f32 0.0, %v495
  %v497 = vpop.f32.mrf.mxu0
  %v498 = vadd.f32 0.0, %v497
  %499 = vmatprep.mubr.bf16.mxu0 %v164
  %500 = vmatmul.mubr.bf16.gmra.mxu0 %v163
  %v501 = vpop.f32.mrf.mxu0
  %v502 = vadd.f32 0.0, %v501
  %v503 = vpop.f32.mrf.mxu0
  %v504 = vadd.f32 0.0, %v503
  %v505 = vpop.f32.mrf.mxu0
  %v506 = vadd.f32 0.0, %v505
  %v507 = vpop.f32.mrf.mxu0
  %v508 = vadd.f32 0.0, %v507
  %509 = vmatprep.mubr.bf16.mxu0 %v167
  %510 = vmatmul.mubr.bf16.gmra.mxu0 %v166
  %v511 = vpop.f32.mrf.mxu0
  %v512 = vadd.f32 0.0, %v511
  %v513 = vpop.f32.mrf.mxu0
  %v514 = vadd.f32 0.0, %v513
  %v515 = vpop.f32.mrf.mxu0
  %v516 = vadd.f32 0.0, %v515
  %v517 = vpop.f32.mrf.mxu0
  %v518 = vadd.f32 0.0, %v517
  %519 = vdwg.mxu0
  %520 = vmatprep.subr.bf16.mxu0 %v378
  %521 = vmatpush1.bf16.msra.mxu0 %v377
  %522 = vmatprep.subr.bf16.mxu0 %v376
  %523 = vmatpush1.bf16.msra.mxu0 %v375
  %524 = vmatprep.subr.bf16.mxu0 %v374
  %525 = vmatpush1.bf16.msra.mxu0 %v373
  %526 = vmatprep.subr.bf16.mxu0 %v372
  %527 = vmatpush1.bf16.msra.mxu0 %v371
  %528 = vmatprep.subr.bf16.mxu0 %v370
  %529 = vmatpush1.bf16.msra.mxu0 %v369
  %530 = vmatprep.subr.bf16.mxu0 %v368
  %531 = vmatpush1.bf16.msra.mxu0 %v367
  %532 = vmatprep.subr.bf16.mxu0 %v366
  %533 = vmatpush1.bf16.msra.mxu0 %v365
  %534 = vmatprep.subr.bf16.mxu0 %v364
  %535 = vmatpush1.bf16.msra.mxu0 %v363
  %536 = vmatprep.subr.bf16.mxu0 0
  %537 = vmatpush2.bf16.msra.mxu0 0
  %538 = vmatprep.subr.bf16.mxu0 0
  %539 = vmatpush2.bf16.msra.mxu0 0
  %540 = vmatprep.subr.bf16.mxu0 0
  %541 = vmatpush2.bf16.msra.mxu0 0
  %542 = vmatprep.subr.bf16.mxu0 0
  %543 = vmatpush2.bf16.msra.mxu0 0
  %544 = vmatprep.subr.bf16.mxu0 0
  %545 = vmatpush2.bf16.msra.mxu0 0
  %546 = vmatprep.subr.bf16.mxu0 0
  %547 = vmatpush2.bf16.msra.mxu0 0
  %548 = vmatprep.subr.bf16.mxu0 0
  %549 = vmatpush2.bf16.msra.mxu0 0
  %550 = vmatprep.subr.bf16.mxu0 0
  %551 = vmatpush2.bf16.msra.mxu0 0
  %552 = vmatprep.mubr.bf16.mxu0 0
  %553 = vmatmul.mubr.bf16.gmra.mxu0 %v153
  %v554 = vpop.f32.mrf.mxu0
  %v555 = vadd.f32 %v462, %v554
  %v556 = vpop.f32.mrf.mxu0
  %v557 = vadd.f32 %v464, %v556
  %v558 = vpop.f32.mrf.mxu0
  %v559 = vadd.f32 %v466, %v558
  %v560 = vpop.f32.mrf.mxu0
  %v561 = vadd.f32 %v468, %v560
  %562 = vmatprep.mubr.bf16.mxu0 0
  %563 = vmatmul.mubr.bf16.gmra.mxu0 %v156
  %v564 = vpop.f32.mrf.mxu0
  %v565 = vadd.f32 %v472, %v564
  %v566 = vpop.f32.mrf.mxu0
  %v567 = vadd.f32 %v474, %v566
  %v568 = vpop.f32.mrf.mxu0
  %v569 = vadd.f32 %v476, %v568
  %v570 = vpop.f32.mrf.mxu0
  %v571 = vadd.f32 %v478, %v570
  %572 = vmatprep.mubr.bf16.mxu0 0
  %573 = vmatmul.mubr.bf16.gmra.mxu0 %v159
  %v574 = vpop.f32.mrf.mxu0
  %v575 = vadd.f32 %v482, %v574
  %v576 = vpop.f32.mrf.mxu0
  %v577 = vadd.f32 %v484, %v576
  %v578 = vpop.f32.mrf.mxu0
  %v579 = vadd.f32 %v486, %v578
  %v580 = vpop.f32.mrf.mxu0
  %v581 = vadd.f32 %v488, %v580
  %582 = vmatprep.mubr.bf16.mxu0 0
  %583 = vmatmul.mubr.bf16.gmra.mxu0 %v162
  %v584 = vpop.f32.mrf.mxu0
  %v585 = vadd.f32 %v492, %v584
  %v586 = vpop.f32.mrf.mxu0
  %v587 = vadd.f32 %v494, %v586
  %v588 = vpop.f32.mrf.mxu0
  %v589 = vadd.f32 %v496, %v588
  %v590 = vpop.f32.mrf.mxu0
  %v591 = vadd.f32 %v498, %v590
  %592 = vmatprep.mubr.bf16.mxu0 0
  %593 = vmatmul.mubr.bf16.gmra.mxu0 %v165
  %v594 = vpop.f32.mrf.mxu0
  %v595 = vadd.f32 %v502, %v594
  %v596 = vpop.f32.mrf.mxu0
  %v597 = vadd.f32 %v504, %v596
  %v598 = vpop.f32.mrf.mxu0
  %v599 = vadd.f32 %v506, %v598
  %v600 = vpop.f32.mrf.mxu0
  %v601 = vadd.f32 %v508, %v600
  %602 = vmatprep.mubr.bf16.mxu0 0
  %603 = vmatmul.mubr.bf16.gmra.mxu0 %v168
  %v604 = vpop.f32.mrf.mxu0
  %v605 = vadd.f32 %v512, %v604
  %v606 = vpop.f32.mrf.mxu0
  %v607 = vadd.f32 %v514, %v606
  %v608 = vpop.f32.mrf.mxu0
  %v609 = vadd.f32 %v516, %v608
  %v610 = vpop.f32.mrf.mxu0
  %v611 = vadd.f32 %v518, %v610
  %612 = vdwg.mxu0
  %v613 = vld [vmem:[%s3] sm:$0xf]
  %v614 = vadd.f32 %v555, %v559
  %v615 = vadd.f32 %v614, %v565
  %v616 = vadd.f32 %v615, %v569
  %v617 = vadd.f32 %v616, %v575
  %v618 = vadd.f32 %v617, %v579
  %v619 = vadd.f32 %v618, %v585
  %v620 = vadd.f32 %v619, %v589
  %v621 = vadd.f32 %v620, %v595
  %v622 = vadd.f32 %v621, %v599
  %v623 = vadd.f32 %v622, %v605
  %v624 = vadd.f32 %v623, %v609
  %v625 = vrot.slane %v624, 4
  %v626 = vadd.f32 %v624, %v625
  %v627 = vrot.slane %v626, 2
  %v628 = vadd.f32 %v626, %v627
  %v629 = vrot.slane %v628, 1
  %v630 = vadd.f32 %v628, %v629
  %v631 = vadd.f32 %v557, %v561
  %v632 = vadd.f32 %v631, %v567
  %v633 = vadd.f32 %v632, %v571
  %v634 = vadd.f32 %v633, %v577
  %v635 = vadd.f32 %v634, %v581
  %v636 = vadd.f32 %v635, %v587
  %v637 = vadd.f32 %v636, %v591
  %v638 = vadd.f32 %v637, %v597
  %v639 = vadd.f32 %v638, %v601
  %v640 = vadd.f32 %v639, %v607
  %v641 = vadd.f32 %v640, %v611
  %v642 = vrot.slane %v641, 4
  %v643 = vadd.f32 %v641, %v642
  %v644 = vrot.slane %v643, 2
  %v645 = vadd.f32 %v643, %v644
  %v646 = vrot.slane %v645, 1
  %v647 = vadd.f32 %v645, %v646
  %v648 = vmul.f32 %v555, %v555
  %v649 = vmul.f32 %v557, %v557
  %v650 = vmul.f32 %v559, %v559
  %v651 = vmul.f32 %v561, %v561
  %v652 = vmul.f32 %v565, %v565
  %v653 = vmul.f32 %v567, %v567
  %v654 = vmul.f32 %v569, %v569
  %v655 = vmul.f32 %v571, %v571
  %v656 = vmul.f32 %v575, %v575
  %v657 = vmul.f32 %v577, %v577
  %v658 = vmul.f32 %v579, %v579
  %v659 = vmul.f32 %v581, %v581
  %v660 = vmul.f32 %v585, %v585
  %v661 = vmul.f32 %v587, %v587
  %v662 = vmul.f32 %v589, %v589
  %v663 = vmul.f32 %v591, %v591
  %v664 = vmul.f32 %v595, %v595
  %v665 = vmul.f32 %v597, %v597
  %v666 = vmul.f32 %v599, %v599
  %v667 = vmul.f32 %v601, %v601
  %v668 = vmul.f32 %v605, %v605
  %v669 = vmul.f32 %v607, %v607
  %v670 = vmul.f32 %v609, %v609
  %v671 = vmul.f32 %v611, %v611
  %v672 = vadd.f32 %v648, %v650
  %v673 = vadd.f32 %v672, %v652
  %v674 = vadd.f32 %v673, %v654
  %v675 = vadd.f32 %v674, %v656
  %v676 = vadd.f32 %v675, %v658
  %v677 = vadd.f32 %v676, %v660
  %v678 = vadd.f32 %v677, %v662
  %v679 = vadd.f32 %v678, %v664
  %v680 = vadd.f32 %v679, %v666
  %v681 = vadd.f32 %v680, %v668
  %v682 = vadd.f32 %v681, %v670
  %v683 = vrot.slane %v682, 4
  %v684 = vadd.f32 %v682, %v683
  %v685 = vrot.slane %v684, 2
  %v686 = vadd.f32 %v684, %v685
  %v687 = vrot.slane %v686, 1
  %v688 = vadd.f32 %v686, %v687
  %v689 = vadd.f32 %v649, %v651
  %v690 = vadd.f32 %v689, %v653
  %v691 = vadd.f32 %v690, %v655
  %v692 = vadd.f32 %v691, %v657
  %v693 = vadd.f32 %v692, %v659
  %v694 = vadd.f32 %v693, %v661
  %v695 = vadd.f32 %v694, %v663
  %v696 = vadd.f32 %v695, %v665
  %v697 = vadd.f32 %v696, %v667
  %v698 = vadd.f32 %v697, %v669
  %v699 = vadd.f32 %v698, %v671
  %v700 = vrot.slane %v699, 4
  %v701 = vadd.f32 %v699, %v700
  %v702 = vrot.slane %v701, 2
  %v703 = vadd.f32 %v701, %v702
  %v704 = vrot.slane %v703, 1
  %v705 = vadd.f32 %v703, %v704
  %vm706 = vcmask 1040384
  %v707 = vsel %vm706, %v630, %v688
  %v708 = vsel %vm706, %v647, %v705
  %v711 = vcombine.low %v707, %v708
  %v713 = vunpack.c.l.s4 1983009808
  %v714 = vunpack.c.0.s8 %v713
  %v715 = vlaneseq
  %v716 = vshrl.u32 %v715, 7
  %v717 = vsub.s32 %v714, %v716
  %v718 = vrot.slane %v711, %v717
  %v720 = vadd.f32 %v613, %v718
  %721 = vst [vmem:[%s3] sm:$0xf] %v720
  %v722 = vpack.c.bf16 %v559, %v555
  %v723 = vpack.c.bf16 %v561, %v557
  %v724 = vpack.c.bf16 %v569, %v565
  %v725 = vpack.c.bf16 %v571, %v567
  %v726 = vpack.c.bf16 %v579, %v575
  %v727 = vpack.c.bf16 %v581, %v577
  %v728 = vpack.c.bf16 %v589, %v585
  %v729 = vpack.c.bf16 %v591, %v587
  %v730 = vpack.c.bf16 %v599, %v595
  %v731 = vpack.c.bf16 %v601, %v597
  %v732 = vpack.c.bf16 %v609, %v605
  %v733 = vpack.c.bf16 %v611, %v607
  %v746 = vunpack.c.l.b16 %v722
  %v747 = vunpack.c.l.b16 %v723
  %v748 = vunpack.c.h.b16 %v722
  %v749 = vunpack.c.h.b16 %v723
  %v750 = vunpack.c.l.b16 %v724
  %v751 = vunpack.c.l.b16 %v725
  %v752 = vunpack.c.h.b16 %v724
  %v753 = vunpack.c.h.b16 %v725
  %v754 = vunpack.c.l.b16 %v726
  %v755 = vunpack.c.l.b16 %v727
  %v756 = vunpack.c.h.b16 %v726
  %v757 = vunpack.c.h.b16 %v727
  %v758 = vunpack.c.l.b16 %v728
  %v759 = vunpack.c.l.b16 %v729
  %v760 = vunpack.c.h.b16 %v728
  %v761 = vunpack.c.h.b16 %v729
  %v762 = vunpack.c.l.b16 %v730
  %v763 = vunpack.c.l.b16 %v731
  %v764 = vunpack.c.h.b16 %v730
  %v765 = vunpack.c.h.b16 %v731
  %v766 = vunpack.c.l.b16 %v732
  %v767 = vunpack.c.l.b16 %v733
  %v768 = vunpack.c.h.b16 %v732
  %v769 = vunpack.c.h.b16 %v733
  %v770 = vpack.c.b16 %v747, %v746
  %v771 = vpack.c.b16 %v749, %v748
  %v772 = vpack.c.b16 %v751, %v750
  %v773 = vpack.c.b16 %v753, %v752
  %v774 = vpack.c.b16 %v755, %v754
  %v775 = vpack.c.b16 %v757, %v756
  %v776 = vpack.c.b16 %v759, %v758
  %v777 = vpack.c.b16 %v761, %v760
  %v778 = vpack.c.b16 %v763, %v762
  %v779 = vpack.c.b16 %v765, %v764
  %v780 = vpack.c.b16 %v767, %v766
  %v781 = vpack.c.b16 %v769, %v768
  %794 = vst [vmem:[%s2] sm:$0xff] %v770
  %795 = vst [vmem:[%s2 + $0x8] sm:$0xff] %v771
  %796 = vst [vmem:[%s2 + $0x10] sm:$0xff] %v772
  %797 = vst [vmem:[%s2 + $0x18] sm:$0xff] %v773
  %798 = vst [vmem:[%s2 + $0x20] sm:$0xff] %v774
  %799 = vst [vmem:[%s2 + $0x28] sm:$0xff] %v775
  %800 = vst [vmem:[%s2 + $0x30] sm:$0xff] %v776
  %801 = vst [vmem:[%s2 + $0x38] sm:$0xff] %v777
  %802 = vst [vmem:[%s2 + $0x40] sm:$0xff] %v778
  %803 = vst [vmem:[%s2 + $0x48] sm:$0xff] %v779
  %804 = vst [vmem:[%s2 + $0x50] sm:$0xff] %v780
  %805 = vst [vmem:[%s2 + $0x58] sm:$0xff] %v781
  // Predicated region
  $region14: #{wcnn_forward.12} parent=0 // pred_check
    _
  $region15: #{wcnn_forward.12} parent=0 // pred_check_branch
    %807 = sbr.rel (0) target = $region17
  $region16: #{wcnn_forward.12} parent=0 // pred_region
    _
  $region17: #{wcnn_forward.12} parent=0 // pred_fallthru
    _
  // Predicated region
  $region18: #{wcnn_forward.12} parent=0 // pred_check
    _
  $region19: #{wcnn_forward.12} parent=0 // pred_check_branch
    %809 = sbr.rel (0) target = $region21
  $region20: #{wcnn_forward.12} parent=0 // pred_region
    _
  $region21: #{wcnn_forward.12} parent=0 // pred_fallthru
    _
  // Predicated region
  $region22: #{wcnn_forward.12} parent=0 // pred_check
    _
  $region23: #{wcnn_forward.12} parent=0 // pred_check_branch
    %811 = sbr.rel (0) target = $region25
  $region24: #{wcnn_forward.12} parent=0 // pred_region
    _
  $region25: #{wcnn_forward.12} parent=0 // pred_fallthru
    _
  // Predicated region
  $region26: #{wcnn_forward.12} parent=0 // pred_check
    _
  $region27: #{wcnn_forward.12} parent=0 // pred_check_branch
    %813 = sbr.rel (0) target = $region29
  $region28: #{wcnn_forward.12} parent=0 // pred_region
    _
  $region29: #{wcnn_forward.12} parent=0 // pred_fallthru
    _

// kernel: wcnn_forward.13
$region0: #{wcnn_forward.13}
  #allocation0 [shape = 'u32[]', space=smem, size = 0x4, offset = 0x4, fixed_abs, tag = 'smem constant byte address 0x4 - core index']
  #allocation1 [shape = 'u32[144,128]{1,0:T(1,128)}', space=vmem, size = 0x12000, scoped, tag = 'internal scratch']
  %s0 = inlined_call_operand.vmem [shape: f32[2,256], index: 0, kind: input, shape index: {}]
  %s1 = inlined_call_operand.vmem [shape: f32[1,256], index: 1, kind: input, shape index: {}]
  %s2 = inlined_call_operand.vmem [shape: f32[1,256], index: 2, kind: input, shape index: {}]
  %s3 = inlined_call_operand.vmem [shape: bf16[96,256], index: 3, kind: input, shape index: {}]
  %s4 = inlined_call_operand.vmem [shape: bf16[96,256], index: 4, kind: output, shape index: {}]
  %s5 = sld [smem:[#allocation0]]
  $region26: #{wcnn_forward.13} parent=0
    _
  %s7 = ssub.s32 1, %s5
  %s8 = scalar_select 0, %s7, %s5
  // Predicated region
  $region2: #{wcnn_forward.13} parent=0 // pred_check
    _
  $region3: #{wcnn_forward.13} parent=0 // pred_check_branch
    %10 = sbr.rel (0) target = $region5
  $region4: #{wcnn_forward.13} parent=0 // pred_region
    _
  $region5: #{wcnn_forward.13} parent=0 // pred_fallthru
    _
  // Predicated region
  $region6: #{wcnn_forward.13} parent=0 // pred_check
    _
  $region7: #{wcnn_forward.13} parent=0 // pred_check_branch
    %12 = sbr.rel (0) target = $region9
  $region8: #{wcnn_forward.13} parent=0 // pred_region
    _
  $region9: #{wcnn_forward.13} parent=0 // pred_fallthru
    _
  // Predicated region
  $region10: #{wcnn_forward.13} parent=0 // pred_check
    _
  $region11: #{wcnn_forward.13} parent=0 // pred_check_branch
    %14 = sbr.rel (0) target = $region13
  $region12: #{wcnn_forward.13} parent=0 // pred_region
    _
  $region13: #{wcnn_forward.13} parent=0 // pred_fallthru
    _
  // Predicated region
  $region14: #{wcnn_forward.13} parent=0 // pred_check
    _
  $region15: #{wcnn_forward.13} parent=0 // pred_check_branch
    %16 = sbr.rel (0) target = $region17
  $region16: #{wcnn_forward.13} parent=0 // pred_region
    _
  $region17: #{wcnn_forward.13} parent=0 // pred_fallthru
    _
  %v17 = vld [vmem:[%s0] ss:$2 sm:$0x3]
  %v18 = vrcp.pop 88.0
  %v19 = vmul.f32 %v17, %v18
  %s20 = scalar_lea.vmem %s0, 1
  %v21 = vld [vmem:[%s20] ss:$2 sm:$0x3]
  %v22 = vmul.f32 %v21, %v18
  %v23 = vmul.f32 %v19, %v19
  %v24 = vsub.f32 %v22, %v23
  %v25 = vmax.f32 %v24, 0.0
  %v26 = vld [vmem:[%s1] sm:$0x3]
  %v27 = vadd.f32 %v25, 1e-05
  %v28 = vrsqrt.pop %v27
  %v29 = vmul.f32 %v26, %v28
  %v30 = vld [vmem:[%s2] sm:$0x3]
  %v31 = vmul.f32 %v19, %v29
  %v32 = vsub.f32 %v30, %v31
  %v33 = vld [vmem:[%s3] sm:$0xff]
  %v34 = vld [vmem:[%s3 + $0x8] sm:$0xff]
  %v35 = vld [vmem:[%s3 + $0x10] sm:$0xff]
  %v36 = vld [vmem:[%s3 + $0x18] sm:$0xff]
  %v37 = vld [vmem:[%s3 + $0x20] sm:$0xff]
  %v38 = vld [vmem:[%s3 + $0x28] sm:$0xff]
  %v39 = vld [vmem:[%s3 + $0x30] sm:$0xff]
  %v40 = vld [vmem:[%s3 + $0x38] sm:$0xff]
  %v41 = vld [vmem:[%s3 + $0x40] sm:$0xff]
  %v42 = vld [vmem:[%s3 + $0x48] sm:$0xff]
  %v43 = vld [vmem:[%s3 + $0x50] sm:$0xff]
  %v44 = vld [vmem:[%s3 + $0x58] sm:$0xff]
  %v45 = vunpack.c.l.bf16 %v33
  %v46 = vunpack.c.h.bf16 %v33
  %v47 = vunpack.c.l.bf16 %v34
  %v48 = vunpack.c.h.bf16 %v34
  %v49 = vunpack.c.l.bf16 %v35
  %v50 = vunpack.c.h.bf16 %v35
  %v51 = vunpack.c.l.bf16 %v36
  %v52 = vunpack.c.h.bf16 %v36
  %v53 = vunpack.c.l.bf16 %v37
  %v54 = vunpack.c.h.bf16 %v37
  %v55 = vunpack.c.l.bf16 %v38
  %v56 = vunpack.c.h.bf16 %v38
  %v57 = vunpack.c.l.bf16 %v39
  %v58 = vunpack.c.h.bf16 %v39
  %v59 = vunpack.c.l.bf16 %v40
  %v60 = vunpack.c.h.bf16 %v40
  %v61 = vunpack.c.l.bf16 %v41
  %v62 = vunpack.c.h.bf16 %v41
  %v63 = vunpack.c.l.bf16 %v42
  %v64 = vunpack.c.h.bf16 %v42
  %v65 = vunpack.c.l.bf16 %v43
  %v66 = vunpack.c.h.bf16 %v43
  %v67 = vunpack.c.l.bf16 %v44
  %v68 = vunpack.c.h.bf16 %v44
  %v70 = vlaneseq
  %v71 = vshrl.u32 %v70, 7
  %v72 = vsub.s32 0, %v71
  %v73 = vrot.slane %v29, %v72
  %v74 = vlaneseq
  %v75 = vshrl.u32 %v74, 7
  %v76 = vsub.s32 1, %v75
  %v77 = vrot.slane %v29, %v76
  %v80 = vmul.f32 %v45, %v73
  %v81 = vmul.f32 %v46, %v77
  %v82 = vmul.f32 %v47, %v73
  %v83 = vmul.f32 %v48, %v77
  %v84 = vmul.f32 %v49, %v73
  %v85 = vmul.f32 %v50, %v77
  %v86 = vmul.f32 %v51, %v73
  %v87 = vmul.f32 %v52, %v77
  %v88 = vmul.f32 %v53, %v73
  %v89 = vmul.f32 %v54, %v77
  %v90 = vmul.f32 %v55, %v73
  %v91 = vmul.f32 %v56, %v77
  %v92 = vmul.f32 %v57, %v73
  %v93 = vmul.f32 %v58, %v77
  %v94 = vmul.f32 %v59, %v73
  %v95 = vmul.f32 %v60, %v77
  %v96 = vmul.f32 %v61, %v73
  %v97 = vmul.f32 %v62, %v77
  %v98 = vmul.f32 %v63, %v73
  %v99 = vmul.f32 %v64, %v77
  %v100 = vmul.f32 %v65, %v73
  %v101 = vmul.f32 %v66, %v77
  %v102 = vmul.f32 %v67, %v73
  %v103 = vmul.f32 %v68, %v77
  %v105 = vlaneseq
  %v106 = vshrl.u32 %v105, 7
  %v107 = vsub.s32 0, %v106
  %v108 = vrot.slane %v32, %v107
  %v109 = vlaneseq
  %v110 = vshrl.u32 %v109, 7
  %v111 = vsub.s32 1, %v110
  %v112 = vrot.slane %v32, %v111
  %v115 = vadd.f32 %v80, %v108
  %v116 = vadd.f32 %v81, %v112
  %v117 = vadd.f32 %v82, %v108
  %v118 = vadd.f32 %v83, %v112
  %v119 = vadd.f32 %v84, %v108
  %v120 = vadd.f32 %v85, %v112
  %v121 = vadd.f32 %v86, %v108
  %v122 = vadd.f32 %v87, %v112
  %v123 = vadd.f32 %v88, %v108
  %v124 = vadd.f32 %v89, %v112
  %v125 = vadd.f32 %v90, %v108
  %v126 = vadd.f32 %v91, %v112
  %v127 = vadd.f32 %v92, %v108
  %v128 = vadd.f32 %v93, %v112
  %v129 = vadd.f32 %v94, %v108
  %v130 = vadd.f32 %v95, %v112
  %v131 = vadd.f32 %v96, %v108
  %v132 = vadd.f32 %v97, %v112
  %v133 = vadd.f32 %v98, %v108
  %v134 = vadd.f32 %v99, %v112
  %v135 = vadd.f32 %v100, %v108
  %v136 = vadd.f32 %v101, %v112
  %v137 = vadd.f32 %v102, %v108
  %v138 = vadd.f32 %v103, %v112
  %vm139 = vcmp.ge.f32.partialorder %v115, 0.0
  %vm140 = vcmp.ge.f32.partialorder %v116, 0.0
  %vm141 = vcmp.ge.f32.partialorder %v117, 0.0
  %vm142 = vcmp.ge.f32.partialorder %v118, 0.0
  %vm143 = vcmp.ge.f32.partialorder %v119, 0.0
  %vm144 = vcmp.ge.f32.partialorder %v120, 0.0
  %vm145 = vcmp.ge.f32.partialorder %v121, 0.0
  %vm146 = vcmp.ge.f32.partialorder %v122, 0.0
  %vm147 = vcmp.ge.f32.partialorder %v123, 0.0
  %vm148 = vcmp.ge.f32.partialorder %v124, 0.0
  %vm149 = vcmp.ge.f32.partialorder %v125, 0.0
  %vm150 = vcmp.ge.f32.partialorder %v126, 0.0
  %vm151 = vcmp.ge.f32.partialorder %v127, 0.0
  %vm152 = vcmp.ge.f32.partialorder %v128, 0.0
  %vm153 = vcmp.ge.f32.partialorder %v129, 0.0
  %vm154 = vcmp.ge.f32.partialorder %v130, 0.0
  %vm155 = vcmp.ge.f32.partialorder %v131, 0.0
  %vm156 = vcmp.ge.f32.partialorder %v132, 0.0
  %vm157 = vcmp.ge.f32.partialorder %v133, 0.0
  %vm158 = vcmp.ge.f32.partialorder %v134, 0.0
  %vm159 = vcmp.ge.f32.partialorder %v135, 0.0
  %vm160 = vcmp.ge.f32.partialorder %v136, 0.0
  %vm161 = vcmp.ge.f32.partialorder %v137, 0.0
  %vm162 = vcmp.ge.f32.partialorder %v138, 0.0
  %v163 = vmul.f32 %v115, 0.01
  %v164 = vmul.f32 %v116, 0.01
  %v165 = vmul.f32 %v117, 0.01
  %v166 = vmul.f32 %v118, 0.01
  %v167 = vmul.f32 %v119, 0.01
  %v168 = vmul.f32 %v120, 0.01
  %v169 = vmul.f32 %v121, 0.01
  %v170 = vmul.f32 %v122, 0.01
  %v171 = vmul.f32 %v123, 0.01
  %v172 = vmul.f32 %v124, 0.01
  %v173 = vmul.f32 %v125, 0.01
  %v174 = vmul.f32 %v126, 0.01
  %v175 = vmul.f32 %v127, 0.01
  %v176 = vmul.f32 %v128, 0.01
  %v177 = vmul.f32 %v129, 0.01
  %v178 = vmul.f32 %v130, 0.01
  %v179 = vmul.f32 %v131, 0.01
  %v180 = vmul.f32 %v132, 0.01
  %v181 = vmul.f32 %v133, 0.01
  %v182 = vmul.f32 %v134, 0.01
  %v183 = vmul.f32 %v135, 0.01
  %v184 = vmul.f32 %v136, 0.01
  %v185 = vmul.f32 %v137, 0.01
  %v186 = vmul.f32 %v138, 0.01
  %v187 = vsel %vm139, %v115, %v163
  %v188 = vsel %vm140, %v116, %v164
  %v189 = vsel %vm141, %v117, %v165
  %v190 = vsel %vm142, %v118, %v166
  %v191 = vsel %vm143, %v119, %v167
  %v192 = vsel %vm144, %v120, %v168
  %v193 = vsel %vm145, %v121, %v169
  %v194 = vsel %vm146, %v122, %v170
  %v195 = vsel %vm147, %v123, %v171
  %v196 = vsel %vm148, %v124, %v172
  %v197 = vsel %vm149, %v125, %v173
  %v198 = vsel %vm150, %v126, %v174
  %v199 = vsel %vm151, %v127, %v175
  %v200 = vsel %vm152, %v128, %v176
  %v201 = vsel %vm153, %v129, %v177
  %v202 = vsel %vm154, %v130, %v178
  %v203 = vsel %vm155, %v131, %v179
  %v204 = vsel %vm156, %v132, %v180
  %v205 = vsel %vm157, %v133, %v181
  %v206 = vsel %vm158, %v134, %v182
  %v207 = vsel %vm159, %v135, %v183
  %v208 = vsel %vm160, %v136, %v184
  %v209 = vsel %vm161, %v137, %v185
  %v210 = vsel %vm162, %v138, %v186
  %v211 = vpack.c.bf16 %v189, %v187
  %v212 = vpack.c.bf16 %v190, %v188
  %v213 = vpack.c.bf16 %v193, %v191
  %v214 = vpack.c.bf16 %v194, %v192
  %v215 = vpack.c.bf16 %v197, %v195
  %v216 = vpack.c.bf16 %v198, %v196
  %v217 = vpack.c.bf16 %v201, %v199
  %v218 = vpack.c.bf16 %v202, %v200
  %v219 = vpack.c.bf16 %v205, %v203
  %v220 = vpack.c.bf16 %v206, %v204
  %v221 = vpack.c.bf16 %v209, %v207
  %v222 = vpack.c.bf16 %v210, %v208
  %v235 = vunpack.c.l.b16 %v211
  %v236 = vunpack.c.l.b16 %v212
  %v237 = vunpack.c.h.b16 %v211
  %v238 = vunpack.c.h.b16 %v212
  %v239 = vunpack.c.l.b16 %v213
  %v240 = vunpack.c.l.b16 %v214
  %v241 = vunpack.c.h.b16 %v213
  %v242 = vunpack.c.h.b16 %v214
  %v243 = vunpack.c.l.b16 %v215
  %v244 = vunpack.c.l.b16 %v216
  %v245 = vunpack.c.h.b16 %v215
  %v246 = vunpack.c.h.b16 %v216
  %v247 = vunpack.c.l.b16 %v217
  %v248 = vunpack.c.l.b16 %v218
  %v249 = vunpack.c.h.b16 %v217
  %v250 = vunpack.c.h.b16 %v218
  %v251 = vunpack.c.l.b16 %v219
  %v252 = vunpack.c.l.b16 %v220
  %v253 = vunpack.c.h.b16 %v219
  %v254 = vunpack.c.h.b16 %v220
  %v255 = vunpack.c.l.b16 %v221
  %v256 = vunpack.c.l.b16 %v222
  %v257 = vunpack.c.h.b16 %v221
  %v258 = vunpack.c.h.b16 %v222
  %v259 = vpack.c.b16 %v236, %v235
  %v260 = vpack.c.b16 %v238, %v237
  %v261 = vpack.c.b16 %v240, %v239
  %v262 = vpack.c.b16 %v242, %v241
  %v263 = vpack.c.b16 %v244, %v243
  %v264 = vpack.c.b16 %v246, %v245
  %v265 = vpack.c.b16 %v248, %v247
  %v266 = vpack.c.b16 %v250, %v249
  %v267 = vpack.c.b16 %v252, %v251
  %v268 = vpack.c.b16 %v254, %v253
  %v269 = vpack.c.b16 %v256, %v255
  %v270 = vpack.c.b16 %v258, %v257
  %283 = vst [vmem:[%s4] sm:$0xff] %v259
  %284 = vst [vmem:[%s4 + $0x8] sm:$0xff] %v260
  %285 = vst [vmem:[%s4 + $0x10] sm:$0xff] %v261
  %286 = vst [vmem:[%s4 + $0x18] sm:$0xff] %v262
  %287 = vst [vmem:[%s4 + $0x20] sm:$0xff] %v263
  %288 = vst [vmem:[%s4 + $0x28] sm:$0xff] %v264
  %289 = vst [vmem:[%s4 + $0x30] sm:$0xff] %v265
  %290 = vst [vmem:[%s4 + $0x38] sm:$0xff] %v266
  %291 = vst [vmem:[%s4 + $0x40] sm:$0xff] %v267
  %292 = vst [vmem:[%s4 + $0x48] sm:$0xff] %v268
  %293 = vst [vmem:[%s4 + $0x50] sm:$0xff] %v269
  %294 = vst [vmem:[%s4 + $0x58] sm:$0xff] %v270
  // Predicated region
  $region18: #{wcnn_forward.13} parent=0 // pred_check
    _
  $region19: #{wcnn_forward.13} parent=0 // pred_check_branch
    %296 = sbr.rel (0) target = $region21
  $region20: #{wcnn_forward.13} parent=0 // pred_region
    _
  $region21: #{wcnn_forward.13} parent=0 // pred_fallthru
    _
  // Predicated region
  $region22: #{wcnn_forward.13} parent=0 // pred_check
    _
  $region23: #{wcnn_forward.13} parent=0 // pred_check_branch
    %298 = sbr.rel (0) target = $region25
  $region24: #{wcnn_forward.13} parent=0 // pred_region
    _
  $region25: #{wcnn_forward.13} parent=0 // pred_fallthru
    _

// kernel: wcnn_forward.14
$region0: #{wcnn_forward.14}
  #allocation0 [shape = 'u32[]', space=smem, size = 0x4, offset = 0x4, fixed_abs, tag = 'smem constant byte address 0x4 - core index']
  #allocation1 [shape = 'u32[144,128]{1,0:T(1,128)}', space=vmem, size = 0x12000, scoped, tag = 'internal scratch']
  %s0 = inlined_call_operand.vmem [shape: bf16[96,768], index: 0, kind: input, shape index: {}]
  %s1 = inlined_call_operand.vmem [shape: bf16[768,256], index: 1, kind: input, shape index: {}]
  %s2 = inlined_call_operand.vmem [shape: bf16[96,256], index: 2, kind: output, shape index: {0}]
  %s3 = inlined_call_operand.vmem [shape: f32[2,256], index: 3, kind: output, shape index: {1}]
  %4 = xla_tuple %s2, %s3
  %s5 = sld [smem:[#allocation0]]
  $region30: #{wcnn_forward.14} parent=0
    _
  %s7 = ssub.s32 1, %s5
  %s8 = scalar_select 0, %s7, %s5
  // Predicated region
  $region2: #{wcnn_forward.14} parent=0 // pred_check
    _
  $region3: #{wcnn_forward.14} parent=0 // pred_check_branch
    %10 = sbr.rel (0) target = $region5
  $region4: #{wcnn_forward.14} parent=0 // pred_region
    _
  $region5: #{wcnn_forward.14} parent=0 // pred_fallthru
    _
  // Predicated region
  $region6: #{wcnn_forward.14} parent=0 // pred_check
    _
  $region7: #{wcnn_forward.14} parent=0 // pred_check_branch
    %12 = sbr.rel (0) target = $region9
  $region8: #{wcnn_forward.14} parent=0 // pred_region
    _
  $region9: #{wcnn_forward.14} parent=0 // pred_fallthru
    _
  %p13 = scmp.eq.s32.totalorder 0, 0
  // Predicated region
  $region10: #{wcnn_forward.14} parent=0 // pred_check
    %p14 = pneg %p13
  $region11: #{wcnn_forward.14} parent=0 // pred_check_branch
    %16 = sbr.rel (%p14) target = $region13
  $region12: #{wcnn_forward.14} parent=0 // pred_region
    %17 = vst [vmem:[%s3] sm:$0xf] 0.0
  $region13: #{wcnn_forward.14} parent=0 // pred_fallthru
    _
  %v18 = vld [vmem:[%s0] sm:$0xff]
  %v19 = vld [vmem:[%s0 + $0x8] sm:$0xff]
  %v20 = vld [vmem:[%s0 + $0x10] sm:$0xff]
  %v21 = vld [vmem:[%s0 + $0x18] sm:$0xff]
  %v22 = vld [vmem:[%s0 + $0x20] sm:$0xff]
  %v23 = vld [vmem:[%s0 + $0x28] sm:$0xff]
  %v24 = vld [vmem:[%s0 + $0x30] sm:$0xff]
  %v25 = vld [vmem:[%s0 + $0x38] sm:$0xff]
  %v26 = vld [vmem:[%s0 + $0x40] sm:$0xff]
  %v27 = vld [vmem:[%s0 + $0x48] sm:$0xff]
  %v28 = vld [vmem:[%s0 + $0x50] sm:$0xff]
  %v29 = vld [vmem:[%s0 + $0x58] sm:$0xff]
  %v30 = vld [vmem:[%s0 + $0x60] sm:$0xff]
  %v31 = vld [vmem:[%s0 + $0x68] sm:$0xff]
  %v32 = vld [vmem:[%s0 + $0x70] sm:$0xff]
  %v33 = vld [vmem:[%s0 + $0x78] sm:$0xff]
  %v34 = vld [vmem:[%s0 + $0x80] sm:$0xff]
  %v35 = vld [vmem:[%s0 + $0x88] sm:$0xff]
  %v36 = vld [vmem:[%s0 + $0x90] sm:$0xff]
  %v37 = vld [vmem:[%s0 + $0x98] sm:$0xff]
  %v38 = vld [vmem:[%s0 + $0xa0] sm:$0xff]
  %v39 = vld [vmem:[%s0 + $0xa8] sm:$0xff]
  %v40 = vld [vmem:[%s0 + $0xb0] sm:$0xff]
  %v41 = vld [vmem:[%s0 + $0xb8] sm:$0xff]
  %v42 = vld [vmem:[%s0 + $0xc0] sm:$0xff]
  %v43 = vld [vmem:[%s0 + $0xc8] sm:$0xff]
  %v44 = vld [vmem:[%s0 + $0xd0] sm:$0xff]
  %v45 = vld [vmem:[%s0 + $0xd8] sm:$0xff]
  %v46 = vld [vmem:[%s0 + $0xe0] sm:$0xff]
  %v47 = vld [vmem:[%s0 + $0xe8] sm:$0xff]
  %v48 = vld [vmem:[%s0 + $0xf0] sm:$0xff]
  %v49 = vld [vmem:[%s0 + $0xf8] sm:$0xff]
  %v50 = vld [vmem:[%s0 + $0x100] sm:$0xff]
  %v51 = vld [vmem:[%s0 + $0x108] sm:$0xff]
  %v52 = vld [vmem:[%s0 + $0x110] sm:$0xff]
  %v53 = vld [vmem:[%s0 + $0x118] sm:$0xff]
  %v54 = vld [vmem:[%s1] sm:$0xff]
  %v55 = vld [vmem:[%s1 + $0x8] sm:$0xff]
  %v56 = vld [vmem:[%s1 + $0x10] sm:$0xff]
  %v57 = vld [vmem:[%s1 + $0x18] sm:$0xff]
  %v58 = vld [vmem:[%s1 + $0x20] sm:$0xff]
  %v59 = vld [vmem:[%s1 + $0x28] sm:$0xff]
  %v60 = vld [vmem:[%s1 + $0x30] sm:$0xff]
  %v61 = vld [vmem:[%s1 + $0x38] sm:$0xff]
  %v62 = vld [vmem:[%s1 + $0x40] sm:$0xff]
  %v63 = vld [vmem:[%s1 + $0x48] sm:$0xff]
  %v64 = vld [vmem:[%s1 + $0x50] sm:$0xff]
  %v65 = vld [vmem:[%s1 + $0x58] sm:$0xff]
  %v66 = vld [vmem:[%s1 + $0x60] sm:$0xff]
  %v67 = vld [vmem:[%s1 + $0x68] sm:$0xff]
  %v68 = vld [vmem:[%s1 + $0x70] sm:$0xff]
  %v69 = vld [vmem:[%s1 + $0x78] sm:$0xff]
  %v70 = vld [vmem:[%s1 + $0x80] sm:$0xff]
  %v71 = vld [vmem:[%s1 + $0x88] sm:$0xff]
  %v72 = vld [vmem:[%s1 + $0x90] sm:$0xff]
  %v73 = vld [vmem:[%s1 + $0x98] sm:$0xff]
  %v74 = vld [vmem:[%s1 + $0xa0] sm:$0xff]
  %v75 = vld [vmem:[%s1 + $0xa8] sm:$0xff]
  %v76 = vld [vmem:[%s1 + $0xb0] sm:$0xff]
  %v77 = vld [vmem:[%s1 + $0xb8] sm:$0xff]
  %v78 = vld [vmem:[%s1 + $0xc0] sm:$0xff]
  %v79 = vld [vmem:[%s1 + $0xc8] sm:$0xff]
  %v80 = vld [vmem:[%s1 + $0xd0] sm:$0xff]
  %v81 = vld [vmem:[%s1 + $0xd8] sm:$0xff]
  %v82 = vld [vmem:[%s1 + $0xe0] sm:$0xff]
  %v83 = vld [vmem:[%s1 + $0xe8] sm:$0xff]
  %v84 = vld [vmem:[%s1 + $0xf0] sm:$0xff]
  %v85 = vld [vmem:[%s1 + $0xf8] sm:$0xff]
  %v86 = vld [vmem:[%s1 + $0x100] sm:$0xff]
  %v87 = vld [vmem:[%s1 + $0x108] sm:$0xff]
  %v88 = vld [vmem:[%s1 + $0x110] sm:$0xff]
  %v89 = vld [vmem:[%s1 + $0x118] sm:$0xff]
  %v90 = vld [vmem:[%s1 + $0x120] sm:$0xff]
  %v91 = vld [vmem:[%s1 + $0x128] sm:$0xff]
  %v92 = vld [vmem:[%s1 + $0x130] sm:$0xff]
  %v93 = vld [vmem:[%s1 + $0x138] sm:$0xff]
  %v94 = vld [vmem:[%s1 + $0x140] sm:$0xff]
  %v95 = vld [vmem:[%s1 + $0x148] sm:$0xff]
  %v96 = vld [vmem:[%s1 + $0x150] sm:$0xff]
  %v97 = vld [vmem:[%s1 + $0x158] sm:$0xff]
  %v98 = vld [vmem:[%s1 + $0x160] sm:$0xff]
  %v99 = vld [vmem:[%s1 + $0x168] sm:$0xff]
  %v100 = vld [vmem:[%s1 + $0x170] sm:$0xff]
  %v101 = vld [vmem:[%s1 + $0x178] sm:$0xff]
  %v102 = vld [vmem:[%s1 + $0x180] sm:$0xff]
  %v103 = vld [vmem:[%s1 + $0x188] sm:$0xff]
  %v104 = vld [vmem:[%s1 + $0x190] sm:$0xff]
  %v105 = vld [vmem:[%s1 + $0x198] sm:$0xff]
  %v106 = vld [vmem:[%s1 + $0x1a0] sm:$0xff]
  %v107 = vld [vmem:[%s1 + $0x1a8] sm:$0xff]
  %v108 = vld [vmem:[%s1 + $0x1b0] sm:$0xff]
  %v109 = vld [vmem:[%s1 + $0x1b8] sm:$0xff]
  %v110 = vld [vmem:[%s1 + $0x1c0] sm:$0xff]
  %v111 = vld [vmem:[%s1 + $0x1c8] sm:$0xff]
  %v112 = vld [vmem:[%s1 + $0x1d0] sm:$0xff]
  %v113 = vld [vmem:[%s1 + $0x1d8] sm:$0xff]
  %v114 = vld [vmem:[%s1 + $0x1e0] sm:$0xff]
  %v115 = vld [vmem:[%s1 + $0x1e8] sm:$0xff]
  %v116 = vld [vmem:[%s1 + $0x1f0] sm:$0xff]
  %v117 = vld [vmem:[%s1 + $0x1f8] sm:$0xff]
  %v118 = vld [vmem:[%s1 + $0x200] sm:$0xff]
  %v119 = vld [vmem:[%s1 + $0x208] sm:$0xff]
  %v120 = vld [vmem:[%s1 + $0x210] sm:$0xff]
  %v121 = vld [vmem:[%s1 + $0x218] sm:$0xff]
  %v122 = vld [vmem:[%s1 + $0x220] sm:$0xff]
  %v123 = vld [vmem:[%s1 + $0x228] sm:$0xff]
  %v124 = vld [vmem:[%s1 + $0x230] sm:$0xff]
  %v125 = vld [vmem:[%s1 + $0x238] sm:$0xff]
  %v126 = vld [vmem:[%s1 + $0x240] sm:$0xff]
  %v127 = vld [vmem:[%s1 + $0x248] sm:$0xff]
  %v128 = vld [vmem:[%s1 + $0x250] sm:$0xff]
  %v129 = vld [vmem:[%s1 + $0x258] sm:$0xff]
  %v130 = vld [vmem:[%s1 + $0x260] sm:$0xff]
  %v131 = vld [vmem:[%s1 + $0x268] sm:$0xff]
  %v132 = vld [vmem:[%s1 + $0x270] sm:$0xff]
  %v133 = vld [vmem:[%s1 + $0x278] sm:$0xff]
  %v134 = vld [vmem:[%s1 + $0x280] sm:$0xff]
  %v135 = vld [vmem:[%s1 + $0x288] sm:$0xff]
  %v136 = vld [vmem:[%s1 + $0x290] sm:$0xff]
  %v137 = vld [vmem:[%s1 + $0x298] sm:$0xff]
  %v138 = vld [vmem:[%s1 + $0x2a0] sm:$0xff]
  %v139 = vld [vmem:[%s1 + $0x2a8] sm:$0xff]
  %v140 = vld [vmem:[%s1 + $0x2b0] sm:$0xff]
  %v141 = vld [vmem:[%s1 + $0x2b8] sm:$0xff]
  %v142 = vld [vmem:[%s1 + $0x2c0] sm:$0xff]
  %v143 = vld [vmem:[%s1 + $0x2c8] sm:$0xff]
  %v144 = vld [vmem:[%s1 + $0x2d0] sm:$0xff]
  %v145 = vld [vmem:[%s1 + $0x2d8] sm:$0xff]
  %v146 = vld [vmem:[%s1 + $0x2e0] sm:$0xff]
  %v147 = vld [vmem:[%s1 + $0x2e8] sm:$0xff]
  %v148 = vld [vmem:[%s1 + $0x2f0] sm:$0xff]
  %v149 = vld [vmem:[%s1 + $0x2f8] sm:$0xff]
  %v186 = vunpack.c.l.b16 %v18
  %v187 = vunpack.c.h.b16 %v18
  %v188 = vunpack.c.l.b16 %v19
  %v189 = vunpack.c.h.b16 %v19
  %v190 = vunpack.c.l.b16 %v20
  %v191 = vunpack.c.h.b16 %v20
  %v192 = vunpack.c.l.b16 %v21
  %v193 = vunpack.c.h.b16 %v21
  %v194 = vunpack.c.l.b16 %v22
  %v195 = vunpack.c.h.b16 %v22
  %v196 = vunpack.c.l.b16 %v23
  %v197 = vunpack.c.h.b16 %v23
  %v198 = vunpack.c.l.b16 %v24
  %v199 = vunpack.c.h.b16 %v24
  %v200 = vunpack.c.l.b16 %v25
  %v201 = vunpack.c.h.b16 %v25
  %v202 = vunpack.c.l.b16 %v26
  %v203 = vunpack.c.h.b16 %v26
  %v204 = vunpack.c.l.b16 %v27
  %v205 = vunpack.c.h.b16 %v27
  %v206 = vunpack.c.l.b16 %v28
  %v207 = vunpack.c.h.b16 %v28
  %v208 = vunpack.c.l.b16 %v29
  %v209 = vunpack.c.h.b16 %v29
  %v210 = vunpack.c.l.b16 %v30
  %v211 = vunpack.c.h.b16 %v30
  %v212 = vunpack.c.l.b16 %v31
  %v213 = vunpack.c.h.b16 %v31
  %v214 = vunpack.c.l.b16 %v32
  %v215 = vunpack.c.h.b16 %v32
  %v216 = vunpack.c.l.b16 %v33
  %v217 = vunpack.c.h.b16 %v33
  %v218 = vunpack.c.l.b16 %v34
  %v219 = vunpack.c.h.b16 %v34
  %v220 = vunpack.c.l.b16 %v35
  %v221 = vunpack.c.h.b16 %v35
  %v222 = vunpack.c.l.b16 %v36
  %v223 = vunpack.c.h.b16 %v36
  %v224 = vunpack.c.l.b16 %v37
  %v225 = vunpack.c.h.b16 %v37
  %v226 = vunpack.c.l.b16 %v38
  %v227 = vunpack.c.h.b16 %v38
  %v228 = vunpack.c.l.b16 %v39
  %v229 = vunpack.c.h.b16 %v39
  %v230 = vunpack.c.l.b16 %v40
  %v231 = vunpack.c.h.b16 %v40
  %v232 = vunpack.c.l.b16 %v41
  %v233 = vunpack.c.h.b16 %v41
  %v234 = vunpack.c.l.b16 %v42
  %v235 = vunpack.c.h.b16 %v42
  %v236 = vunpack.c.l.b16 %v43
  %v237 = vunpack.c.h.b16 %v43
  %v238 = vunpack.c.l.b16 %v44
  %v239 = vunpack.c.h.b16 %v44
  %v240 = vunpack.c.l.b16 %v45
  %v241 = vunpack.c.h.b16 %v45
  %v242 = vunpack.c.l.b16 %v46
  %v243 = vunpack.c.h.b16 %v46
  %v244 = vunpack.c.l.b16 %v47
  %v245 = vunpack.c.h.b16 %v47
  %v246 = vunpack.c.l.b16 %v48
  %v247 = vunpack.c.h.b16 %v48
  %v248 = vunpack.c.l.b16 %v49
  %v249 = vunpack.c.h.b16 %v49
  %v250 = vunpack.c.l.b16 %v50
  %v251 = vunpack.c.h.b16 %v50
  %v252 = vunpack.c.l.b16 %v51
  %v253 = vunpack.c.h.b16 %v51
  %v254 = vunpack.c.l.b16 %v52
  %v255 = vunpack.c.h.b16 %v52
  %v256 = vunpack.c.l.b16 %v53
  %v257 = vunpack.c.h.b16 %v53
  %v258 = vpack.c.b16 %v192, %v186
  %v259 = vpack.c.b16 %v193, %v187
  %v260 = vpack.c.b16 %v194, %v188
  %v261 = vpack.c.b16 %v195, %v189
  %v262 = vpack.c.b16 %v196, %v190
  %v263 = vpack.c.b16 %v197, %v191
  %v264 = vpack.c.b16 %v204, %v198
  %v265 = vpack.c.b16 %v205, %v199
  %v266 = vpack.c.b16 %v206, %v200
  %v267 = vpack.c.b16 %v207, %v201
  %v268 = vpack.c.b16 %v208, %v202
  %v269 = vpack.c.b16 %v209, %v203
  %v270 = vpack.c.b16 %v216, %v210
  %v271 = vpack.c.b16 %v217, %v211
  %v272 = vpack.c.b16 %v218, %v212
  %v273 = vpack.c.b16 %v219, %v213
  %v274 = vpack.c.b16 %v220, %v214
  %v275 = vpack.c.b16 %v221, %v215
  %v276 = vpack.c.b16 %v228, %v222
  %v277 = vpack.c.b16 %v229, %v223
  %v278 = vpack.c.b16 %v230, %v224
  %v279 = vpack.c.b16 %v231, %v225
  %v280 = vpack.c.b16 %v232, %v226
  %v281 = vpack.c.b16 %v233, %v227
  %v282 = vpack.c.b16 %v240, %v234
  %v283 = vpack.c.b16 %v241, %v235
  %v284 = vpack.c.b16 %v242, %v236
  %v285 = vpack.c.b16 %v243, %v237
  %v286 = vpack.c.b16 %v244, %v238
  %v287 = vpack.c.b16 %v245, %v239
  %v288 = vpack.c.b16 %v252, %v246
  %v289 = vpack.c.b16 %v253, %v247
  %v290 = vpack.c.b16 %v254, %v248
  %v291 = vpack.c.b16 %v255, %v249
  %v292 = vpack.c.b16 %v256, %v250
  %v293 = vpack.c.b16 %v257, %v251
  %v426 = vunpack.c.l.b16 %v54
  %v427 = vunpack.c.h.b16 %v54
  %v428 = vunpack.c.l.b16 %v55
  %v429 = vunpack.c.h.b16 %v55
  %v430 = vunpack.c.l.b16 %v56
  %v431 = vunpack.c.h.b16 %v56
  %v432 = vunpack.c.l.b16 %v57
  %v433 = vunpack.c.h.b16 %v57
  %v434 = vunpack.c.l.b16 %v58
  %v435 = vunpack.c.h.b16 %v58
  %v436 = vunpack.c.l.b16 %v59
  %v437 = vunpack.c.h.b16 %v59
  %v438 = vunpack.c.l.b16 %v60
  %v439 = vunpack.c.h.b16 %v60
  %v440 = vunpack.c.l.b16 %v61
  %v441 = vunpack.c.h.b16 %v61
  %v442 = vunpack.c.l.b16 %v62
  %v443 = vunpack.c.h.b16 %v62
  %v444 = vunpack.c.l.b16 %v63
  %v445 = vunpack.c.h.b16 %v63
  %v446 = vunpack.c.l.b16 %v64
  %v447 = vunpack.c.h.b16 %v64
  %v448 = vunpack.c.l.b16 %v65
  %v449 = vunpack.c.h.b16 %v65
  %v450 = vunpack.c.l.b16 %v66
  %v451 = vunpack.c.h.b16 %v66
  %v452 = vunpack.c.l.b16 %v67
  %v453 = vunpack.c.h.b16 %v67
  %v454 = vunpack.c.l.b16 %v68
  %v455 = vunpack.c.h.b16 %v68
  %v456 = vunpack.c.l.b16 %v69
  %v457 = vunpack.c.h.b16 %v69
  %v458 = vunpack.c.l.b16 %v70
  %v459 = vunpack.c.h.b16 %v70
  %v460 = vunpack.c.l.b16 %v71
  %v461 = vunpack.c.h.b16 %v71
  %v462 = vunpack.c.l.b16 %v72
  %v463 = vunpack.c.h.b16 %v72
  %v464 = vunpack.c.l.b16 %v73
  %v465 = vunpack.c.h.b16 %v73
  %v466 = vunpack.c.l.b16 %v74
  %v467 = vunpack.c.h.b16 %v74
  %v468 = vunpack.c.l.b16 %v75
  %v469 = vunpack.c.h.b16 %v75
  %v470 = vunpack.c.l.b16 %v76
  %v471 = vunpack.c.h.b16 %v76
  %v472 = vunpack.c.l.b16 %v77
  %v473 = vunpack.c.h.b16 %v77
  %v474 = vunpack.c.l.b16 %v78
  %v475 = vunpack.c.h.b16 %v78
  %v476 = vunpack.c.l.b16 %v79
  %v477 = vunpack.c.h.b16 %v79
  %v478 = vunpack.c.l.b16 %v80
  %v479 = vunpack.c.h.b16 %v80
  %v480 = vunpack.c.l.b16 %v81
  %v481 = vunpack.c.h.b16 %v81
  %v482 = vunpack.c.l.b16 %v82
  %v483 = vunpack.c.h.b16 %v82
  %v484 = vunpack.c.l.b16 %v83
  %v485 = vunpack.c.h.b16 %v83
  %v486 = vunpack.c.l.b16 %v84
  %v487 = vunpack.c.h.b16 %v84
  %v488 = vunpack.c.l.b16 %v85
  %v489 = vunpack.c.h.b16 %v85
  %v490 = vunpack.c.l.b16 %v86
  %v491 = vunpack.c.h.b16 %v86
  %v492 = vunpack.c.l.b16 %v87
  %v493 = vunpack.c.h.b16 %v87
  %v494 = vunpack.c.l.b16 %v88
  %v495 = vunpack.c.h.b16 %v88
  %v496 = vunpack.c.l.b16 %v89
  %v497 = vunpack.c.h.b16 %v89
  %v498 = vunpack.c.l.b16 %v90
  %v499 = vunpack.c.h.b16 %v90
  %v500 = vunpack.c.l.b16 %v91
  %v501 = vunpack.c.h.b16 %v91
  %v502 = vunpack.c.l.b16 %v92
  %v503 = vunpack.c.h.b16 %v92
  %v504 = vunpack.c.l.b16 %v93
  %v505 = vunpack.c.h.b16 %v93
  %v506 = vunpack.c.l.b16 %v94
  %v507 = vunpack.c.h.b16 %v94
  %v508 = vunpack.c.l.b16 %v95
  %v509 = vunpack.c.h.b16 %v95
  %v510 = vunpack.c.l.b16 %v96
  %v511 = vunpack.c.h.b16 %v96
  %v512 = vunpack.c.l.b16 %v97
  %v513 = vunpack.c.h.b16 %v97
  %v514 = vunpack.c.l.b16 %v98
  %v515 = vunpack.c.h.b16 %v98
  %v516 = vunpack.c.l.b16 %v99
  %v517 = vunpack.c.h.b16 %v99
  %v518 = vunpack.c.l.b16 %v100
  %v519 = vunpack.c.h.b16 %v100
  %v520 = vunpack.c.l.b16 %v101
  %v521 = vunpack.c.h.b16 %v101
  %v522 = vunpack.c.l.b16 %v102
  %v523 = vunpack.c.h.b16 %v102
  %v524 = vunpack.c.l.b16 %v103
  %v525 = vunpack.c.h.b16 %v103
  %v526 = vunpack.c.l.b16 %v104
  %v527 = vunpack.c.h.b16 %v104
  %v528 = vunpack.c.l.b16 %v105
  %v529 = vunpack.c.h.b16 %v105
  %v530 = vunpack.c.l.b16 %v106
  %v531 = vunpack.c.h.b16 %v106
  %v532 = vunpack.c.l.b16 %v107
  %v533 = vunpack.c.h.b16 %v107
  %v534 = vunpack.c.l.b16 %v108
  %v535 = vunpack.c.h.b16 %v108
  %v536 = vunpack.c.l.b16 %v109
  %v537 = vunpack.c.h.b16 %v109
  %v538 = vunpack.c.l.b16 %v110
  %v539 = vunpack.c.h.b16 %v110
  %v540 = vunpack.c.l.b16 %v111
  %v541 = vunpack.c.h.b16 %v111
  %v542 = vunpack.c.l.b16 %v112
  %v543 = vunpack.c.h.b16 %v112
  %v544 = vunpack.c.l.b16 %v113
  %v545 = vunpack.c.h.b16 %v113
  %v546 = vunpack.c.l.b16 %v114
  %v547 = vunpack.c.h.b16 %v114
  %v548 = vunpack.c.l.b16 %v115
  %v549 = vunpack.c.h.b16 %v115
  %v550 = vunpack.c.l.b16 %v116
  %v551 = vunpack.c.h.b16 %v116
  %v552 = vunpack.c.l.b16 %v117
  %v553 = vunpack.c.h.b16 %v117
  %v554 = vunpack.c.l.b16 %v118
  %v555 = vunpack.c.h.b16 %v118
  %v556 = vunpack.c.l.b16 %v119
  %v557 = vunpack.c.h.b16 %v119
  %v558 = vunpack.c.l.b16 %v120
  %v559 = vunpack.c.h.b16 %v120
  %v560 = vunpack.c.l.b16 %v121
  %v561 = vunpack.c.h.b16 %v121
  %v562 = vunpack.c.l.b16 %v122
  %v563 = vunpack.c.h.b16 %v122
  %v564 = vunpack.c.l.b16 %v123
  %v565 = vunpack.c.h.b16 %v123
  %v566 = vunpack.c.l.b16 %v124
  %v567 = vunpack.c.h.b16 %v124
  %v568 = vunpack.c.l.b16 %v125
  %v569 = vunpack.c.h.b16 %v125
  %v570 = vunpack.c.l.b16 %v126
  %v571 = vunpack.c.h.b16 %v126
  %v572 = vunpack.c.l.b16 %v127
  %v573 = vunpack.c.h.b16 %v127
  %v574 = vunpack.c.l.b16 %v128
  %v575 = vunpack.c.h.b16 %v128
  %v576 = vunpack.c.l.b16 %v129
  %v577 = vunpack.c.h.b16 %v129
  %v578 = vunpack.c.l.b16 %v130
  %v579 = vunpack.c.h.b16 %v130
  %v580 = vunpack.c.l.b16 %v131
  %v581 = vunpack.c.h.b16 %v131
  %v582 = vunpack.c.l.b16 %v132
  %v583 = vunpack.c.h.b16 %v132
  %v584 = vunpack.c.l.b16 %v133
  %v585 = vunpack.c.h.b16 %v133
  %v586 = vunpack.c.l.b16 %v134
  %v587 = vunpack.c.h.b16 %v134
  %v588 = vunpack.c.l.b16 %v135
  %v589 = vunpack.c.h.b16 %v135
  %v590 = vunpack.c.l.b16 %v136
  %v591 = vunpack.c.h.b16 %v136
  %v592 = vunpack.c.l.b16 %v137
  %v593 = vunpack.c.h.b16 %v137
  %v594 = vunpack.c.l.b16 %v138
  %v595 = vunpack.c.h.b16 %v138
  %v596 = vunpack.c.l.b16 %v139
  %v597 = vunpack.c.h.b16 %v139
  %v598 = vunpack.c.l.b16 %v140
  %v599 = vunpack.c.h.b16 %v140
  %v600 = vunpack.c.l.b16 %v141
  %v601 = vunpack.c.h.b16 %v141
  %v602 = vunpack.c.l.b16 %v142
  %v603 = vunpack.c.h.b16 %v142
  %v604 = vunpack.c.l.b16 %v143
  %v605 = vunpack.c.h.b16 %v143
  %v606 = vunpack.c.l.b16 %v144
  %v607 = vunpack.c.h.b16 %v144
  %v608 = vunpack.c.l.b16 %v145
  %v609 = vunpack.c.h.b16 %v145
  %v610 = vunpack.c.l.b16 %v146
  %v611 = vunpack.c.h.b16 %v146
  %v612 = vunpack.c.l.b16 %v147
  %v613 = vunpack.c.h.b16 %v147
  %v614 = vunpack.c.l.b16 %v148
  %v615 = vunpack.c.h.b16 %v148
  %v616 = vunpack.c.l.b16 %v149
  %v617 = vunpack.c.h.b16 %v149
  %v618 = vpack.c.b16 %v428, %v426
  %v619 = vpack.c.b16 %v429, %v427
  %v620 = vpack.c.b16 %v432, %v430
  %v621 = vpack.c.b16 %v433, %v431
  %v622 = vpack.c.b16 %v436, %v434
  %v623 = vpack.c.b16 %v437, %v435
  %v624 = vpack.c.b16 %v440, %v438
  %v625 = vpack.c.b16 %v441, %v439
  %v626 = vpack.c.b16 %v444, %v442
  %v627 = vpack.c.b16 %v445, %v443
  %v628 = vpack.c.b16 %v448, %v446
  %v629 = vpack.c.b16 %v449, %v447
  %v630 = vpack.c.b16 %v452, %v450
  %v631 = vpack.c.b16 %v453, %v451
  %v632 = vpack.c.b16 %v456, %v454
  %v633 = vpack.c.b16 %v457, %v455
  %v634 = vpack.c.b16 %v460, %v458
  %v635 = vpack.c.b16 %v461, %v459
  %v636 = vpack.c.b16 %v464, %v462
  %v637 = vpack.c.b16 %v465, %v463
  %v638 = vpack.c.b16 %v468, %v466
  %v639 = vpack.c.b16 %v469, %v467
  %v640 = vpack.c.b16 %v472, %v470
  %v641 = vpack.c.b16 %v473, %v471
  %v642 = vpack.c.b16 %v476, %v474
  %v643 = vpack.c.b16 %v477, %v475
  %v644 = vpack.c.b16 %v480, %v478
  %v645 = vpack.c.b16 %v481, %v479
  %v646 = vpack.c.b16 %v484, %v482
  %v647 = vpack.c.b16 %v485, %v483
  %v648 = vpack.c.b16 %v488, %v486
  %v649 = vpack.c.b16 %v489, %v487
  %v650 = vpack.c.b16 %v492, %v490
  %v651 = vpack.c.b16 %v493, %v491
  %v652 = vpack.c.b16 %v496, %v494
  %v653 = vpack.c.b16 %v497, %v495
  %v654 = vpack.c.b16 %v500, %v498
  %v655 = vpack.c.b16 %v501, %v499
  %v656 = vpack.c.b16 %v504, %v502
  %v657 = vpack.c.b16 %v505, %v503
  %v658 = vpack.c.b16 %v508, %v506
  %v659 = vpack.c.b16 %v509, %v507
  %v660 = vpack.c.b16 %v512, %v510
  %v661 = vpack.c.b16 %v513, %v511
  %v662 = vpack.c.b16 %v516, %v514
  %v663 = vpack.c.b16 %v517, %v515
  %v664 = vpack.c.b16 %v520, %v518
  %v665 = vpack.c.b16 %v521, %v519
  %v666 = vpack.c.b16 %v524, %v522
  %v667 = vpack.c.b16 %v525, %v523
  %v668 = vpack.c.b16 %v528, %v526
  %v669 = vpack.c.b16 %v529, %v527
  %v670 = vpack.c.b16 %v532, %v530
  %v671 = vpack.c.b16 %v533, %v531
  %v672 = vpack.c.b16 %v536, %v534
  %v673 = vpack.c.b16 %v537, %v535
  %v674 = vpack.c.b16 %v540, %v538
  %v675 = vpack.c.b16 %v541, %v539
  %v676 = vpack.c.b16 %v544, %v542
  %v677 = vpack.c.b16 %v545, %v543
  %v678 = vpack.c.b16 %v548, %v546
  %v679 = vpack.c.b16 %v549, %v547
  %v680 = vpack.c.b16 %v552, %v550
  %v681 = vpack.c.b16 %v553, %v551
  %v682 = vpack.c.b16 %v556, %v554
  %v683 = vpack.c.b16 %v557, %v555
  %v684 = vpack.c.b16 %v560, %v558
  %v685 = vpack.c.b16 %v561, %v559
  %v686 = vpack.c.b16 %v564, %v562
  %v687 = vpack.c.b16 %v565, %v563
  %v688 = vpack.c.b16 %v568, %v566
  %v689 = vpack.c.b16 %v569, %v567
  %v690 = vpack.c.b16 %v572, %v570
  %v691 = vpack.c.b16 %v573, %v571
  %v692 = vpack.c.b16 %v576, %v574
  %v693 = vpack.c.b16 %v577, %v575
  %v694 = vpack.c.b16 %v580, %v578
  %v695 = vpack.c.b16 %v581, %v579
  %v696 = vpack.c.b16 %v584, %v582
  %v697 = vpack.c.b16 %v585, %v583
  %v698 = vpack.c.b16 %v588, %v586
  %v699 = vpack.c.b16 %v589, %v587
  %v700 = vpack.c.b16 %v592, %v590
  %v701 = vpack.c.b16 %v593, %v591
  %v702 = vpack.c.b16 %v596, %v594
  %v703 = vpack.c.b16 %v597, %v595
  %v704 = vpack.c.b16 %v600, %v598
  %v705 = vpack.c.b16 %v601, %v599
  %v706 = vpack.c.b16 %v604, %v602
  %v707 = vpack.c.b16 %v605, %v603
  %v708 = vpack.c.b16 %v608, %v606
  %v709 = vpack.c.b16 %v609, %v607
  %v710 = vpack.c.b16 %v612, %v610
  %v711 = vpack.c.b16 %v613, %v611
  %v712 = vpack.c.b16 %v616, %v614
  %v713 = vpack.c.b16 %v617, %v615
  %810 = vmatprep.subr.bf16.mxu0 %v633
  %811 = vmatpush1.bf16.msra.mxu0 %v632
  %812 = vmatprep.subr.bf16.mxu0 %v631
  %813 = vmatpush1.bf16.msra.mxu0 %v630
  %814 = vmatprep.subr.bf16.mxu0 %v629
  %815 = vmatpush1.bf16.msra.mxu0 %v628
  %816 = vmatprep.subr.bf16.mxu0 %v627
  %817 = vmatpush1.bf16.msra.mxu0 %v626
  %818 = vmatprep.subr.bf16.mxu0 %v625
  %819 = vmatpush1.bf16.msra.mxu0 %v624
  %820 = vmatprep.subr.bf16.mxu0 %v623
  %821 = vmatpush1.bf16.msra.mxu0 %v622
  %822 = vmatprep.subr.bf16.mxu0 %v621
  %823 = vmatpush1.bf16.msra.mxu0 %v620
  %824 = vmatprep.subr.bf16.mxu0 %v619
  %825 = vmatpush1.bf16.msra.mxu0 %v618
  %826 = vmatprep.subr.bf16.mxu0 %v649
  %827 = vmatpush2.bf16.msra.mxu0 %v648
  %828 = vmatprep.subr.bf16.mxu0 %v647
  %829 = vmatpush2.bf16.msra.mxu0 %v646
  %830 = vmatprep.subr.bf16.mxu0 %v645
  %831 = vmatpush2.bf16.msra.mxu0 %v644
  %832 = vmatprep.subr.bf16.mxu0 %v643
  %833 = vmatpush2.bf16.msra.mxu0 %v642
  %834 = vmatprep.subr.bf16.mxu0 %v641
  %835 = vmatpush2.bf16.msra.mxu0 %v640
  %836 = vmatprep.subr.bf16.mxu0 %v639
  %837 = vmatpush2.bf16.msra.mxu0 %v638
  %838 = vmatprep.subr.bf16.mxu0 %v637
  %839 = vmatpush2.bf16.msra.mxu0 %v636
  %840 = vmatprep.subr.bf16.mxu0 %v635
  %841 = vmatpush2.bf16.msra.mxu0 %v634
  %842 = vmatprep.mubr.bf16.mxu0 %v259
  %843 = vmatmul.mubr.bf16.gmra.mxu0 %v258
  %v844 = vpop.f32.mrf.mxu0
  %v845 = vadd.f32 0.0, %v844
  %v846 = vpop.f32.mrf.mxu0
  %v847 = vadd.f32 0.0, %v846
  %v848 = vpop.f32.mrf.mxu0
  %v849 = vadd.f32 0.0, %v848
  %v850 = vpop.f32.mrf.mxu0
  %v851 = vadd.f32 0.0, %v850
  %852 = vmatprep.mubr.bf16.mxu0 %v265
  %853 = vmatmul.mubr.bf16.gmra.mxu0 %v264
  %v854 = vpop.f32.mrf.mxu0
  %v855 = vadd.f32 0.0, %v854
  %v856 = vpop.f32.mrf.mxu0
  %v857 = vadd.f32 0.0, %v856
  %v858 = vpop.f32.mrf.mxu0
  %v859 = vadd.f32 0.0, %v858
  %v860 = vpop.f32.mrf.mxu0
  %v861 = vadd.f32 0.0, %v860
  %862 = vmatprep.mubr.bf16.mxu0 %v271
  %863 = vmatmul.mubr.bf16.gmra.mxu0 %v270
  %v864 = vpop.f32.mrf.mxu0
  %v865 = vadd.f32 0.0, %v864
  %v866 = vpop.f32.mrf.mxu0
  %v867 = vadd.f32 0.0, %v866
  %v868 = vpop.f32.mrf.mxu0
  %v869 = vadd.f32 0.0, %v868
  %v870 = vpop.f32.mrf.mxu0
  %v871 = vadd.f32 0.0, %v870
  %872 = vmatprep.mubr.bf16.mxu0 %v277
  %873 = vmatmul.mubr.bf16.gmra.mxu0 %v276
  %v874 = vpop.f32.mrf.mxu0
  %v875 = vadd.f32 0.0, %v874
  %v876 = vpop.f32.mrf.mxu0
  %v877 = vadd.f32 0.0, %v876
  %v878 = vpop.f32.mrf.mxu0
  %v879 = vadd.f32 0.0, %v878
  %v880 = vpop.f32.mrf.mxu0
  %v881 = vadd.f32 0.0, %v880
  %882 = vmatprep.mubr.bf16.mxu0 %v283
  %883 = vmatmul.mubr.bf16.gmra.mxu0 %v282
  %v884 = vpop.f32.mrf.mxu0
  %v885 = vadd.f32 0.0, %v884
  %v886 = vpop.f32.mrf.mxu0
  %v887 = vadd.f32 0.0, %v886
  %v888 = vpop.f32.mrf.mxu0
  %v889 = vadd.f32 0.0, %v888
  %v890 = vpop.f32.mrf.mxu0
  %v891 = vadd.f32 0.0, %v890
  %892 = vmatprep.mubr.bf16.mxu0 %v289
  %893 = vmatmul.mubr.bf16.gmra.mxu0 %v288
  %v894 = vpop.f32.mrf.mxu0
  %v895 = vadd.f32 0.0, %v894
  %v896 = vpop.f32.mrf.mxu0
  %v897 = vadd.f32 0.0, %v896
  %v898 = vpop.f32.mrf.mxu0
  %v899 = vadd.f32 0.0, %v898
  %v900 = vpop.f32.mrf.mxu0
  %v901 = vadd.f32 0.0, %v900
  %902 = vdwg.mxu0
  %903 = vmatprep.subr.bf16.mxu0 %v665
  %904 = vmatpush1.bf16.msra.mxu0 %v664
  %905 = vmatprep.subr.bf16.mxu0 %v663
  %906 = vmatpush1.bf16.msra.mxu0 %v662
  %907 = vmatprep.subr.bf16.mxu0 %v661
  %908 = vmatpush1.bf16.msra.mxu0 %v660
  %909 = vmatprep.subr.bf16.mxu0 %v659
  %910 = vmatpush1.bf16.msra.mxu0 %v658
  %911 = vmatprep.subr.bf16.mxu0 %v657
  %912 = vmatpush1.bf16.msra.mxu0 %v656
  %913 = vmatprep.subr.bf16.mxu0 %v655
  %914 = vmatpush1.bf16.msra.mxu0 %v654
  %915 = vmatprep.subr.bf16.mxu0 %v653
  %916 = vmatpush1.bf16.msra.mxu0 %v652
  %917 = vmatprep.subr.bf16.mxu0 %v651
  %918 = vmatpush1.bf16.msra.mxu0 %v650
  %919 = vmatprep.subr.bf16.mxu0 %v681
  %920 = vmatpush2.bf16.msra.mxu0 %v680
  %921 = vmatprep.subr.bf16.mxu0 %v679
  %922 = vmatpush2.bf16.msra.mxu0 %v678
  %923 = vmatprep.subr.bf16.mxu0 %v677
  %924 = vmatpush2.bf16.msra.mxu0 %v676
  %925 = vmatprep.subr.bf16.mxu0 %v675
  %926 = vmatpush2.bf16.msra.mxu0 %v674
  %927 = vmatprep.subr.bf16.mxu0 %v673
  %928 = vmatpush2.bf16.msra.mxu0 %v672
  %929 = vmatprep.subr.bf16.mxu0 %v671
  %930 = vmatpush2.bf16.msra.mxu0 %v670
  %931 = vmatprep.subr.bf16.mxu0 %v669
  %932 = vmatpush2.bf16.msra.mxu0 %v668
  %933 = vmatprep.subr.bf16.mxu0 %v667
  %934 = vmatpush2.bf16.msra.mxu0 %v666
  %935 = vmatprep.mubr.bf16.mxu0 %v261
  %936 = vmatmul.mubr.bf16.gmra.mxu0 %v260
  %v937 = vpop.f32.mrf.mxu0
  %v938 = vadd.f32 %v845, %v937
  %v939 = vpop.f32.mrf.mxu0
  %v940 = vadd.f32 %v847, %v939
  %v941 = vpop.f32.mrf.mxu0
  %v942 = vadd.f32 %v849, %v941
  %v943 = vpop.f32.mrf.mxu0
  %v944 = vadd.f32 %v851, %v943
  %945 = vmatprep.mubr.bf16.mxu0 %v267
  %946 = vmatmul.mubr.bf16.gmra.mxu0 %v266
  %v947 = vpop.f32.mrf.mxu0
  %v948 = vadd.f32 %v855, %v947
  %v949 = vpop.f32.mrf.mxu0
  %v950 = vadd.f32 %v857, %v949
  %v951 = vpop.f32.mrf.mxu0
  %v952 = vadd.f32 %v859, %v951
  %v953 = vpop.f32.mrf.mxu0
  %v954 = vadd.f32 %v861, %v953
  %955 = vmatprep.mubr.bf16.mxu0 %v273
  %956 = vmatmul.mubr.bf16.gmra.mxu0 %v272
  %v957 = vpop.f32.mrf.mxu0
  %v958 = vadd.f32 %v865, %v957
  %v959 = vpop.f32.mrf.mxu0
  %v960 = vadd.f32 %v867, %v959
  %v961 = vpop.f32.mrf.mxu0
  %v962 = vadd.f32 %v869, %v961
  %v963 = vpop.f32.mrf.mxu0
  %v964 = vadd.f32 %v871, %v963
  %965 = vmatprep.mubr.bf16.mxu0 %v279
  %966 = vmatmul.mubr.bf16.gmra.mxu0 %v278
  %v967 = vpop.f32.mrf.mxu0
  %v968 = vadd.f32 %v875, %v967
  %v969 = vpop.f32.mrf.mxu0
  %v970 = vadd.f32 %v877, %v969
  %v971 = vpop.f32.mrf.mxu0
  %v972 = vadd.f32 %v879, %v971
  %v973 = vpop.f32.mrf.mxu0
  %v974 = vadd.f32 %v881, %v973
  %975 = vmatprep.mubr.bf16.mxu0 %v285
  %976 = vmatmul.mubr.bf16.gmra.mxu0 %v284
  %v977 = vpop.f32.mrf.mxu0
  %v978 = vadd.f32 %v885, %v977
  %v979 = vpop.f32.mrf.mxu0
  %v980 = vadd.f32 %v887, %v979
  %v981 = vpop.f32.mrf.mxu0
  %v982 = vadd.f32 %v889, %v981
  %v983 = vpop.f32.mrf.mxu0
  %v984 = vadd.f32 %v891, %v983
  %985 = vmatprep.mubr.bf16.mxu0 %v291
  %986 = vmatmul.mubr.bf16.gmra.mxu0 %v290
  %v987 = vpop.f32.mrf.mxu0
  %v988 = vadd.f32 %v895, %v987
  %v989 = vpop.f32.mrf.mxu0
  %v990 = vadd.f32 %v897, %v989
  %v991 = vpop.f32.mrf.mxu0
  %v992 = vadd.f32 %v899, %v991
  %v993 = vpop.f32.mrf.mxu0
  %v994 = vadd.f32 %v901, %v993
  %995 = vdwg.mxu0
  %996 = vmatprep.subr.bf16.mxu0 %v697
  %997 = vmatpush1.bf16.msra.mxu0 %v696
  %998 = vmatprep.subr.bf16.mxu0 %v695
  %999 = vmatpush1.bf16.msra.mxu0 %v694
  %1000 = vmatprep.subr.bf16.mxu0 %v693
  %1001 = vmatpush1.bf16.msra.mxu0 %v692
  %1002 = vmatprep.subr.bf16.mxu0 %v691
  %1003 = vmatpush1.bf16.msra.mxu0 %v690
  %1004 = vmatprep.subr.bf16.mxu0 %v689
  %1005 = vmatpush1.bf16.msra.mxu0 %v688
  %1006 = vmatprep.subr.bf16.mxu0 %v687
  %1007 = vmatpush1.bf16.msra.mxu0 %v686
  %1008 = vmatprep.subr.bf16.mxu0 %v685
  %1009 = vmatpush1.bf16.msra.mxu0 %v684
  %1010 = vmatprep.subr.bf16.mxu0 %v683
  %1011 = vmatpush1.bf16.msra.mxu0 %v682
  %1012 = vmatprep.subr.bf16.mxu0 %v713
  %1013 = vmatpush2.bf16.msra.mxu0 %v712
  %1014 = vmatprep.subr.bf16.mxu0 %v711
  %1015 = vmatpush2.bf16.msra.mxu0 %v710
  %1016 = vmatprep.subr.bf16.mxu0 %v709
  %1017 = vmatpush2.bf16.msra.mxu0 %v708
  %1018 = vmatprep.subr.bf16.mxu0 %v707
  %1019 = vmatpush2.bf16.msra.mxu0 %v706
  %1020 = vmatprep.subr.bf16.mxu0 %v705
  %1021 = vmatpush2.bf16.msra.mxu0 %v704
  %1022 = vmatprep.subr.bf16.mxu0 %v703
  %1023 = vmatpush2.bf16.msra.mxu0 %v702
  %1024 = vmatprep.subr.bf16.mxu0 %v701
  %1025 = vmatpush2.bf16.msra.mxu0 %v700
  %1026 = vmatprep.subr.bf16.mxu0 %v699
  %1027 = vmatpush2.bf16.msra.mxu0 %v698
  %1028 = vmatprep.mubr.bf16.mxu0 %v263
  %1029 = vmatmul.mubr.bf16.gmra.mxu0 %v262
  %v1030 = vpop.f32.mrf.mxu0
  %v1031 = vadd.f32 %v938, %v1030
  %v1032 = vpop.f32.mrf.mxu0
  %v1033 = vadd.f32 %v940, %v1032
  %v1034 = vpop.f32.mrf.mxu0
  %v1035 = vadd.f32 %v942, %v1034
  %v1036 = vpop.f32.mrf.mxu0
  %v1037 = vadd.f32 %v944, %v1036
  %1038 = vmatprep.mubr.bf16.mxu0 %v269
  %1039 = vmatmul.mubr.bf16.gmra.mxu0 %v268
  %v1040 = vpop.f32.mrf.mxu0
  %v1041 = vadd.f32 %v948, %v1040
  %v1042 = vpop.f32.mrf.mxu0
  %v1043 = vadd.f32 %v950, %v1042
  %v1044 = vpop.f32.mrf.mxu0
  %v1045 = vadd.f32 %v952, %v1044
  %v1046 = vpop.f32.mrf.mxu0
  %v1047 = vadd.f32 %v954, %v1046
  %1048 = vmatprep.mubr.bf16.mxu0 %v275
  %1049 = vmatmul.mubr.bf16.gmra.mxu0 %v274
  %v1050 = vpop.f32.mrf.mxu0
  %v1051 = vadd.f32 %v958, %v1050
  %v1052 = vpop.f32.mrf.mxu0
  %v1053 = vadd.f32 %v960, %v1052
  %v1054 = vpop.f32.mrf.mxu0
  %v1055 = vadd.f32 %v962, %v1054
  %v1056 = vpop.f32.mrf.mxu0
  %v1057 = vadd.f32 %v964, %v1056
  %1058 = vmatprep.mubr.bf16.mxu0 %v281
  %1059 = vmatmul.mubr.bf16.gmra.mxu0 %v280
  %v1060 = vpop.f32.mrf.mxu0
  %v1061 = vadd.f32 %v968, %v1060
  %v1062 = vpop.f32.mrf.mxu0
  %v1063 = vadd.f32 %v970, %v1062
  %v1064 = vpop.f32.mrf.mxu0
  %v1065 = vadd.f32 %v972, %v1064
  %v1066 = vpop.f32.mrf.mxu0
  %v1067 = vadd.f32 %v974, %v1066
  %1068 = vmatprep.mubr.bf16.mxu0 %v287
  %1069 = vmatmul.mubr.bf16.gmra.mxu0 %v286
  %v1070 = vpop.f32.mrf.mxu0
  %v1071 = vadd.f32 %v978, %v1070
  %v1072 = vpop.f32.mrf.mxu0
  %v1073 = vadd.f32 %v980, %v1072
  %v1074 = vpop.f32.mrf.mxu0
  %v1075 = vadd.f32 %v982, %v1074
  %v1076 = vpop.f32.mrf.mxu0
  %v1077 = vadd.f32 %v984, %v1076
  %1078 = vmatprep.mubr.bf16.mxu0 %v293
  %1079 = vmatmul.mubr.bf16.gmra.mxu0 %v292
  %v1080 = vpop.f32.mrf.mxu0
  %v1081 = vadd.f32 %v988, %v1080
  %v1082 = vpop.f32.mrf.mxu0
  %v1083 = vadd.f32 %v990, %v1082
  %v1084 = vpop.f32.mrf.mxu0
  %v1085 = vadd.f32 %v992, %v1084
  %v1086 = vpop.f32.mrf.mxu0
  %v1087 = vadd.f32 %v994, %v1086
  %1088 = vdwg.mxu0
  %v1089 = vld [vmem:[%s3] sm:$0xf]
  %v1090 = vadd.f32 %v1031, %v1035
  %v1091 = vadd.f32 %v1090, %v1041
  %v1092 = vadd.f32 %v1091, %v1045
  %v1093 = vadd.f32 %v1092, %v1051
  %v1094 = vadd.f32 %v1093, %v1055
  %v1095 = vadd.f32 %v1094, %v1061
  %v1096 = vadd.f32 %v1095, %v1065
  %v1097 = vadd.f32 %v1096, %v1071
  %v1098 = vadd.f32 %v1097, %v1075
  %v1099 = vadd.f32 %v1098, %v1081
  %v1100 = vadd.f32 %v1099, %v1085
  %v1101 = vrot.slane %v1100, 4
  %v1102 = vadd.f32 %v1100, %v1101
  %v1103 = vrot.slane %v1102, 2
  %v1104 = vadd.f32 %v1102, %v1103
  %v1105 = vrot.slane %v1104, 1
  %v1106 = vadd.f32 %v1104, %v1105
  %v1107 = vadd.f32 %v1033, %v1037
  %v1108 = vadd.f32 %v1107, %v1043
  %v1109 = vadd.f32 %v1108, %v1047
  %v1110 = vadd.f32 %v1109, %v1053
  %v1111 = vadd.f32 %v1110, %v1057
  %v1112 = vadd.f32 %v1111, %v1063
  %v1113 = vadd.f32 %v1112, %v1067
  %v1114 = vadd.f32 %v1113, %v1073
  %v1115 = vadd.f32 %v1114, %v1077
  %v1116 = vadd.f32 %v1115, %v1083
  %v1117 = vadd.f32 %v1116, %v1087
  %v1118 = vrot.slane %v1117, 4
  %v1119 = vadd.f32 %v1117, %v1118
  %v1120 = vrot.slane %v1119, 2
  %v1121 = vadd.f32 %v1119, %v1120
  %v1122 = vrot.slane %v1121, 1
  %v1123 = vadd.f32 %v1121, %v1122
  %v1124 = vmul.f32 %v1031, %v1031
  %v1125 = vmul.f32 %v1033, %v1033
  %v1126 = vmul.f32 %v1035, %v1035
  %v1127 = vmul.f32 %v1037, %v1037
  %v1128 = vmul.f32 %v1041, %v1041
  %v1129 = vmul.f32 %v1043, %v1043
  %v1130 = vmul.f32 %v1045, %v1045
  %v1131 = vmul.f32 %v1047, %v1047
  %v1132 = vmul.f32 %v1051, %v1051
  %v1133 = vmul.f32 %v1053, %v1053
  %v1134 = vmul.f32 %v1055, %v1055
  %v1135 = vmul.f32 %v1057, %v1057
  %v1136 = vmul.f32 %v1061, %v1061
  %v1137 = vmul.f32 %v1063, %v1063
  %v1138 = vmul.f32 %v1065, %v1065
  %v1139 = vmul.f32 %v1067, %v1067
  %v1140 = vmul.f32 %v1071, %v1071
  %v1141 = vmul.f32 %v1073, %v1073
  %v1142 = vmul.f32 %v1075, %v1075
  %v1143 = vmul.f32 %v1077, %v1077
  %v1144 = vmul.f32 %v1081, %v1081
  %v1145 = vmul.f32 %v1083, %v1083
  %v1146 = vmul.f32 %v1085, %v1085
  %v1147 = vmul.f32 %v1087, %v1087
  %v1148 = vadd.f32 %v1124, %v1126
  %v1149 = vadd.f32 %v1148, %v1128
  %v1150 = vadd.f32 %v1149, %v1130
  %v1151 = vadd.f32 %v1150, %v1132
  %v1152 = vadd.f32 %v1151, %v1134
  %v1153 = vadd.f32 %v1152, %v1136
  %v1154 = vadd.f32 %v1153, %v1138
  %v1155 = vadd.f32 %v1154, %v1140
  %v1156 = vadd.f32 %v1155, %v1142
  %v1157 = vadd.f32 %v1156, %v1144
  %v1158 = vadd.f32 %v1157, %v1146
  %v1159 = vrot.slane %v1158, 4
  %v1160 = vadd.f32 %v1158, %v1159
  %v1161 = vrot.slane %v1160, 2
  %v1162 = vadd.f32 %v1160, %v1161
  %v1163 = vrot.slane %v1162, 1
  %v1164 = vadd.f32 %v1162, %v1163
  %v1165 = vadd.f32 %v1125, %v1127
  %v1166 = vadd.f32 %v1165, %v1129
  %v1167 = vadd.f32 %v1166, %v1131
  %v1168 = vadd.f32 %v1167, %v1133
  %v1169 = vadd.f32 %v1168, %v1135
  %v1170 = vadd.f32 %v1169, %v1137
  %v1171 = vadd.f32 %v1170, %v1139
  %v1172 = vadd.f32 %v1171, %v1141
  %v1173 = vadd.f32 %v1172, %v1143
  %v1174 = vadd.f32 %v1173, %v1145
  %v1175 = vadd.f32 %v1174, %v1147
  %v1176 = vrot.slane %v1175, 4
  %v1177 = vadd.f32 %v1175, %v1176
  %v1178 = vrot.slane %v1177, 2
  %v1179 = vadd.f32 %v1177, %v1178
  %v1180 = vrot.slane %v1179, 1
  %v1181 = vadd.f32 %v1179, %v1180
  %vm1182 = vcmask 1040384
  %v1183 = vsel %vm1182, %v1106, %v1164
  %v1184 = vsel %vm1182, %v1123, %v1181
  %v1187 = vcombine.low %v1183, %v1184
  %v1189 = vunpack.c.l.s4 1983009808
  %v1190 = vunpack.c.0.s8 %v1189
  %v1191 = vlaneseq
  %v1192 = vshrl.u32 %v1191, 7
  %v1193 = vsub.s32 %v1190, %v1192
  %v1194 = vrot.slane %v1187, %v1193
  %v1196 = vadd.f32 %v1089, %v1194
  %1197 = vst [vmem:[%s3] sm:$0xf] %v1196
  %v1198 = vpack.c.bf16 %v1035, %v1031
  %v1199 = vpack.c.bf16 %v1037, %v1033
  %v1200 = vpack.c.bf16 %v1045, %v1041
  %v1201 = vpack.c.bf16 %v1047, %v1043
  %v1202 = vpack.c.bf16 %v1055, %v1051
  %v1203 = vpack.c.bf16 %v1057, %v1053
  %v1204 = vpack.c.bf16 %v1065, %v1061
  %v1205 = vpack.c.bf16 %v1067, %v1063
  %v1206 = vpack.c.bf16 %v1075, %v1071
  %v1207 = vpack.c.bf16 %v1077, %v1073
  %v1208 = vpack.c.bf16 %v1085, %v1081
  %v1209 = vpack.c.bf16 %v1087, %v1083
  %v1222 = vunpack.c.l.b16 %v1198
  %v1223 = vunpack.c.l.b16 %v1199
  %v1224 = vunpack.c.h.b16 %v1198
  %v1225 = vunpack.c.h.b16 %v1199
  %v1226 = vunpack.c.l.b16 %v1200
  %v1227 = vunpack.c.l.b16 %v1201
  %v1228 = vunpack.c.h.b16 %v1200
  %v1229 = vunpack.c.h.b16 %v1201
  %v1230 = vunpack.c.l.b16 %v1202
  %v1231 = vunpack.c.l.b16 %v1203
  %v1232 = vunpack.c.h.b16 %v1202
  %v1233 = vunpack.c.h.b16 %v1203
  %v1234 = vunpack.c.l.b16 %v1204
  %v1235 = vunpack.c.l.b16 %v1205
  %v1236 = vunpack.c.h.b16 %v1204
  %v1237 = vunpack.c.h.b16 %v1205
  %v1238 = vunpack.c.l.b16 %v1206
  %v1239 = vunpack.c.l.b16 %v1207
  %v1240 = vunpack.c.h.b16 %v1206
  %v1241 = vunpack.c.h.b16 %v1207
  %v1242 = vunpack.c.l.b16 %v1208
  %v1243 = vunpack.c.l.b16 %v1209
  %v1244 = vunpack.c.h.b16 %v1208
  %v1245 = vunpack.c.h.b16 %v1209
  %v1246 = vpack.c.b16 %v1223, %v1222
  %v1247 = vpack.c.b16 %v1225, %v1224
  %v1248 = vpack.c.b16 %v1227, %v1226
  %v1249 = vpack.c.b16 %v1229, %v1228
  %v1250 = vpack.c.b16 %v1231, %v1230
  %v1251 = vpack.c.b16 %v1233, %v1232
  %v1252 = vpack.c.b16 %v1235, %v1234
  %v1253 = vpack.c.b16 %v1237, %v1236
  %v1254 = vpack.c.b16 %v1239, %v1238
  %v1255 = vpack.c.b16 %v1241, %v1240
  %v1256 = vpack.c.b16 %v1243, %v1242
  %v1257 = vpack.c.b16 %v1245, %v1244
  %1270 = vst [vmem:[%s2] sm:$0xff] %v1246
  %1271 = vst [vmem:[%s2 + $0x8] sm:$0xff] %v1247
  %1272 = vst [vmem:[%s2 + $0x10] sm:$0xff] %v1248
  %1273 = vst [vmem:[%s2 + $0x18] sm:$0xff] %v1249
  %1274 = vst [vmem:[%s2 + $0x20] sm:$0xff] %v1250
  %1275 = vst [vmem:[%s2 + $0x28] sm:$0xff] %v1251
  %1276 = vst [vmem:[%s2 + $0x30] sm:$0xff] %v1252
  %1277 = vst [vmem:[%s2 + $0x38] sm:$0xff] %v1253
  %1278 = vst [vmem:[%s2 + $0x40] sm:$0xff] %v1254
  %1279 = vst [vmem:[%s2 + $0x48] sm:$0xff] %v1255
  %1280 = vst [vmem:[%s2 + $0x50] sm:$0xff] %v1256
  %1281 = vst [vmem:[%s2 + $0x58] sm:$0xff] %v1257
  // Predicated region
  $region14: #{wcnn_forward.14} parent=0 // pred_check
    _
  $region15: #{wcnn_forward.14} parent=0 // pred_check_branch
    %1283 = sbr.rel (0) target = $region17
  $region16: #{wcnn_forward.14} parent=0 // pred_region
    _
  $region17: #{wcnn_forward.14} parent=0 // pred_fallthru
    _
  // Predicated region
  $region18: #{wcnn_forward.14} parent=0 // pred_check
    _
  $region19: #{wcnn_forward.14} parent=0 // pred_check_branch
    %1285 = sbr.rel (0) target = $region21
  $region20: #{wcnn_forward.14} parent=0 // pred_region
    _
  $region21: #{wcnn_forward.14} parent=0 // pred_fallthru
    _
  // Predicated region
  $region22: #{wcnn_forward.14} parent=0 // pred_check
    _
  $region23: #{wcnn_forward.14} parent=0 // pred_check_branch
    %1287 = sbr.rel (0) target = $region25
  $region24: #{wcnn_forward.14} parent=0 // pred_region
    _
  $region25: #{wcnn_forward.14} parent=0 // pred_fallthru
    _
  // Predicated region
  $region26: #{wcnn_forward.14} parent=0 // pred_check
    _
  $region27: #{wcnn_forward.14} parent=0 // pred_check_branch
    %1289 = sbr.rel (0) target = $region29
  $region28: #{wcnn_forward.14} parent=0 // pred_region
    _
  $region29: #{wcnn_forward.14} parent=0 // pred_fallthru
    _

// kernel: wcnn_forward.15
$region0: #{wcnn_forward.15}
  #allocation0 [shape = 'u32[]', space=smem, size = 0x4, offset = 0x4, fixed_abs, tag = 'smem constant byte address 0x4 - core index']
  #allocation1 [shape = 'u32[144,128]{1,0:T(1,128)}', space=vmem, size = 0x12000, scoped, tag = 'internal scratch']
  %s0 = inlined_call_operand.vmem [shape: f32[2,256], index: 0, kind: input, shape index: {}]
  %s1 = inlined_call_operand.vmem [shape: f32[1,256], index: 1, kind: input, shape index: {}]
  %s2 = inlined_call_operand.vmem [shape: f32[1,256], index: 2, kind: input, shape index: {}]
  %s3 = inlined_call_operand.vmem [shape: bf16[2,48,256], index: 3, kind: input, shape index: {}]
  %s4 = inlined_call_operand.vmem [shape: f32[2,1,256], index: 4, kind: output, shape index: {}]
  %s5 = sld [smem:[#allocation0]]
  $region53: #{wcnn_forward.15} parent=0
    _
  %s7 = ssub.s32 1, %s5
  %s8 = scalar_select 0, %s7, %s5
  loop: start=0, step=1, limit=4
  $region2: #{wcnn_forward.15} parent=0 // loop_pre_header
    _
  $region3: #{wcnn_forward.15} parent=0 // loop_header
    %s10 = sphi 0, %s14
    %p11 = scmp.ge.s32.totalorder %s10, 4
    %s17 = sphi 0, %s29
    %s18 = sphi 0, %s25
    %s19 = sphi 0, %s17
    %s20 = sphi 0, %s18
    %s21 = sphi 0, %s19
    %s22 = sphi 0, %s20
    %s30 = sphi 0, %s30
    %s32 = sphi 0, %s30
    %s33 = sphi 0, %s32
    %s47 = sphi 0, %s33
    %s51 = sphi 0, %s51
    %s53 = sphi 0, %s51
    %s54 = sphi 0, %s53
    %s68 = sphi 0, %s54
    %s72 = sphi 0, %s72
    %s74 = sphi 0, %s72
    %s75 = sphi 0, %s74
    %s89 = sphi 0, %s75
    %s97 = sphi 0, %s99
    %s100 = sphi 0, %s97
    %s101 = sphi 0, %s100
    %s117 = sphi 0, %s101
    %s123 = sphi 0, %s125
    %s126 = sphi 0, %s123
    %s127 = sphi 0, %s126
    %s143 = sphi 0, %s127
  $region4: #{wcnn_forward.15} parent=0 // loop_header_branch
    %13 = sbr.rel (%p11) target = $region8
  $region5: #{wcnn_forward.15} parent=0 // loop_body
    %s15 = ssub.s32 %s10, 1
    %s16 = ssub.s32 %s10, 2
    %s23 = sadd.s32 1, %s18
    %p24 = scmp.ge.s32.totalorder %s23, 1
    %s25 = scalar_select %p24, 0, %s23
    %s26 = sadd.s32 1, %s17
    %s27 = scalar_select %p24, %s26, %s17
    %p28 = scmp.ge.s32.totalorder %s27, 2
    %s29 = scalar_select %p28, 0, %s27
    %s31 = sadd.s32 %s30, 1
    %p34 = scmp.eq.s32.totalorder %s10, 1
    %p35 = scmp.ne.s32.totalorder %s30, %s32
    %p36 = scmp.eq.s32.totalorder %s10, 0
    %p37 = por %p35, %p36
    %p38 = scmp.ne.s32.totalorder %s30, %s32
    %p39 = scmp.eq.s32.totalorder %s15, 1
    %p40 = por %p38, %p39
    %p41 = scmp.ne.s32.totalorder %s32, %s33
    %p42 = scmp.eq.s32.totalorder %s15, 0
    %p43 = por %p41, %p42
    %p44 = scmp.ne.s32.totalorder %s32, %s33
    %p45 = scmp.eq.s32.totalorder %s16, 1
    %p46 = por %p44, %p45
    %p48 = scmp.ne.s32.totalorder %s33, %s47
    %p49 = scmp.eq.s32.totalorder %s16, 0
    %p50 = por %p48, %p49
    %s52 = sadd.s32 %s51, 1
    %p55 = scmp.eq.s32.totalorder %s10, 1
    %p56 = scmp.ne.s32.totalorder %s51, %s53
    %p57 = scmp.eq.s32.totalorder %s10, 0
    %p58 = por %p56, %p57
    %p59 = scmp.ne.s32.totalorder %s51, %s53
    %p60 = scmp.eq.s32.totalorder %s15, 1
    %p61 = por %p59, %p60
    %p62 = scmp.ne.s32.totalorder %s53, %s54
    %p63 = scmp.eq.s32.totalorder %s15, 0
    %p64 = por %p62, %p63
    %p65 = scmp.ne.s32.totalorder %s53, %s54
    %p66 = scmp.eq.s32.totalorder %s16, 1
    %p67 = por %p65, %p66
    %p69 = scmp.ne.s32.totalorder %s54, %s68
    %p70 = scmp.eq.s32.totalorder %s16, 0
    %p71 = por %p69, %p70
    %s73 = sadd.s32 %s72, 1
    %p76 = scmp.eq.s32.totalorder %s10, 1
    %p77 = scmp.ne.s32.totalorder %s72, %s74
    %p78 = scmp.eq.s32.totalorder %s10, 0
    %p79 = por %p77, %p78
    %p80 = scmp.ne.s32.totalorder %s72, %s74
    %p81 = scmp.eq.s32.totalorder %s15, 1
    %p82 = por %p80, %p81
    %p83 = scmp.ne.s32.totalorder %s74, %s75
    %p84 = scmp.eq.s32.totalorder %s15, 0
    %p85 = por %p83, %p84
    %p86 = scmp.ne.s32.totalorder %s74, %s75
    %p87 = scmp.eq.s32.totalorder %s16, 1
    %p88 = por %p86, %p87
    %p90 = scmp.ne.s32.totalorder %s75, %s89
    %p91 = scmp.eq.s32.totalorder %s16, 0
    %p92 = por %p90, %p91
    %s93 = ssub.s32 %s17, %s29
    %s94 = ssub.s32 %s18, %s25
    %s95 = sor.u32 %s93, %s94
    %p96 = scmp.eq.s32.totalorder %s95, 0
    %s98 = sadd.s32 %s97, 1
    %s99 = scalar_select %p96, %s97, %s98
    %p102 = pneg %p96
    %p103 = scmp.eq.s32.totalorder %s10, 1
    %p104 = por %p102, %p103
    %p105 = scmp.ne.s32.totalorder %s97, %s100
    %p106 = scmp.eq.s32.totalorder %s10, 0
    %p107 = por %p105, %p106
    %p108 = scmp.ne.s32.totalorder %s97, %s100
    %p109 = scmp.eq.s32.totalorder %s15, 1
    %p110 = por %p108, %p109
    %p111 = scmp.ne.s32.totalorder %s100, %s101
    %p112 = scmp.eq.s32.totalorder %s15, 0
    %p113 = por %p111, %p112
    %p114 = scmp.ne.s32.totalorder %s100, %s101
    %p115 = scmp.eq.s32.totalorder %s16, 1
    %p116 = por %p114, %p115
    %p118 = scmp.ne.s32.totalorder %s101, %s117
    %p119 = scmp.eq.s32.totalorder %s16, 0
    %p120 = por %p118, %p119
    %s121 = ssub.s32 %s17, %s29
    %p122 = scmp.eq.s32.totalorder %s121, 0
    %s124 = sadd.s32 %s123, 1
    %s125 = scalar_select %p122, %s123, %s124
    %p128 = pneg %p122
    %p129 = scmp.eq.s32.totalorder %s10, 1
    %p130 = por %p128, %p129
    %p131 = scmp.ne.s32.totalorder %s123, %s126
    %p132 = scmp.eq.s32.totalorder %s10, 0
    %p133 = por %p131, %p132
    %p134 = scmp.ne.s32.totalorder %s123, %s126
    %p135 = scmp.eq.s32.totalorder %s15, 1
    %p136 = por %p134, %p135
    %p137 = scmp.ne.s32.totalorder %s126, %s127
    %p138 = scmp.eq.s32.totalorder %s15, 0
    %p139 = por %p137, %p138
    %p140 = scmp.ne.s32.totalorder %s126, %s127
    %p141 = scmp.eq.s32.totalorder %s16, 1
    %p142 = por %p140, %p141
    %p144 = scmp.ne.s32.totalorder %s127, %s143
    %p145 = scmp.eq.s32.totalorder %s16, 0
    %p146 = por %p144, %p145
    %p147 = scmp.le.s32.totalorder 1, %s10
    %p148 = scmp.lt.s32.totalorder %s10, 3
    %p149 = pnand %p147, %p148
    %p150 = pneg %p149
    // Predicated region
    $region9: #{wcnn_forward.15} parent=5 // pred_check
      _
    $region10: #{wcnn_forward.15} parent=5 // pred_check_branch
      %152 = sbr.rel (%p149) target = $region12
    $region11: #{wcnn_forward.15} parent=5 // pred_region
      %s153 = ssub.s32 %s10, 1
      // Predicated region
      $region13: #{wcnn_forward.15} parent=11 // pred_check
        %p154 = pneg %p43
      $region14: #{wcnn_forward.15} parent=11 // pred_check_branch
        %156 = sbr.rel (%p154) target = $region16
      $region15: #{wcnn_forward.15} parent=11 // pred_region
        _
      $region16: #{wcnn_forward.15} parent=11 // pred_fallthru
        _
      // Predicated region
      $region17: #{wcnn_forward.15} parent=11 // pred_check
        %p157 = pneg %p64
      $region18: #{wcnn_forward.15} parent=11 // pred_check_branch
        %159 = sbr.rel (%p157) target = $region20
      $region19: #{wcnn_forward.15} parent=11 // pred_region
        _
      $region20: #{wcnn_forward.15} parent=11 // pred_fallthru
        _
      // Predicated region
      $region21: #{wcnn_forward.15} parent=11 // pred_check
        %p160 = pneg %p85
      $region22: #{wcnn_forward.15} parent=11 // pred_check_branch
        %162 = sbr.rel (%p160) target = $region24
      $region23: #{wcnn_forward.15} parent=11 // pred_region
        _
      $region24: #{wcnn_forward.15} parent=11 // pred_fallthru
        _
    $region12: #{wcnn_forward.15} parent=5 // pred_fallthru
      _
    %p163 = scmp.lt.s32.totalorder %s10, 2
    // Predicated region
    $region25: #{wcnn_forward.15} parent=5 // pred_check
      %p164 = pneg %p163
    $region26: #{wcnn_forward.15} parent=5 // pred_check_branch
      %166 = sbr.rel (%p164) target = $region28
    $region27: #{wcnn_forward.15} parent=5 // pred_region
      // Predicated region
      $region29: #{wcnn_forward.15} parent=27 // pred_check
        %p167 = pneg %p107
      $region30: #{wcnn_forward.15} parent=27 // pred_check_branch
        %169 = sbr.rel (%p167) target = $region32
      $region31: #{wcnn_forward.15} parent=27 // pred_region
        %s170 = smul.u32 6, %s18
        %p171 = scmp.lt.s32.totalorder %s17, 1
        %s172 = scalar_select %p171, %s17, 1
        %p173 = scmp.lt.s32.totalorder %s170, 5
        %s174 = scalar_select %p173, %s170, 5
        %s175 = smul.addr %s174, 2
        %s176 = smul.addr %s172, 12
        %s177 = sadd.s32 %s175, %s176
        %s178 = smul.addr %s177, 4
        %s179 = scalar_lea.vmem %s3, %s178
        %s180 = smul.u32 6, %s18
      $region32: #{wcnn_forward.15} parent=27 // pred_fallthru
        _
    $region28: #{wcnn_forward.15} parent=5 // pred_fallthru
      _
    %p181 = scmp.le.s32.totalorder 1, %s10
    %p182 = scmp.lt.s32.totalorder %s10, 3
    %p183 = pnand %p181, %p182
    %p184 = pneg %p183
    // Predicated region
    $region33: #{wcnn_forward.15} parent=5 // pred_check
      _
    $region34: #{wcnn_forward.15} parent=5 // pred_check_branch
      %186 = sbr.rel (%p183) target = $region36
    $region35: #{wcnn_forward.15} parent=5 // pred_region
      %s187 = ssub.s32 %s10, 1
      %p188 = pneg %p43
      %p189 = pneg %p40
      %p190 = pneg %p64
      %p191 = pneg %p61
      %p192 = pneg %p85
      %p193 = pneg %p82
      %s194 = smul.u32 6, %s20
      %p195 = scmp.lt.s32.totalorder %s19, 1
      %s196 = scalar_select %p195, %s19, 1
      %p197 = scmp.lt.s32.totalorder %s194, 5
      %s198 = scalar_select %p197, %s194, 5
      %s199 = smul.addr %s198, 2
      %s200 = smul.addr %s196, 12
      %s201 = sadd.s32 %s199, %s200
      %s202 = smul.addr %s201, 4
      %s203 = scalar_lea.vmem %s3, %s202
      %p204 = pneg %p113
      %p205 = pneg %p110
      %p206 = pneg %p139
      %p207 = pneg %p136
      %p208 = scmp.lt.s32.totalorder %s19, 1
      %s209 = scalar_select %p208, %s19, 1
      %s210 = smul.addr %s209, 2
      %s211 = scalar_lea.vmem %s4, %s210
      %s212 = smul.u32 6, %s20
      %p213 = scmp.lt.s32.totalorder %s19, 1
      %s214 = scalar_select %p213, %s19, 1
      %p215 = scmp.lt.s32.totalorder %s212, 5
      %s216 = scalar_select %p215, %s212, 5
      %s217 = smul.addr %s216, 2
      %s218 = smul.addr %s214, 12
      %s219 = sadd.s32 %s217, %s218
      %s220 = smul.addr %s219, 4
      %s221 = scalar_lea.vmem %s3, %s220
      %s222 = smul.u32 6, %s20
      %p223 = scmp.lt.s32.totalorder %s19, 1
      %s224 = scalar_select %p223, %s19, 1
      %s225 = smul.addr %s224, 2
      %s226 = scalar_lea.vmem %s4, %s225
      %p227 = scmp.eq.s32.totalorder %s20, 0
      // Predicated region
      $region37: #{wcnn_forward.15} parent=35 // pred_check
        %p228 = pneg %p227
      $region38: #{wcnn_forward.15} parent=35 // pred_check_branch
        %230 = sbr.rel (%p228) target = $region40
      $region39: #{wcnn_forward.15} parent=35 // pred_region
        %v231 = vlaneseq
        %vm232 = vcmp.ge.s32.totalorder %v231, 0
        %vm233 = vcmp.lt.s32.totalorder %v231, 256
        %vm234 = vmand %vm232, %vm233
        %235 = vst.msk [vmem:[%s226] sm:$0x3] %vm234, 0.0
      $region40: #{wcnn_forward.15} parent=35 // pred_fallthru
        _
      %v236 = vld [vmem:[%s0] ss:$2 sm:$0x3]
      %v237 = vrcp.pop 84.0
      %v238 = vmul.f32 %v236, %v237
      %s239 = scalar_lea.vmem %s0, 1
      %v240 = vld [vmem:[%s239] ss:$2 sm:$0x3]
      %v241 = vmul.f32 %v240, %v237
      %v242 = vmul.f32 %v238, %v238
      %v243 = vsub.f32 %v241, %v242
      %v244 = vmax.f32 %v243, 0.0
      %v245 = vld [vmem:[%s1] sm:$0x3]
      %v246 = vadd.f32 %v244, 1e-05
      %v247 = vrsqrt.pop %v246
      %v248 = vmul.f32 %v245, %v247
      %v249 = vld [vmem:[%s2] sm:$0x3]
      %v250 = vmul.f32 %v238, %v248
      %v251 = vsub.f32 %v249, %v250
      %v252 = vld [vmem:[%s221] sm:$0xff]
      %v253 = vld [vmem:[%s221 + $0x8] sm:$0xff]
      %v254 = vld [vmem:[%s221 + $0x10] sm:$0xff]
      %v255 = vld [vmem:[%s221 + $0x18] sm:$0xff]
      %v256 = vld [vmem:[%s221 + $0x20] sm:$0xff]
      %v257 = vld [vmem:[%s221 + $0x28] sm:$0xff]
      %v258 = vunpack.c.l.bf16 %v252
      %v259 = vunpack.c.h.bf16 %v252
      %v260 = vunpack.c.l.bf16 %v253
      %v261 = vunpack.c.h.bf16 %v253
      %v262 = vunpack.c.l.bf16 %v254
      %v263 = vunpack.c.h.bf16 %v254
      %v264 = vunpack.c.l.bf16 %v255
      %v265 = vunpack.c.h.bf16 %v255
      %v266 = vunpack.c.l.bf16 %v256
      %v267 = vunpack.c.h.bf16 %v256
      %v268 = vunpack.c.l.bf16 %v257
      %v269 = vunpack.c.h.bf16 %v257
      %v271 = vlaneseq
      %v272 = vshrl.u32 %v271, 7
      %v273 = vsub.s32 0, %v272
      %v274 = vrot.slane %v248, %v273
      %v275 = vlaneseq
      %v276 = vshrl.u32 %v275, 7
      %v277 = vsub.s32 1, %v276
      %v278 = vrot.slane %v248, %v277
      %v281 = vmul.f32 %v258, %v274
      %v282 = vmul.f32 %v259, %v278
      %v283 = vmul.f32 %v260, %v274
      %v284 = vmul.f32 %v261, %v278
      %v285 = vmul.f32 %v262, %v274
      %v286 = vmul.f32 %v263, %v278
      %v287 = vmul.f32 %v264, %v274
      %v288 = vmul.f32 %v265, %v278
      %v289 = vmul.f32 %v266, %v274
      %v290 = vmul.f32 %v267, %v278
      %v291 = vmul.f32 %v268, %v274
      %v292 = vmul.f32 %v269, %v278
      %v294 = vlaneseq
      %v295 = vshrl.u32 %v294, 7
      %v296 = vsub.s32 0, %v295
      %v297 = vrot.slane %v251, %v296
      %v298 = vlaneseq
      %v299 = vshrl.u32 %v298, 7
      %v300 = vsub.s32 1, %v299
      %v301 = vrot.slane %v251, %v300
      %v304 = vadd.f32 %v281, %v297
      %v305 = vadd.f32 %v282, %v301
      %v306 = vadd.f32 %v283, %v297
      %v307 = vadd.f32 %v284, %v301
      %v308 = vadd.f32 %v285, %v297
      %v309 = vadd.f32 %v286, %v301
      %v310 = vadd.f32 %v287, %v297
      %v311 = vadd.f32 %v288, %v301
      %v312 = vadd.f32 %v289, %v297
      %v313 = vadd.f32 %v290, %v301
      %v314 = vadd.f32 %v291, %v297
      %v315 = vadd.f32 %v292, %v301
      %vm316 = vcmp.ge.f32.partialorder %v304, 0.0
      %vm317 = vcmp.ge.f32.partialorder %v305, 0.0
      %vm318 = vcmp.ge.f32.partialorder %v306, 0.0
      %vm319 = vcmp.ge.f32.partialorder %v307, 0.0
      %vm320 = vcmp.ge.f32.partialorder %v308, 0.0
      %vm321 = vcmp.ge.f32.partialorder %v309, 0.0
      %vm322 = vcmp.ge.f32.partialorder %v310, 0.0
      %vm323 = vcmp.ge.f32.partialorder %v311, 0.0
      %vm324 = vcmp.ge.f32.partialorder %v312, 0.0
      %vm325 = vcmp.ge.f32.partialorder %v313, 0.0
      %vm326 = vcmp.ge.f32.partialorder %v314, 0.0
      %vm327 = vcmp.ge.f32.partialorder %v315, 0.0
      %v328 = vmul.f32 %v304, 0.01
      %v329 = vmul.f32 %v305, 0.01
      %v330 = vmul.f32 %v306, 0.01
      %v331 = vmul.f32 %v307, 0.01
      %v332 = vmul.f32 %v308, 0.01
      %v333 = vmul.f32 %v309, 0.01
      %v334 = vmul.f32 %v310, 0.01
      %v335 = vmul.f32 %v311, 0.01
      %v336 = vmul.f32 %v312, 0.01
      %v337 = vmul.f32 %v313, 0.01
      %v338 = vmul.f32 %v314, 0.01
      %v339 = vmul.f32 %v315, 0.01
      %v340 = vsel %vm316, %v304, %v328
      %v341 = vsel %vm317, %v305, %v329
      %v342 = vsel %vm318, %v306, %v330
      %v343 = vsel %vm319, %v307, %v331
      %v344 = vsel %vm320, %v308, %v332
      %v345 = vsel %vm321, %v309, %v333
      %v346 = vsel %vm322, %v310, %v334
      %v347 = vsel %vm323, %v311, %v335
      %v348 = vsel %vm324, %v312, %v336
      %v349 = vsel %vm325, %v313, %v337
      %v350 = vsel %vm326, %v314, %v338
      %v351 = vsel %vm327, %v315, %v339
      %v352 = vlaneseq
      %v353 = vshrl.u32 %v352, 7
      %v354 = vadd.s32 %v353, 8
      %v355 = vadd.s32 %v353, 16
      %v356 = vadd.s32 %v353, 24
      %v357 = vadd.s32 %v353, 32
      %v358 = vadd.s32 %v353, 40
      %s359 = smul.u32 %s20, 48
      %v360 = vstv %s359
      %v361 = vadd.s32 %v353, %v360
      %v362 = vadd.s32 %v354, %v360
      %v363 = vadd.s32 %v355, %v360
      %v364 = vadd.s32 %v356, %v360
      %v365 = vadd.s32 %v357, %v360
      %v366 = vadd.s32 %v358, %v360
      %vm367 = vcmp.lt.s32.totalorder %v361, 42
      %vm368 = vcmp.lt.s32.totalorder %v362, 42
      %vm369 = vcmp.lt.s32.totalorder %v363, 42
      %vm370 = vcmp.lt.s32.totalorder %v364, 42
      %vm371 = vcmp.lt.s32.totalorder %v365, 42
      %vm372 = vcmp.lt.s32.totalorder %v366, 42
      %v373 = vsel %vm367, 1, 0
      %v374 = vsel %vm368, 1, 0
      %v375 = vsel %vm369, 1, 0
      %v376 = vsel %vm370, 1, 0
      %v377 = vsel %vm371, 1, 0
      %v378 = vsel %vm372, 1, 0
      %vm379 = vcmp.eq.s32.totalorder %v373, 1
      %vm380 = vcmp.eq.s32.totalorder %v374, 1
      %vm381 = vcmp.eq.s32.totalorder %v375, 1
      %vm382 = vcmp.eq.s32.totalorder %v376, 1
      %vm383 = vcmp.eq.s32.totalorder %v377, 1
      %vm384 = vcmp.eq.s32.totalorder %v378, 1
      %v385 = vsel %vm379, %v340, 0.0
      %v386 = vsel %vm379, %v341, 0.0
      %v387 = vsel %vm380, %v342, 0.0
      %v388 = vsel %vm380, %v343, 0.0
      %v389 = vsel %vm381, %v344, 0.0
      %v390 = vsel %vm381, %v345, 0.0
      %v391 = vsel %vm382, %v346, 0.0
      %v392 = vsel %vm382, %v347, 0.0
      %v393 = vsel %vm383, %v348, 0.0
      %v394 = vsel %vm383, %v349, 0.0
      %v395 = vsel %vm384, %v350, 0.0
      %v396 = vsel %vm384, %v351, 0.0
      %v397 = vld [vmem:[%s226] sm:$0x3]
      %v398 = vadd.f32 %v385, %v387
      %v399 = vadd.f32 %v398, %v389
      %v400 = vadd.f32 %v399, %v391
      %v401 = vadd.f32 %v400, %v393
      %v402 = vadd.f32 %v401, %v395
      %v403 = vrot.slane %v402, 4
      %v404 = vadd.f32 %v402, %v403
      %v405 = vrot.slane %v404, 2
      %v406 = vadd.f32 %v404, %v405
      %v407 = vrot.slane %v406, 1
      %v408 = vadd.f32 %v406, %v407
      %v409 = vadd.f32 %v386, %v388
      %v410 = vadd.f32 %v409, %v390
      %v411 = vadd.f32 %v410, %v392
      %v412 = vadd.f32 %v411, %v394
      %v413 = vadd.f32 %v412, %v396
      %v414 = vrot.slane %v413, 4
      %v415 = vadd.f32 %v413, %v414
      %v416 = vrot.slane %v415, 2
      %v417 = vadd.f32 %v415, %v416
      %v418 = vrot.slane %v417, 1
      %v419 = vadd.f32 %v417, %v418
      %v422 = vcombine.low %v408, %v419
      %v424 = vunpack.c.l.s4 1966171168
      %v425 = vunpack.c.0.s8 %v424
      %v426 = vlaneseq
      %v427 = vshrl.u32 %v426, 7
      %v428 = vsub.s32 %v425, %v427
      %v429 = vrot.slane %v422, %v428
      %v431 = vunpack.c.l.s4 1966171168
      %v432 = vunpack.c.0.s8 %v431
      %v433 = vlaneseq
      %v434 = vshrl.u32 %v433, 7
      %v435 = vsub.s32 %v432, %v434
      %v436 = vrot.slane %v429, %v435
      %v438 = vadd.f32 %v397, %v436
      %v439 = vlaneseq
      %vm440 = vcmp.ge.s32.totalorder %v439, 0
      %vm441 = vcmp.lt.s32.totalorder %v439, 256
      %vm442 = vmand %vm440, %vm441
      %443 = vst.msk [vmem:[%s226] sm:$0x3] %vm442, %v438
      %p444 = scmp.lt.s32.totalorder %s19, 1
      %s445 = scalar_select %p444, %s19, 1
      %s446 = smul.addr %s445, 2
      %s447 = scalar_lea.vmem %s4, %s446
      // Predicated region
      $region41: #{wcnn_forward.15} parent=35 // pred_check
        %p448 = pneg %p136
      $region42: #{wcnn_forward.15} parent=35 // pred_check_branch
        %450 = sbr.rel (%p448) target = $region44
      $region43: #{wcnn_forward.15} parent=35 // pred_region
        _
      $region44: #{wcnn_forward.15} parent=35 // pred_fallthru
        _
    $region36: #{wcnn_forward.15} parent=5 // pred_fallthru
      _
    %p451 = scmp.le.s32.totalorder 2, %s10
    // Predicated region
    $region45: #{wcnn_forward.15} parent=5 // pred_check
      %p452 = pneg %p451
    $region46: #{wcnn_forward.15} parent=5 // pred_check_branch
      %454 = sbr.rel (%p452) target = $region48
    $region47: #{wcnn_forward.15} parent=5 // pred_region
      %s455 = ssub.s32 %s10, 2
      // Predicated region
      $region49: #{wcnn_forward.15} parent=47 // pred_check
        %p456 = pneg %p142
      $region50: #{wcnn_forward.15} parent=47 // pred_check_branch
        %458 = sbr.rel (%p456) target = $region52
      $region51: #{wcnn_forward.15} parent=47 // pred_region
        %p459 = scmp.lt.s32.totalorder %s21, 1
        %s460 = scalar_select %p459, %s21, 1
        %s461 = smul.addr %s460, 2
        %s462 = scalar_lea.vmem %s4, %s461
      $region52: #{wcnn_forward.15} parent=47 // pred_fallthru
        _
    $region48: #{wcnn_forward.15} parent=5 // pred_fallthru
      _
  $region6: #{wcnn_forward.15} parent=0 // loop_footer
    %s14 = sadd.s32 1, %s10
  $region7: #{wcnn_forward.15} parent=0 // loop_footer_branch
    %9 = sbr.rel target = $region3
  $region8: #{wcnn_forward.15} parent=0 // loop_exit
    _

</llo_original>
